<compile_context>
chip_gen: v7x
topology: tpu7x:2x2x1
jax: 0.10.0
libtpu: 0.0.40
codegen_flags: <defaults>
</compile_context>

<pallas_src>
import functools

import jax
import jax.numpy as jnp
from jax.experimental import pallas as pl
from jax.experimental.pallas import tpu as pltpu

BN_EPS = 1e-5
NEG_BIG = -1e30      # f32 bias for padded (fake) classes -> exp() == 0 exactly


def _lin_relu(x_bf16, w_ref, b_ref):
    """x @ W (bf16 on the MXU, f32 accumulate) + folded bias, ReLU, cast bf16."""
    h = jnp.dot(x_bf16, w_ref[...], preferred_element_type=jnp.float32) + b_ref[...]
    return jnp.maximum(h, 0.0).astype(jnp.bfloat16)


def fcnet_kernel(
    x_ref,                                  # (TB, F) bf16 activations
    w_enc, b_enc,                           # encode          (BN folded)
    w_fc1, b_fc1,                           # FC1             (BN folded)
    w_ab, b_ab,                             # fused FC1_2_1|FC1_2_2 (BN folded)
    w_cls, b_cls,                           # classifier (class-padded)
    flip_t_ref,                             # flip_rate.T, class-padded, bf16
    yhat_ref, y_ref,
):
    x = x_ref[...]                                            # (TB, F) bf16
    h = _lin_relu(x, w_enc, b_enc)                            # (TB, 512)
    h = _lin_relu(h, w_fc1, b_fc1)                            # (TB, 512)
    h12 = _lin_relu(h, w_ab, b_ab)                            # (TB, 512) = [h1|h2]

    logits = (jnp.dot(h12, w_cls[...], preferred_element_type=jnp.float32)
              + b_cls[...])                                   # (TB, C_pad) f32

    # Softmax(dim=1); padded classes carry a -1e30 bias so their exp is 0.
    m = jnp.max(logits, axis=1, keepdims=True)
    e = jnp.exp(logits - m)
    y = e * pl.reciprocal(jnp.sum(e, axis=1, keepdims=True), approx=True)
    y_ref[...] = y

    # y_hat = (flip @ y.T).T == y @ flip.T   (flip.T precomputed, bf16 MXU path)
    yhat_ref[...] = jnp.dot(y.astype(jnp.bfloat16), flip_t_ref[...],
                            preferred_element_type=jnp.float32)


def prepare_params(params, num_class):
    """One-time weight preparation: fold inference-mode BN into the Linear
    weights/biases, fuse the two 256-wide branches, pad the class dim to a
    lane-dense multiple of 128, and cast weights (and flip.T) to bf16."""
    (w_enc, b_enc, bn_enc, w_fc1, b_fc1, bn_fc1,
     w_a, b_a, bn_a, w_b, b_b, bn_b, w_cls, b_cls, flip) = params

    def fold(w, b, bn):
        gamma, beta, mean, var = bn[0], bn[1], bn[2], bn[3]
        scale = gamma * jax.lax.rsqrt(var + BN_EPS)
        w_f = (w * scale[None, :]).astype(jnp.bfloat16)
        b_f = ((b.reshape(-1) - mean) * scale + beta).reshape(1, -1)
        return w_f, b_f.astype(jnp.float32)

    w_enc_f, b_enc_f = fold(w_enc, b_enc, bn_enc)
    w_fc1_f, b_fc1_f = fold(w_fc1, b_fc1, bn_fc1)
    w_a_f, b_a_f = fold(w_a, b_a, bn_a)
    w_b_f, b_b_f = fold(w_b, b_b, bn_b)

    # Fuse the two branches: [h1|h2] = relu(h @ [Wa|Wb] + [ba|bb]).
    w_ab = jnp.concatenate([w_a_f, w_b_f], axis=1)            # (512, 512) bf16
    b_ab = jnp.concatenate([b_a_f, b_b_f], axis=1)            # (1, 512)  f32

    C_pad = pl.cdiv(num_class, 128) * 128
    w_cls_p = (jnp.zeros((512, C_pad), jnp.float32)
               .at[:, :num_class].set(w_cls)).astype(jnp.bfloat16)
    b_cls_p = (jnp.full((1, C_pad), NEG_BIG, jnp.float32)
               .at[:, :num_class].set(b_cls))
    flip_t = (jnp.zeros((C_pad, C_pad), jnp.float32)
              .at[:num_class, :num_class].set(flip.T)).astype(jnp.bfloat16)

    return {
        "w_enc": w_enc_f, "b_enc": b_enc_f,
        "w_fc1": w_fc1_f, "b_fc1": b_fc1_f,
        "w_ab": w_ab, "b_ab": b_ab,
        "w_cls": w_cls_p, "b_cls": b_cls_p,
        "flip_t": flip_t,
    }


def fcnet_forward(x, prep, num_class):
    """x: (B, C, H, W) float32.  prep: output of prepare_params()."""
    C_pad = prep["w_cls"].shape[1]                 # static (from array shape)

    # --- flatten like x.view(B, -1); pad batch + cast bf16 in one copy -------
    B = x.shape[0]
    x2d = x.reshape(B, -1)
    F = x2d.shape[1]
    B8 = pl.cdiv(B, 8) * 8
    TB = min(B8, 512)                              # amortize MXU weight loads
    if B8 > 128:
        # >= 2 grid steps so v7x's second TensorCore gets half the batch
        TB = min(TB, ((B8 // 2) + 7) // 8 * 8)
    grid_b = pl.cdiv(B8, TB)
    B_pad = grid_b * TB
    x_pad = jnp.zeros((B_pad, F), jnp.bfloat16).at[:B, :].set(
        x2d.astype(jnp.bfloat16))

    inputs = [x_pad,
              prep["w_enc"], prep["b_enc"],
              prep["w_fc1"], prep["b_fc1"],
              prep["w_ab"], prep["b_ab"],
              prep["w_cls"], prep["b_cls"],
              prep["flip_t"]]

    def resident(a):  # full-array block, constant index -> stays VMEM-resident
        return pl.BlockSpec(a.shape, lambda i: (0, 0))

    in_specs = ([pl.BlockSpec((TB, F), lambda i: (i, 0))]
                + [resident(a) for a in inputs[1:]])
    out_specs = (pl.BlockSpec((TB, C_pad), lambda i: (i, 0)),
                 pl.BlockSpec((TB, C_pad), lambda i: (i, 0)))
    out_shape = (jax.ShapeDtypeStruct((B_pad, C_pad), jnp.float32),   # y_hat
                 jax.ShapeDtypeStruct((B_pad, C_pad), jnp.float32))   # y

    y_hat_full, y_full = pl.pallas_call(
        fcnet_kernel,
        out_shape=out_shape,
        grid=(grid_b,),
        in_specs=in_specs,
        out_specs=out_specs,
        compiler_params=pltpu.CompilerParams(
            dimension_semantics=("parallel",)),
    )(*inputs)

    return y_hat_full[:B, :num_class], y_full[:B, :num_class]


def make_params(key, num_feature, num_class):
    """Deterministic synthetic parameters in the original module's form
    (weights stored as (in, out), BN stats as (4, out): gamma, beta, mean, var)."""
    dims = [
        (num_feature, 512),   # encode
        (512, 512),           # FC1 (see TODO(synk) above)
        (512, 256),           # FC1_2_1
        (512, 256),           # FC1_2_2
    ]
    params = []
    for (din, dout) in dims:
        key, kw, kb, kg, kbe, km, kv = jax.random.split(key, 7)
        w = jax.random.normal(kw, (din, dout), jnp.float32) * 0.05
        b = jax.random.normal(kb, (1, dout), jnp.float32) * 0.05
        gamma = jax.random.uniform(kg, (dout,), jnp.float32, 0.5, 1.5)
        beta = jax.random.normal(kbe, (dout,), jnp.float32) * 0.1
        mean = jax.random.normal(km, (dout,), jnp.float32) * 0.1
        var = jax.random.uniform(kv, (dout,), jnp.float32, 0.5, 1.5)
        bn = jnp.stack([gamma, beta, mean, var], axis=0)   # (4, dout)
        params += [w, b, bn]

    key, kw, kb = jax.random.split(key, 3)
    w_cls = jax.random.normal(kw, (512, num_class), jnp.float32) * 0.05
    b_cls = jax.random.normal(kb, (1, num_class), jnp.float32) * 0.05
    params += [w_cls, b_cls]

    # Deterministic row-stochastic flip-rate matrix (module default is eye).
    off = 0.1 / (num_class - 1)
    flip = jnp.full((num_class, num_class), off, jnp.float32)
    flip = flip.at[jnp.arange(num_class), jnp.arange(num_class)].set(0.9)
    params.append(flip)
    return params


def reference_forward(x, params, num_class):
    """Pure-JAX f32 reference (BN unfolded) for validation."""
    (w_enc, b_enc, bn_enc, w_fc1, b_fc1, bn_fc1,
     w_a, b_a, bn_a, w_b, b_b, bn_b, w_cls, b_cls, flip) = params

    def lbr(h, w, b, bn):
        h = h @ w + b
        h = (h - bn[2]) * bn[0] / jnp.sqrt(bn[3] + BN_EPS) + bn[1]
        return jnp.maximum(h, 0.0)

    h = x.reshape(x.shape[0], -1)
    h = lbr(h, w_enc, b_enc, bn_enc)
    h = lbr(h, w_fc1, b_fc1, bn_fc1)
    h1 = lbr(h, w_a, b_a, bn_a)
    h2 = lbr(h, w_b, b_b, bn_b)
    hc = jnp.concatenate([h1, h2], axis=1)
    logits = hc @ w_cls + b_cls
    y = jax.nn.softmax(logits, axis=1)
    y_hat = (flip @ y.T).T
    return y_hat, y


if __name__ == "__main__":
    B, C, H, W = 2, 4, 16, 16          # input (NCHW) -> num_feature = 1024
    num_feature = C * H * W
    num_class = 10

    key = jax.random.PRNGKey(0)
    kx, kp = jax.random.split(key)
    x = jax.random.normal(kx, (B, C, H, W), jnp.float32)
    params = make_params(kp, num_feature, num_class)

    # One-time weight preparation (hoisted out of the per-call forward path).
    prep = jax.tree_util.tree_map(jnp.asarray, prepare_params(params, num_class))

    fwd = jax.jit(functools.partial(fcnet_forward, num_class=num_class))
    y_hat, y = fwd(x, prep)
    jax.block_until_ready((y_hat, y))

    y_hat_ref, y_ref = reference_forward(x, params, num_class)
    assert y.shape == (B, num_class) and y_hat.shape == (B, num_class)
    # bf16 weights/activations -> loosened tolerance vs. the f32 reference.
    assert jnp.allclose(y, y_ref, atol=2e-2, rtol=2e-2), "y mismatch"
    # y_hat additionally goes through a bf16 flip matmul -> slightly looser.
    assert jnp.allclose(y_hat, y_hat_ref, atol=3e-2, rtol=3e-2), "y_hat mismatch"

    print("KERNEL_OK")
</pallas_src>

<mosaic_0001>
module attributes {stable_mosaic.version = 11 : i64} {
  func.func @fcnet_kernel(%arg0: i32, %arg1: memref<8x1024xbf16, #tpu.memory_space<vmem>>, %arg2: memref<1024x512xbf16, #tpu.memory_space<vmem>>, %arg3: memref<1x512xf32, #tpu.memory_space<vmem>>, %arg4: memref<512x512xbf16, #tpu.memory_space<vmem>>, %arg5: memref<1x512xf32, #tpu.memory_space<vmem>>, %arg6: memref<512x512xbf16, #tpu.memory_space<vmem>>, %arg7: memref<1x512xf32, #tpu.memory_space<vmem>>, %arg8: memref<512x128xbf16, #tpu.memory_space<vmem>>, %arg9: memref<1x128xf32, #tpu.memory_space<vmem>>, %arg10: memref<128x128xbf16, #tpu.memory_space<vmem>>, %arg11: memref<8x128xf32, #tpu.memory_space<vmem>>, %arg12: memref<8x128xf32, #tpu.memory_space<vmem>>) attributes {dimension_semantics = [#tpu.dimension_semantics<parallel>], iteration_bounds = array<i64: 1>, scalar_prefetch = 0 : i64, scratch_operands = 0 : i64, tpu.core_type = #tpu.core_type<tc>, window_params = [{transform_indices = @transform_0, window_bounds = array<i64: 8, 1024>}, {pipeline_mode = #tpu.pipeline_mode<synchronous>, transform_indices = @transform_1, window_bounds = array<i64: 1024, 512>}, {pipeline_mode = #tpu.pipeline_mode<synchronous>, transform_indices = @transform_2, window_bounds = array<i64: 1, 512>}, {pipeline_mode = #tpu.pipeline_mode<synchronous>, transform_indices = @transform_3, window_bounds = array<i64: 512, 512>}, {pipeline_mode = #tpu.pipeline_mode<synchronous>, transform_indices = @transform_4, window_bounds = array<i64: 1, 512>}, {pipeline_mode = #tpu.pipeline_mode<synchronous>, transform_indices = @transform_5, window_bounds = array<i64: 512, 512>}, {pipeline_mode = #tpu.pipeline_mode<synchronous>, transform_indices = @transform_6, window_bounds = array<i64: 1, 512>}, {pipeline_mode = #tpu.pipeline_mode<synchronous>, transform_indices = @transform_7, window_bounds = array<i64: 512, 128>}, {pipeline_mode = #tpu.pipeline_mode<synchronous>, transform_indices = @transform_8, window_bounds = array<i64: 1, 128>}, {pipeline_mode = #tpu.pipeline_mode<synchronous>, transform_indices = @transform_9, window_bounds = array<i64: 128, 128>}, {transform_indices = @transform_10, window_bounds = array<i64: 8, 128>}, {transform_indices = @transform_11, window_bounds = array<i64: 8, 128>}]} {
    %c0 = arith.constant 0 : index
    %c0_0 = arith.constant 0 : index
    %0 = vector.load %arg1[%c0, %c0_0] : memref<8x1024xbf16, #tpu.memory_space<vmem>>, vector<8x1024xbf16>
    %c0_1 = arith.constant 0 : index
    %c0_2 = arith.constant 0 : index
    %1 = vector.load %arg2[%c0_1, %c0_2] : memref<1024x512xbf16, #tpu.memory_space<vmem>>, vector<1024x512xbf16>
    %cst = arith.constant dense<0.000000e+00> : vector<8x512xf32>
    %2 = tpu.matmul %0, %1, %cst {dimension_numbers = #tpu.dot_dimension_numbers<[1], [0], [0], [1], [0, 0, 1, 1], [], []>} : vector<8x1024xbf16>, vector<1024x512xbf16>, vector<8x512xf32> -> vector<8x512xf32>
    %c0_3 = arith.constant 0 : index
    %c0_4 = arith.constant 0 : index
    %3 = vector.load %arg3[%c0_3, %c0_4] : memref<1x512xf32, #tpu.memory_space<vmem>>, vector<1x512xf32>
    %4 = vector.broadcast %3 : vector<1x512xf32> to vector<8x512xf32>
    %5 = arith.addf %2, %4 : vector<8x512xf32>
    %cst_5 = arith.constant 0.000000e+00 : f32
    %6 = vector.broadcast %cst_5 : f32 to vector<8x512xf32>
    %7 = arith.maximumf %5, %6 : vector<8x512xf32>
    %8 = arith.truncf %7 : vector<8x512xf32> to vector<8x512xbf16>
    %c0_6 = arith.constant 0 : index
    %c0_7 = arith.constant 0 : index
    %9 = vector.load %arg4[%c0_6, %c0_7] : memref<512x512xbf16, #tpu.memory_space<vmem>>, vector<512x512xbf16>
    %cst_8 = arith.constant dense<0.000000e+00> : vector<8x512xf32>
    %10 = tpu.matmul %8, %9, %cst_8 {dimension_numbers = #tpu.dot_dimension_numbers<[1], [0], [0], [1], [0, 0, 1, 1], [], []>} : vector<8x512xbf16>, vector<512x512xbf16>, vector<8x512xf32> -> vector<8x512xf32>
    %c0_9 = arith.constant 0 : index
    %c0_10 = arith.constant 0 : index
    %11 = vector.load %arg5[%c0_9, %c0_10] : memref<1x512xf32, #tpu.memory_space<vmem>>, vector<1x512xf32>
    %12 = vector.broadcast %11 : vector<1x512xf32> to vector<8x512xf32>
    %13 = arith.addf %10, %12 : vector<8x512xf32>
    %cst_11 = arith.constant 0.000000e+00 : f32
    %14 = vector.broadcast %cst_11 : f32 to vector<8x512xf32>
    %15 = arith.maximumf %13, %14 : vector<8x512xf32>
    %16 = arith.truncf %15 : vector<8x512xf32> to vector<8x512xbf16>
    %c0_12 = arith.constant 0 : index
    %c0_13 = arith.constant 0 : index
    %17 = vector.load %arg6[%c0_12, %c0_13] : memref<512x512xbf16, #tpu.memory_space<vmem>>, vector<512x512xbf16>
    %cst_14 = arith.constant dense<0.000000e+00> : vector<8x512xf32>
    %18 = tpu.matmul %16, %17, %cst_14 {dimension_numbers = #tpu.dot_dimension_numbers<[1], [0], [0], [1], [0, 0, 1, 1], [], []>} : vector<8x512xbf16>, vector<512x512xbf16>, vector<8x512xf32> -> vector<8x512xf32>
    %c0_15 = arith.constant 0 : index
    %c0_16 = arith.constant 0 : index
    %19 = vector.load %arg7[%c0_15, %c0_16] : memref<1x512xf32, #tpu.memory_space<vmem>>, vector<1x512xf32>
    %20 = vector.broadcast %19 : vector<1x512xf32> to vector<8x512xf32>
    %21 = arith.addf %18, %20 : vector<8x512xf32>
    %cst_17 = arith.constant 0.000000e+00 : f32
    %22 = vector.broadcast %cst_17 : f32 to vector<8x512xf32>
    %23 = arith.maximumf %21, %22 : vector<8x512xf32>
    %24 = arith.truncf %23 : vector<8x512xf32> to vector<8x512xbf16>
    %c0_18 = arith.constant 0 : index
    %c0_19 = arith.constant 0 : index
    %25 = vector.load %arg8[%c0_18, %c0_19] : memref<512x128xbf16, #tpu.memory_space<vmem>>, vector<512x128xbf16>
    %cst_20 = arith.constant dense<0.000000e+00> : vector<8x128xf32>
    %26 = tpu.matmul %24, %25, %cst_20 {dimension_numbers = #tpu.dot_dimension_numbers<[1], [0], [0], [1], [0, 0, 1, 1], [], []>} : vector<8x512xbf16>, vector<512x128xbf16>, vector<8x128xf32> -> vector<8x128xf32>
    %c0_21 = arith.constant 0 : index
    %c0_22 = arith.constant 0 : index
    %27 = vector.load %arg9[%c0_21, %c0_22] : memref<1x128xf32, #tpu.memory_space<vmem>>, vector<1x128xf32>
    %28 = vector.broadcast %27 : vector<1x128xf32> to vector<8x128xf32>
    %29 = arith.addf %26, %28 : vector<8x128xf32>
    %cst_23 = arith.constant dense<0xFF800000> : vector<8xf32>
    %30 = vector.multi_reduction <maximumf>, %29, %cst_23 [1] : vector<8x128xf32> to vector<8xf32>
    %31 = vector.shape_cast %30 : vector<8xf32> to vector<8x1xf32>
    %32 = vector.broadcast %31 : vector<8x1xf32> to vector<8x128xf32>
    %33 = arith.subf %29, %32 : vector<8x128xf32>
    %34 = math.exp %33 : vector<8x128xf32>
    %cst_24 = arith.constant dense<0.000000e+00> : vector<8xf32>
    %35 = vector.multi_reduction <add>, %34, %cst_24 [1] : vector<8x128xf32> to vector<8xf32>
    %36 = vector.shape_cast %35 : vector<8xf32> to vector<8x1xf32>
    %37 = tpu.reciprocal %36 {approx = true} : vector<8x1xf32> -> vector<8x1xf32>
    %38 = vector.broadcast %37 : vector<8x1xf32> to vector<8x128xf32>
    %39 = arith.mulf %34, %38 : vector<8x128xf32>
    %c0_25 = arith.constant 0 : index
    %c0_26 = arith.constant 0 : index
    %40 = vector.load %arg12[%c0_25, %c0_26] : memref<8x128xf32, #tpu.memory_space<vmem>>, vector<8x128xf32>
    tpu.vector_store %arg12[%c0_25, %c0_26], %39 {strides = array<i32>} : memref<8x128xf32, #tpu.memory_space<vmem>>, vector<8x128xf32>,
    %41 = arith.truncf %39 : vector<8x128xf32> to vector<8x128xbf16>
    %c0_27 = arith.constant 0 : index
    %c0_28 = arith.constant 0 : index
    %42 = vector.load %arg10[%c0_27, %c0_28] : memref<128x128xbf16, #tpu.memory_space<vmem>>, vector<128x128xbf16>
    %cst_29 = arith.constant dense<0.000000e+00> : vector<8x128xf32>
    %43 = tpu.matmul %41, %42, %cst_29 {dimension_numbers = #tpu.dot_dimension_numbers<[1], [0], [0], [1], [0, 0, 1, 1], [], []>} : vector<8x128xbf16>, vector<128x128xbf16>, vector<8x128xf32> -> vector<8x128xf32>
    %c0_30 = arith.constant 0 : index
    %c0_31 = arith.constant 0 : index
    %44 = vector.load %arg11[%c0_30, %c0_31] : memref<8x128xf32, #tpu.memory_space<vmem>>, vector<8x128xf32>
    tpu.vector_store %arg11[%c0_30, %c0_31], %43 {strides = array<i32>} : memref<8x128xf32, #tpu.memory_space<vmem>>, vector<8x128xf32>,
    return
  }
  func.func @transform_0(%arg0: i32) -> (i32, i32) {
    %c0_i32 = arith.constant 0 : i32
    %c0_i32_0 = arith.constant 0 : i32
    return %arg0, %c0_i32 : i32, i32
  }
  func.func @transform_1(%arg0: i32) -> (i32, i32) {
    %c0_i32 = arith.constant 0 : i32
    %c0_i32_0 = arith.constant 0 : i32
    %c0_i32_1 = arith.constant 0 : i32
    return %c0_i32, %c0_i32_0 : i32, i32
  }
  func.func @transform_2(%arg0: i32) -> (i32, i32) {
    %c0_i32 = arith.constant 0 : i32
    %c0_i32_0 = arith.constant 0 : i32
    %c0_i32_1 = arith.constant 0 : i32
    return %c0_i32, %c0_i32_0 : i32, i32
  }
  func.func @transform_3(%arg0: i32) -> (i32, i32) {
    %c0_i32 = arith.constant 0 : i32
    %c0_i32_0 = arith.constant 0 : i32
    %c0_i32_1 = arith.constant 0 : i32
    return %c0_i32, %c0_i32_0 : i32, i32
  }
  func.func @transform_4(%arg0: i32) -> (i32, i32) {
    %c0_i32 = arith.constant 0 : i32
    %c0_i32_0 = arith.constant 0 : i32
    %c0_i32_1 = arith.constant 0 : i32
    return %c0_i32, %c0_i32_0 : i32, i32
  }
  func.func @transform_5(%arg0: i32) -> (i32, i32) {
    %c0_i32 = arith.constant 0 : i32
    %c0_i32_0 = arith.constant 0 : i32
    %c0_i32_1 = arith.constant 0 : i32
    return %c0_i32, %c0_i32_0 : i32, i32
  }
  func.func @transform_6(%arg0: i32) -> (i32, i32) {
    %c0_i32 = arith.constant 0 : i32
    %c0_i32_0 = arith.constant 0 : i32
    %c0_i32_1 = arith.constant 0 : i32
    return %c0_i32, %c0_i32_0 : i32, i32
  }
  func.func @transform_7(%arg0: i32) -> (i32, i32) {
    %c0_i32 = arith.constant 0 : i32
    %c0_i32_0 = arith.constant 0 : i32
    %c0_i32_1 = arith.constant 0 : i32
    return %c0_i32, %c0_i32_0 : i32, i32
  }
  func.func @transform_8(%arg0: i32) -> (i32, i32) {
    %c0_i32 = arith.constant 0 : i32
    %c0_i32_0 = arith.constant 0 : i32
    %c0_i32_1 = arith.constant 0 : i32
    return %c0_i32, %c0_i32_0 : i32, i32
  }
  func.func @transform_9(%arg0: i32) -> (i32, i32) {
    %c0_i32 = arith.constant 0 : i32
    %c0_i32_0 = arith.constant 0 : i32
    %c0_i32_1 = arith.constant 0 : i32
    return %c0_i32, %c0_i32_0 : i32, i32
  }
  func.func @transform_10(%arg0: i32) -> (i32, i32) {
    %c0_i32 = arith.constant 0 : i32
    %c0_i32_0 = arith.constant 0 : i32
    return %arg0, %c0_i32 : i32, i32
  }
  func.func @transform_11(%arg0: i32) -> (i32, i32) {
    %c0_i32 = arith.constant 0 : i32
    %c0_i32_0 = arith.constant 0 : i32
    return %arg0, %c0_i32 : i32, i32
  }
}

</mosaic_0001>

<llo_original>
// kernel: fcnet_forward.1
$region0: #{fcnet_forward.1}
  #allocation0 [shape = 'u32[]', space=smem, size = 0x4, offset = 0x4, fixed_abs, tag = 'smem constant byte address 0x4 - core index']
  #allocation1 [shape = 'u32[144,128]{1,0:T(1,128)}', space=vmem, size = 0x12000, scoped, tag = 'internal scratch']
  %s0 = inlined_call_operand.vmem [shape: bf16[8,1024], index: 0, kind: input, shape index: {}]
  %s1 = inlined_call_operand.hbm [shape: bf16[1024,512], index: 1, kind: input, shape index: {}]
  %s2 = inlined_call_operand.vmem [shape: f32[1,512], index: 2, kind: input, shape index: {}]
  %s3 = inlined_call_operand.hbm [shape: bf16[512,512], index: 3, kind: input, shape index: {}]
  %s4 = inlined_call_operand.vmem [shape: f32[1,512], index: 4, kind: input, shape index: {}]
  %s5 = inlined_call_operand.hbm [shape: bf16[512,512], index: 5, kind: input, shape index: {}]
  %s6 = inlined_call_operand.hbm [shape: f32[1,512], index: 6, kind: input, shape index: {}]
  %s7 = inlined_call_operand.vmem [shape: bf16[512,128], index: 7, kind: input, shape index: {}]
  %s8 = inlined_call_operand.vmem [shape: f32[1,128], index: 8, kind: input, shape index: {}]
  %s9 = inlined_call_operand.vmem [shape: bf16[128,128], index: 9, kind: input, shape index: {}]
  %s10 = inlined_call_operand.vmem [shape: f32[8,128], index: 10, kind: output, shape index: {0}]
  %s11 = inlined_call_operand.vmem [shape: f32[8,128], index: 11, kind: output, shape index: {1}]
  %12 = xla_tuple %s10, %s11
  %s13 = sld [smem:[#allocation0]]
  $region74: #{fcnet_forward.1} parent=0
    _
  %s15 = ssub.s32 1, %s13
  %s16 = scalar_select 0, %s15, %s13
  $region1: #{fcnet_forward.1} parent=0
    #allocation2 [shape = 'u8[1048576]{0}', space=vmem, size = 0x100000, scoped, tag = 'input window, operand 1, single buffered']
    #allocation3 [shape = 's32[1]{0}', space=sflag, size = 0x4, scoped, tag = 'scoped memory for fcnet_forward.1']
    #allocation4 [shape = 'u8[524288]{0}', space=vmem, size = 0x80000, scoped, tag = 'input window, operand 3, single buffered']
    #allocation5 [shape = 's32[1]{0}', space=sflag, size = 0x4, scoped, tag = 'scoped memory for fcnet_forward.1']
    #allocation6 [shape = 'u8[524288]{0}', space=vmem, size = 0x80000, scoped, tag = 'input window, operand 5, single buffered']
    #allocation7 [shape = 'u8[2048]{0}', space=vmem, size = 0x800, scoped, tag = 'input window, operand 6, single buffered']
    #allocation8 [shape = 's32[1]{0}', space=sflag, size = 0x4, scoped, tag = 'scoped memory for fcnet_forward.1']
    %17 = vsyncpa [#allocation3], 0
    %18 = vsyncpa [#allocation5], 0
    %19 = vsyncpa [#allocation8], 0
    // Predicated region
    $region2: #{fcnet_forward.1} parent=1 // pred_check
      _
    $region3: #{fcnet_forward.1} parent=1 // pred_check_branch
      %21 = sbr.rel (0) target = $region5
    $region4: #{fcnet_forward.1} parent=1 // pred_region
      _
    $region5: #{fcnet_forward.1} parent=1 // pred_fallthru
      _
    // Predicated region
    $region6: #{fcnet_forward.1} parent=1 // pred_check
      _
    $region7: #{fcnet_forward.1} parent=1 // pred_check_branch
      %23 = sbr.rel (0) target = $region9
    $region8: #{fcnet_forward.1} parent=1 // pred_region
      %s25 = ssub.s32 32768, 32768
      %26 = vsyncadd [#allocation3], %s25
      %s27 = sshll.u32 [#allocation2], 4
      %s28 = int_to_ptr.vmem [resolvable:$true] %s27
      %33 = dma.hbm_to_vmem [thread:$0]  %s1, 32768, %s28, [#allocation3], 256, 256, 16
    $region9: #{fcnet_forward.1} parent=1 // pred_fallthru
      _
    // Predicated region
    $region10: #{fcnet_forward.1} parent=1 // pred_check
      _
    $region11: #{fcnet_forward.1} parent=1 // pred_check_branch
      %35 = sbr.rel (0) target = $region13
    $region12: #{fcnet_forward.1} parent=1 // pred_region
      _
    $region13: #{fcnet_forward.1} parent=1 // pred_fallthru
      _
    // Predicated region
    $region14: #{fcnet_forward.1} parent=1 // pred_check
      _
    $region15: #{fcnet_forward.1} parent=1 // pred_check_branch
      %37 = sbr.rel (0) target = $region17
    $region16: #{fcnet_forward.1} parent=1 // pred_region
      %s39 = ssub.s32 16384, 16384
      %40 = vsyncadd [#allocation5], %s39
      %s41 = sshll.u32 [#allocation4], 4
      %s42 = int_to_ptr.vmem [resolvable:$true] %s41
      %47 = dma.hbm_to_vmem [thread:$0]  %s3, 16384, %s42, [#allocation5], 256, 256, 16
    $region17: #{fcnet_forward.1} parent=1 // pred_fallthru
      _
    // Predicated region
    $region18: #{fcnet_forward.1} parent=1 // pred_check
      _
    $region19: #{fcnet_forward.1} parent=1 // pred_check_branch
      %49 = sbr.rel (0) target = $region21
    $region20: #{fcnet_forward.1} parent=1 // pred_region
      _
    $region21: #{fcnet_forward.1} parent=1 // pred_fallthru
      _
    // Predicated region
    $region22: #{fcnet_forward.1} parent=1 // pred_check
      _
    $region23: #{fcnet_forward.1} parent=1 // pred_check_branch
      %51 = sbr.rel (0) target = $region25
    $region24: #{fcnet_forward.1} parent=1 // pred_region
      %s53 = ssub.s32 16384, 16384
      %54 = vsyncadd [#allocation5], %s53
      %s55 = sshll.u32 [#allocation6], 4
      %s56 = int_to_ptr.vmem [resolvable:$true] %s55
      %61 = dma.hbm_to_vmem [thread:$0]  %s5, 16384, %s56, [#allocation5], 256, 256, 16
    $region25: #{fcnet_forward.1} parent=1 // pred_fallthru
      _
    // Predicated region
    $region26: #{fcnet_forward.1} parent=1 // pred_check
      _
    $region27: #{fcnet_forward.1} parent=1 // pred_check_branch
      %63 = sbr.rel (0) target = $region29
    $region28: #{fcnet_forward.1} parent=1 // pred_region
      %s65 = ssub.s32 64, 64
      %66 = vsyncadd [#allocation8], %s65
      %s68 = sshll.u32 [#allocation7], 4
      %s69 = int_to_ptr.vmem [resolvable:$true] %s68
      %71 = dma.hbm_to_vmem [thread:$0]  %s6, 64, %s69, [#allocation8]
    $region29: #{fcnet_forward.1} parent=1 // pred_fallthru
      _
    // Predicated region
    $region30: #{fcnet_forward.1} parent=1 // pred_check
      _
    $region31: #{fcnet_forward.1} parent=1 // pred_check_branch
      %73 = sbr.rel (0) target = $region33
    $region32: #{fcnet_forward.1} parent=1 // pred_region
      _
    $region33: #{fcnet_forward.1} parent=1 // pred_fallthru
      _
    // Predicated region
    $region34: #{fcnet_forward.1} parent=1 // pred_check
      _
    $region35: #{fcnet_forward.1} parent=1 // pred_check_branch
      %75 = sbr.rel (0) target = $region37
    $region36: #{fcnet_forward.1} parent=1 // pred_region
      _
    $region37: #{fcnet_forward.1} parent=1 // pred_fallthru
      _
    // Predicated region
    $region38: #{fcnet_forward.1} parent=1 // pred_check
      _
    $region39: #{fcnet_forward.1} parent=1 // pred_check_branch
      %77 = sbr.rel (0) target = $region41
    $region40: #{fcnet_forward.1} parent=1 // pred_region
      _
    $region41: #{fcnet_forward.1} parent=1 // pred_fallthru
      _
    // Predicated region
    $region42: #{fcnet_forward.1} parent=1 // pred_check
      _
    $region43: #{fcnet_forward.1} parent=1 // pred_check_branch
      %79 = sbr.rel (0) target = $region45
    $region44: #{fcnet_forward.1} parent=1 // pred_region
      %80 = dma.done [#allocation3], 32768
    $region45: #{fcnet_forward.1} parent=1 // pred_fallthru
      _
    // Predicated region
    $region46: #{fcnet_forward.1} parent=1 // pred_check
      _
    $region47: #{fcnet_forward.1} parent=1 // pred_check_branch
      %82 = sbr.rel (0) target = $region49
    $region48: #{fcnet_forward.1} parent=1 // pred_region
      %83 = dma.done [#allocation5], 16384
    $region49: #{fcnet_forward.1} parent=1 // pred_fallthru
      _
    // Predicated region
    $region50: #{fcnet_forward.1} parent=1 // pred_check
      _
    $region51: #{fcnet_forward.1} parent=1 // pred_check_branch
      %85 = sbr.rel (0) target = $region53
    $region52: #{fcnet_forward.1} parent=1 // pred_region
      %86 = dma.done [#allocation5], 16384
    $region53: #{fcnet_forward.1} parent=1 // pred_fallthru
      _
    // Predicated region
    $region54: #{fcnet_forward.1} parent=1 // pred_check
      _
    $region55: #{fcnet_forward.1} parent=1 // pred_check_branch
      %88 = sbr.rel (0) target = $region57
    $region56: #{fcnet_forward.1} parent=1 // pred_region
      %89 = dma.done [#allocation8], 64
    $region57: #{fcnet_forward.1} parent=1 // pred_fallthru
      _
    %v91 = vld [vmem:[%s0] sm:$0xff]
    %v92 = vld [vmem:[%s0 + $0x8] sm:$0xff]
    %v93 = vld [vmem:[%s0 + $0x10] sm:$0xff]
    %v94 = vld [vmem:[%s0 + $0x18] sm:$0xff]
    %v95 = vld [vmem:[#allocation2] sm:$0xff]
    %v96 = vld [vmem:[#allocation2 + $0x8] sm:$0xff]
    %v97 = vld [vmem:[#allocation2 + $0x10] sm:$0xff]
    %v98 = vld [vmem:[#allocation2 + $0x18] sm:$0xff]
    %v99 = vld [vmem:[#allocation2 + $0x20] sm:$0xff]
    %v100 = vld [vmem:[#allocation2 + $0x28] sm:$0xff]
    %v101 = vld [vmem:[#allocation2 + $0x30] sm:$0xff]
    %v102 = vld [vmem:[#allocation2 + $0x38] sm:$0xff]
    %v103 = vld [vmem:[#allocation2 + $0x40] sm:$0xff]
    %v104 = vld [vmem:[#allocation2 + $0x48] sm:$0xff]
    %v105 = vld [vmem:[#allocation2 + $0x50] sm:$0xff]
    %v106 = vld [vmem:[#allocation2 + $0x58] sm:$0xff]
    %v107 = vld [vmem:[#allocation2 + $0x60] sm:$0xff]
    %v108 = vld [vmem:[#allocation2 + $0x68] sm:$0xff]
    %v109 = vld [vmem:[#allocation2 + $0x70] sm:$0xff]
    %v110 = vld [vmem:[#allocation2 + $0x78] sm:$0xff]
    %v111 = vld [vmem:[#allocation2 + $0x80] sm:$0xff]
    %v112 = vld [vmem:[#allocation2 + $0x88] sm:$0xff]
    %v113 = vld [vmem:[#allocation2 + $0x90] sm:$0xff]
    %v114 = vld [vmem:[#allocation2 + $0x98] sm:$0xff]
    %v115 = vld [vmem:[#allocation2 + $0xa0] sm:$0xff]
    %v116 = vld [vmem:[#allocation2 + $0xa8] sm:$0xff]
    %v117 = vld [vmem:[#allocation2 + $0xb0] sm:$0xff]
    %v118 = vld [vmem:[#allocation2 + $0xb8] sm:$0xff]
    %v119 = vld [vmem:[#allocation2 + $0xc0] sm:$0xff]
    %v120 = vld [vmem:[#allocation2 + $0xc8] sm:$0xff]
    %v121 = vld [vmem:[#allocation2 + $0xd0] sm:$0xff]
    %v122 = vld [vmem:[#allocation2 + $0xd8] sm:$0xff]
    %v123 = vld [vmem:[#allocation2 + $0xe0] sm:$0xff]
    %v124 = vld [vmem:[#allocation2 + $0xe8] sm:$0xff]
    %v125 = vld [vmem:[#allocation2 + $0xf0] sm:$0xff]
    %v126 = vld [vmem:[#allocation2 + $0xf8] sm:$0xff]
    %v127 = vld [vmem:[#allocation2 + $0x100] sm:$0xff]
    %v128 = vld [vmem:[#allocation2 + $0x108] sm:$0xff]
    %v129 = vld [vmem:[#allocation2 + $0x110] sm:$0xff]
    %v130 = vld [vmem:[#allocation2 + $0x118] sm:$0xff]
    %v131 = vld [vmem:[#allocation2 + $0x120] sm:$0xff]
    %v132 = vld [vmem:[#allocation2 + $0x128] sm:$0xff]
    %v133 = vld [vmem:[#allocation2 + $0x130] sm:$0xff]
    %v134 = vld [vmem:[#allocation2 + $0x138] sm:$0xff]
    %v135 = vld [vmem:[#allocation2 + $0x140] sm:$0xff]
    %v136 = vld [vmem:[#allocation2 + $0x148] sm:$0xff]
    %v137 = vld [vmem:[#allocation2 + $0x150] sm:$0xff]
    %v138 = vld [vmem:[#allocation2 + $0x158] sm:$0xff]
    %v139 = vld [vmem:[#allocation2 + $0x160] sm:$0xff]
    %v140 = vld [vmem:[#allocation2 + $0x168] sm:$0xff]
    %v141 = vld [vmem:[#allocation2 + $0x170] sm:$0xff]
    %v142 = vld [vmem:[#allocation2 + $0x178] sm:$0xff]
    %v143 = vld [vmem:[#allocation2 + $0x180] sm:$0xff]
    %v144 = vld [vmem:[#allocation2 + $0x188] sm:$0xff]
    %v145 = vld [vmem:[#allocation2 + $0x190] sm:$0xff]
    %v146 = vld [vmem:[#allocation2 + $0x198] sm:$0xff]
    %v147 = vld [vmem:[#allocation2 + $0x1a0] sm:$0xff]
    %v148 = vld [vmem:[#allocation2 + $0x1a8] sm:$0xff]
    %v149 = vld [vmem:[#allocation2 + $0x1b0] sm:$0xff]
    %v150 = vld [vmem:[#allocation2 + $0x1b8] sm:$0xff]
    %v151 = vld [vmem:[#allocation2 + $0x1c0] sm:$0xff]
    %v152 = vld [vmem:[#allocation2 + $0x1c8] sm:$0xff]
    %v153 = vld [vmem:[#allocation2 + $0x1d0] sm:$0xff]
    %v154 = vld [vmem:[#allocation2 + $0x1d8] sm:$0xff]
    %v155 = vld [vmem:[#allocation2 + $0x1e0] sm:$0xff]
    %v156 = vld [vmem:[#allocation2 + $0x1e8] sm:$0xff]
    %v157 = vld [vmem:[#allocation2 + $0x1f0] sm:$0xff]
    %v158 = vld [vmem:[#allocation2 + $0x1f8] sm:$0xff]
    %v159 = vld [vmem:[#allocation2 + $0x200] sm:$0xff]
    %v160 = vld [vmem:[#allocation2 + $0x208] sm:$0xff]
    %v161 = vld [vmem:[#allocation2 + $0x210] sm:$0xff]
    %v162 = vld [vmem:[#allocation2 + $0x218] sm:$0xff]
    %v163 = vld [vmem:[#allocation2 + $0x220] sm:$0xff]
    %v164 = vld [vmem:[#allocation2 + $0x228] sm:$0xff]
    %v165 = vld [vmem:[#allocation2 + $0x230] sm:$0xff]
    %v166 = vld [vmem:[#allocation2 + $0x238] sm:$0xff]
    %v167 = vld [vmem:[#allocation2 + $0x240] sm:$0xff]
    %v168 = vld [vmem:[#allocation2 + $0x248] sm:$0xff]
    %v169 = vld [vmem:[#allocation2 + $0x250] sm:$0xff]
    %v170 = vld [vmem:[#allocation2 + $0x258] sm:$0xff]
    %v171 = vld [vmem:[#allocation2 + $0x260] sm:$0xff]
    %v172 = vld [vmem:[#allocation2 + $0x268] sm:$0xff]
    %v173 = vld [vmem:[#allocation2 + $0x270] sm:$0xff]
    %v174 = vld [vmem:[#allocation2 + $0x278] sm:$0xff]
    %v175 = vld [vmem:[#allocation2 + $0x280] sm:$0xff]
    %v176 = vld [vmem:[#allocation2 + $0x288] sm:$0xff]
    %v177 = vld [vmem:[#allocation2 + $0x290] sm:$0xff]
    %v178 = vld [vmem:[#allocation2 + $0x298] sm:$0xff]
    %v179 = vld [vmem:[#allocation2 + $0x2a0] sm:$0xff]
    %v180 = vld [vmem:[#allocation2 + $0x2a8] sm:$0xff]
    %v181 = vld [vmem:[#allocation2 + $0x2b0] sm:$0xff]
    %v182 = vld [vmem:[#allocation2 + $0x2b8] sm:$0xff]
    %v183 = vld [vmem:[#allocation2 + $0x2c0] sm:$0xff]
    %v184 = vld [vmem:[#allocation2 + $0x2c8] sm:$0xff]
    %v185 = vld [vmem:[#allocation2 + $0x2d0] sm:$0xff]
    %v186 = vld [vmem:[#allocation2 + $0x2d8] sm:$0xff]
    %v187 = vld [vmem:[#allocation2 + $0x2e0] sm:$0xff]
    %v188 = vld [vmem:[#allocation2 + $0x2e8] sm:$0xff]
    %v189 = vld [vmem:[#allocation2 + $0x2f0] sm:$0xff]
    %v190 = vld [vmem:[#allocation2 + $0x2f8] sm:$0xff]
    %v191 = vld [vmem:[#allocation2 + $0x300] sm:$0xff]
    %v192 = vld [vmem:[#allocation2 + $0x308] sm:$0xff]
    %v193 = vld [vmem:[#allocation2 + $0x310] sm:$0xff]
    %v194 = vld [vmem:[#allocation2 + $0x318] sm:$0xff]
    %v195 = vld [vmem:[#allocation2 + $0x320] sm:$0xff]
    %v196 = vld [vmem:[#allocation2 + $0x328] sm:$0xff]
    %v197 = vld [vmem:[#allocation2 + $0x330] sm:$0xff]
    %v198 = vld [vmem:[#allocation2 + $0x338] sm:$0xff]
    %v199 = vld [vmem:[#allocation2 + $0x340] sm:$0xff]
    %v200 = vld [vmem:[#allocation2 + $0x348] sm:$0xff]
    %v201 = vld [vmem:[#allocation2 + $0x350] sm:$0xff]
    %v202 = vld [vmem:[#allocation2 + $0x358] sm:$0xff]
    %v203 = vld [vmem:[#allocation2 + $0x360] sm:$0xff]
    %v204 = vld [vmem:[#allocation2 + $0x368] sm:$0xff]
    %v205 = vld [vmem:[#allocation2 + $0x370] sm:$0xff]
    %v206 = vld [vmem:[#allocation2 + $0x378] sm:$0xff]
    %v207 = vld [vmem:[#allocation2 + $0x380] sm:$0xff]
    %v208 = vld [vmem:[#allocation2 + $0x388] sm:$0xff]
    %v209 = vld [vmem:[#allocation2 + $0x390] sm:$0xff]
    %v210 = vld [vmem:[#allocation2 + $0x398] sm:$0xff]
    %v211 = vld [vmem:[#allocation2 + $0x3a0] sm:$0xff]
    %v212 = vld [vmem:[#allocation2 + $0x3a8] sm:$0xff]
    %v213 = vld [vmem:[#allocation2 + $0x3b0] sm:$0xff]
    %v214 = vld [vmem:[#allocation2 + $0x3b8] sm:$0xff]
    %v215 = vld [vmem:[#allocation2 + $0x3c0] sm:$0xff]
    %v216 = vld [vmem:[#allocation2 + $0x3c8] sm:$0xff]
    %v217 = vld [vmem:[#allocation2 + $0x3d0] sm:$0xff]
    %v218 = vld [vmem:[#allocation2 + $0x3d8] sm:$0xff]
    %v219 = vld [vmem:[#allocation2 + $0x3e0] sm:$0xff]
    %v220 = vld [vmem:[#allocation2 + $0x3e8] sm:$0xff]
    %v221 = vld [vmem:[#allocation2 + $0x3f0] sm:$0xff]
    %v222 = vld [vmem:[#allocation2 + $0x3f8] sm:$0xff]
    %v223 = vld [vmem:[#allocation2 + $0x400] sm:$0xff]
    %v224 = vld [vmem:[#allocation2 + $0x408] sm:$0xff]
    %v225 = vld [vmem:[#allocation2 + $0x410] sm:$0xff]
    %v226 = vld [vmem:[#allocation2 + $0x418] sm:$0xff]
    %v227 = vld [vmem:[#allocation2 + $0x420] sm:$0xff]
    %v228 = vld [vmem:[#allocation2 + $0x428] sm:$0xff]
    %v229 = vld [vmem:[#allocation2 + $0x430] sm:$0xff]
    %v230 = vld [vmem:[#allocation2 + $0x438] sm:$0xff]
    %v231 = vld [vmem:[#allocation2 + $0x440] sm:$0xff]
    %v232 = vld [vmem:[#allocation2 + $0x448] sm:$0xff]
    %v233 = vld [vmem:[#allocation2 + $0x450] sm:$0xff]
    %v234 = vld [vmem:[#allocation2 + $0x458] sm:$0xff]
    %v235 = vld [vmem:[#allocation2 + $0x460] sm:$0xff]
    %v236 = vld [vmem:[#allocation2 + $0x468] sm:$0xff]
    %v237 = vld [vmem:[#allocation2 + $0x470] sm:$0xff]
    %v238 = vld [vmem:[#allocation2 + $0x478] sm:$0xff]
    %v239 = vld [vmem:[#allocation2 + $0x480] sm:$0xff]
    %v240 = vld [vmem:[#allocation2 + $0x488] sm:$0xff]
    %v241 = vld [vmem:[#allocation2 + $0x490] sm:$0xff]
    %v242 = vld [vmem:[#allocation2 + $0x498] sm:$0xff]
    %v243 = vld [vmem:[#allocation2 + $0x4a0] sm:$0xff]
    %v244 = vld [vmem:[#allocation2 + $0x4a8] sm:$0xff]
    %v245 = vld [vmem:[#allocation2 + $0x4b0] sm:$0xff]
    %v246 = vld [vmem:[#allocation2 + $0x4b8] sm:$0xff]
    %v247 = vld [vmem:[#allocation2 + $0x4c0] sm:$0xff]
    %v248 = vld [vmem:[#allocation2 + $0x4c8] sm:$0xff]
    %v249 = vld [vmem:[#allocation2 + $0x4d0] sm:$0xff]
    %v250 = vld [vmem:[#allocation2 + $0x4d8] sm:$0xff]
    %v251 = vld [vmem:[#allocation2 + $0x4e0] sm:$0xff]
    %v252 = vld [vmem:[#allocation2 + $0x4e8] sm:$0xff]
    %v253 = vld [vmem:[#allocation2 + $0x4f0] sm:$0xff]
    %v254 = vld [vmem:[#allocation2 + $0x4f8] sm:$0xff]
    %v255 = vld [vmem:[#allocation2 + $0x500] sm:$0xff]
    %v256 = vld [vmem:[#allocation2 + $0x508] sm:$0xff]
    %v257 = vld [vmem:[#allocation2 + $0x510] sm:$0xff]
    %v258 = vld [vmem:[#allocation2 + $0x518] sm:$0xff]
    %v259 = vld [vmem:[#allocation2 + $0x520] sm:$0xff]
    %v260 = vld [vmem:[#allocation2 + $0x528] sm:$0xff]
    %v261 = vld [vmem:[#allocation2 + $0x530] sm:$0xff]
    %v262 = vld [vmem:[#allocation2 + $0x538] sm:$0xff]
    %v263 = vld [vmem:[#allocation2 + $0x540] sm:$0xff]
    %v264 = vld [vmem:[#allocation2 + $0x548] sm:$0xff]
    %v265 = vld [vmem:[#allocation2 + $0x550] sm:$0xff]
    %v266 = vld [vmem:[#allocation2 + $0x558] sm:$0xff]
    %v267 = vld [vmem:[#allocation2 + $0x560] sm:$0xff]
    %v268 = vld [vmem:[#allocation2 + $0x568] sm:$0xff]
    %v269 = vld [vmem:[#allocation2 + $0x570] sm:$0xff]
    %v270 = vld [vmem:[#allocation2 + $0x578] sm:$0xff]
    %v271 = vld [vmem:[#allocation2 + $0x580] sm:$0xff]
    %v272 = vld [vmem:[#allocation2 + $0x588] sm:$0xff]
    %v273 = vld [vmem:[#allocation2 + $0x590] sm:$0xff]
    %v274 = vld [vmem:[#allocation2 + $0x598] sm:$0xff]
    %v275 = vld [vmem:[#allocation2 + $0x5a0] sm:$0xff]
    %v276 = vld [vmem:[#allocation2 + $0x5a8] sm:$0xff]
    %v277 = vld [vmem:[#allocation2 + $0x5b0] sm:$0xff]
    %v278 = vld [vmem:[#allocation2 + $0x5b8] sm:$0xff]
    %v279 = vld [vmem:[#allocation2 + $0x5c0] sm:$0xff]
    %v280 = vld [vmem:[#allocation2 + $0x5c8] sm:$0xff]
    %v281 = vld [vmem:[#allocation2 + $0x5d0] sm:$0xff]
    %v282 = vld [vmem:[#allocation2 + $0x5d8] sm:$0xff]
    %v283 = vld [vmem:[#allocation2 + $0x5e0] sm:$0xff]
    %v284 = vld [vmem:[#allocation2 + $0x5e8] sm:$0xff]
    %v285 = vld [vmem:[#allocation2 + $0x5f0] sm:$0xff]
    %v286 = vld [vmem:[#allocation2 + $0x5f8] sm:$0xff]
    %v287 = vld [vmem:[#allocation2 + $0x600] sm:$0xff]
    %v288 = vld [vmem:[#allocation2 + $0x608] sm:$0xff]
    %v289 = vld [vmem:[#allocation2 + $0x610] sm:$0xff]
    %v290 = vld [vmem:[#allocation2 + $0x618] sm:$0xff]
    %v291 = vld [vmem:[#allocation2 + $0x620] sm:$0xff]
    %v292 = vld [vmem:[#allocation2 + $0x628] sm:$0xff]
    %v293 = vld [vmem:[#allocation2 + $0x630] sm:$0xff]
    %v294 = vld [vmem:[#allocation2 + $0x638] sm:$0xff]
    %v295 = vld [vmem:[#allocation2 + $0x640] sm:$0xff]
    %v296 = vld [vmem:[#allocation2 + $0x648] sm:$0xff]
    %v297 = vld [vmem:[#allocation2 + $0x650] sm:$0xff]
    %v298 = vld [vmem:[#allocation2 + $0x658] sm:$0xff]
    %v299 = vld [vmem:[#allocation2 + $0x660] sm:$0xff]
    %v300 = vld [vmem:[#allocation2 + $0x668] sm:$0xff]
    %v301 = vld [vmem:[#allocation2 + $0x670] sm:$0xff]
    %v302 = vld [vmem:[#allocation2 + $0x678] sm:$0xff]
    %v303 = vld [vmem:[#allocation2 + $0x680] sm:$0xff]
    %v304 = vld [vmem:[#allocation2 + $0x688] sm:$0xff]
    %v305 = vld [vmem:[#allocation2 + $0x690] sm:$0xff]
    %v306 = vld [vmem:[#allocation2 + $0x698] sm:$0xff]
    %v307 = vld [vmem:[#allocation2 + $0x6a0] sm:$0xff]
    %v308 = vld [vmem:[#allocation2 + $0x6a8] sm:$0xff]
    %v309 = vld [vmem:[#allocation2 + $0x6b0] sm:$0xff]
    %v310 = vld [vmem:[#allocation2 + $0x6b8] sm:$0xff]
    %v311 = vld [vmem:[#allocation2 + $0x6c0] sm:$0xff]
    %v312 = vld [vmem:[#allocation2 + $0x6c8] sm:$0xff]
    %v313 = vld [vmem:[#allocation2 + $0x6d0] sm:$0xff]
    %v314 = vld [vmem:[#allocation2 + $0x6d8] sm:$0xff]
    %v315 = vld [vmem:[#allocation2 + $0x6e0] sm:$0xff]
    %v316 = vld [vmem:[#allocation2 + $0x6e8] sm:$0xff]
    %v317 = vld [vmem:[#allocation2 + $0x6f0] sm:$0xff]
    %v318 = vld [vmem:[#allocation2 + $0x6f8] sm:$0xff]
    %v319 = vld [vmem:[#allocation2 + $0x700] sm:$0xff]
    %v320 = vld [vmem:[#allocation2 + $0x708] sm:$0xff]
    %v321 = vld [vmem:[#allocation2 + $0x710] sm:$0xff]
    %v322 = vld [vmem:[#allocation2 + $0x718] sm:$0xff]
    %v323 = vld [vmem:[#allocation2 + $0x720] sm:$0xff]
    %v324 = vld [vmem:[#allocation2 + $0x728] sm:$0xff]
    %v325 = vld [vmem:[#allocation2 + $0x730] sm:$0xff]
    %v326 = vld [vmem:[#allocation2 + $0x738] sm:$0xff]
    %v327 = vld [vmem:[#allocation2 + $0x740] sm:$0xff]
    %v328 = vld [vmem:[#allocation2 + $0x748] sm:$0xff]
    %v329 = vld [vmem:[#allocation2 + $0x750] sm:$0xff]
    %v330 = vld [vmem:[#allocation2 + $0x758] sm:$0xff]
    %v331 = vld [vmem:[#allocation2 + $0x760] sm:$0xff]
    %v332 = vld [vmem:[#allocation2 + $0x768] sm:$0xff]
    %v333 = vld [vmem:[#allocation2 + $0x770] sm:$0xff]
    %v334 = vld [vmem:[#allocation2 + $0x778] sm:$0xff]
    %v335 = vld [vmem:[#allocation2 + $0x780] sm:$0xff]
    %v336 = vld [vmem:[#allocation2 + $0x788] sm:$0xff]
    %v337 = vld [vmem:[#allocation2 + $0x790] sm:$0xff]
    %v338 = vld [vmem:[#allocation2 + $0x798] sm:$0xff]
    %v339 = vld [vmem:[#allocation2 + $0x7a0] sm:$0xff]
    %v340 = vld [vmem:[#allocation2 + $0x7a8] sm:$0xff]
    %v341 = vld [vmem:[#allocation2 + $0x7b0] sm:$0xff]
    %v342 = vld [vmem:[#allocation2 + $0x7b8] sm:$0xff]
    %v343 = vld [vmem:[#allocation2 + $0x7c0] sm:$0xff]
    %v344 = vld [vmem:[#allocation2 + $0x7c8] sm:$0xff]
    %v345 = vld [vmem:[#allocation2 + $0x7d0] sm:$0xff]
    %v346 = vld [vmem:[#allocation2 + $0x7d8] sm:$0xff]
    %v347 = vld [vmem:[#allocation2 + $0x7e0] sm:$0xff]
    %v348 = vld [vmem:[#allocation2 + $0x7e8] sm:$0xff]
    %v349 = vld [vmem:[#allocation2 + $0x7f0] sm:$0xff]
    %v350 = vld [vmem:[#allocation2 + $0x7f8] sm:$0xff]
    %v351 = vld [vmem:[%s2] sm:$0xf]
    %v353 = vlaneseq
    %v354 = vshrl.u32 %v353, 7
    %v355 = vsub.s32 0, %v354
    %v356 = vrot.slane %v351, %v355
    %v357 = vlaneseq
    %v358 = vshrl.u32 %v357, 7
    %v359 = vsub.s32 1, %v358
    %v360 = vrot.slane %v351, %v359
    %v361 = vlaneseq
    %v362 = vshrl.u32 %v361, 7
    %v363 = vsub.s32 2, %v362
    %v364 = vrot.slane %v351, %v363
    %v365 = vlaneseq
    %v366 = vshrl.u32 %v365, 7
    %v367 = vsub.s32 3, %v366
    %v368 = vrot.slane %v351, %v367
    %v377 = vunpack.c.l.b16 %v91
    %v378 = vunpack.c.h.b16 %v91
    %v379 = vunpack.c.l.b16 %v92
    %v380 = vunpack.c.h.b16 %v92
    %v381 = vunpack.c.l.b16 %v93
    %v382 = vunpack.c.h.b16 %v93
    %v383 = vunpack.c.l.b16 %v94
    %v384 = vunpack.c.h.b16 %v94
    %v385 = vpack.c.b16 %v377, %v377
    %v386 = vpack.c.b16 %v378, %v378
    %v387 = vpack.c.b16 %v379, %v379
    %v388 = vpack.c.b16 %v380, %v380
    %v389 = vpack.c.b16 %v381, %v381
    %v390 = vpack.c.b16 %v382, %v382
    %v391 = vpack.c.b16 %v383, %v383
    %v392 = vpack.c.b16 %v384, %v384
    %v657 = vunpack.c.l.b16 %v95
    %v658 = vunpack.c.h.b16 %v95
    %v659 = vunpack.c.l.b16 %v96
    %v660 = vunpack.c.h.b16 %v96
    %v661 = vunpack.c.l.b16 %v97
    %v662 = vunpack.c.h.b16 %v97
    %v663 = vunpack.c.l.b16 %v98
    %v664 = vunpack.c.h.b16 %v98
    %v665 = vunpack.c.l.b16 %v99
    %v666 = vunpack.c.h.b16 %v99
    %v667 = vunpack.c.l.b16 %v100
    %v668 = vunpack.c.h.b16 %v100
    %v669 = vunpack.c.l.b16 %v101
    %v670 = vunpack.c.h.b16 %v101
    %v671 = vunpack.c.l.b16 %v102
    %v672 = vunpack.c.h.b16 %v102
    %v673 = vunpack.c.l.b16 %v103
    %v674 = vunpack.c.h.b16 %v103
    %v675 = vunpack.c.l.b16 %v104
    %v676 = vunpack.c.h.b16 %v104
    %v677 = vunpack.c.l.b16 %v105
    %v678 = vunpack.c.h.b16 %v105
    %v679 = vunpack.c.l.b16 %v106
    %v680 = vunpack.c.h.b16 %v106
    %v681 = vunpack.c.l.b16 %v107
    %v682 = vunpack.c.h.b16 %v107
    %v683 = vunpack.c.l.b16 %v108
    %v684 = vunpack.c.h.b16 %v108
    %v685 = vunpack.c.l.b16 %v109
    %v686 = vunpack.c.h.b16 %v109
    %v687 = vunpack.c.l.b16 %v110
    %v688 = vunpack.c.h.b16 %v110
    %v689 = vunpack.c.l.b16 %v111
    %v690 = vunpack.c.h.b16 %v111
    %v691 = vunpack.c.l.b16 %v112
    %v692 = vunpack.c.h.b16 %v112
    %v693 = vunpack.c.l.b16 %v113
    %v694 = vunpack.c.h.b16 %v113
    %v695 = vunpack.c.l.b16 %v114
    %v696 = vunpack.c.h.b16 %v114
    %v697 = vunpack.c.l.b16 %v115
    %v698 = vunpack.c.h.b16 %v115
    %v699 = vunpack.c.l.b16 %v116
    %v700 = vunpack.c.h.b16 %v116
    %v701 = vunpack.c.l.b16 %v117
    %v702 = vunpack.c.h.b16 %v117
    %v703 = vunpack.c.l.b16 %v118
    %v704 = vunpack.c.h.b16 %v118
    %v705 = vunpack.c.l.b16 %v119
    %v706 = vunpack.c.h.b16 %v119
    %v707 = vunpack.c.l.b16 %v120
    %v708 = vunpack.c.h.b16 %v120
    %v709 = vunpack.c.l.b16 %v121
    %v710 = vunpack.c.h.b16 %v121
    %v711 = vunpack.c.l.b16 %v122
    %v712 = vunpack.c.h.b16 %v122
    %v713 = vunpack.c.l.b16 %v123
    %v714 = vunpack.c.h.b16 %v123
    %v715 = vunpack.c.l.b16 %v124
    %v716 = vunpack.c.h.b16 %v124
    %v717 = vunpack.c.l.b16 %v125
    %v718 = vunpack.c.h.b16 %v125
    %v719 = vunpack.c.l.b16 %v126
    %v720 = vunpack.c.h.b16 %v126
    %v721 = vunpack.c.l.b16 %v127
    %v722 = vunpack.c.h.b16 %v127
    %v723 = vunpack.c.l.b16 %v128
    %v724 = vunpack.c.h.b16 %v128
    %v725 = vunpack.c.l.b16 %v129
    %v726 = vunpack.c.h.b16 %v129
    %v727 = vunpack.c.l.b16 %v130
    %v728 = vunpack.c.h.b16 %v130
    %v729 = vunpack.c.l.b16 %v131
    %v730 = vunpack.c.h.b16 %v131
    %v731 = vunpack.c.l.b16 %v132
    %v732 = vunpack.c.h.b16 %v132
    %v733 = vunpack.c.l.b16 %v133
    %v734 = vunpack.c.h.b16 %v133
    %v735 = vunpack.c.l.b16 %v134
    %v736 = vunpack.c.h.b16 %v134
    %v737 = vunpack.c.l.b16 %v135
    %v738 = vunpack.c.h.b16 %v135
    %v739 = vunpack.c.l.b16 %v136
    %v740 = vunpack.c.h.b16 %v136
    %v741 = vunpack.c.l.b16 %v137
    %v742 = vunpack.c.h.b16 %v137
    %v743 = vunpack.c.l.b16 %v138
    %v744 = vunpack.c.h.b16 %v138
    %v745 = vunpack.c.l.b16 %v139
    %v746 = vunpack.c.h.b16 %v139
    %v747 = vunpack.c.l.b16 %v140
    %v748 = vunpack.c.h.b16 %v140
    %v749 = vunpack.c.l.b16 %v141
    %v750 = vunpack.c.h.b16 %v141
    %v751 = vunpack.c.l.b16 %v142
    %v752 = vunpack.c.h.b16 %v142
    %v753 = vunpack.c.l.b16 %v143
    %v754 = vunpack.c.h.b16 %v143
    %v755 = vunpack.c.l.b16 %v144
    %v756 = vunpack.c.h.b16 %v144
    %v757 = vunpack.c.l.b16 %v145
    %v758 = vunpack.c.h.b16 %v145
    %v759 = vunpack.c.l.b16 %v146
    %v760 = vunpack.c.h.b16 %v146
    %v761 = vunpack.c.l.b16 %v147
    %v762 = vunpack.c.h.b16 %v147
    %v763 = vunpack.c.l.b16 %v148
    %v764 = vunpack.c.h.b16 %v148
    %v765 = vunpack.c.l.b16 %v149
    %v766 = vunpack.c.h.b16 %v149
    %v767 = vunpack.c.l.b16 %v150
    %v768 = vunpack.c.h.b16 %v150
    %v769 = vunpack.c.l.b16 %v151
    %v770 = vunpack.c.h.b16 %v151
    %v771 = vunpack.c.l.b16 %v152
    %v772 = vunpack.c.h.b16 %v152
    %v773 = vunpack.c.l.b16 %v153
    %v774 = vunpack.c.h.b16 %v153
    %v775 = vunpack.c.l.b16 %v154
    %v776 = vunpack.c.h.b16 %v154
    %v777 = vunpack.c.l.b16 %v155
    %v778 = vunpack.c.h.b16 %v155
    %v779 = vunpack.c.l.b16 %v156
    %v780 = vunpack.c.h.b16 %v156
    %v781 = vunpack.c.l.b16 %v157
    %v782 = vunpack.c.h.b16 %v157
    %v783 = vunpack.c.l.b16 %v158
    %v784 = vunpack.c.h.b16 %v158
    %v785 = vunpack.c.l.b16 %v159
    %v786 = vunpack.c.h.b16 %v159
    %v787 = vunpack.c.l.b16 %v160
    %v788 = vunpack.c.h.b16 %v160
    %v789 = vunpack.c.l.b16 %v161
    %v790 = vunpack.c.h.b16 %v161
    %v791 = vunpack.c.l.b16 %v162
    %v792 = vunpack.c.h.b16 %v162
    %v793 = vunpack.c.l.b16 %v163
    %v794 = vunpack.c.h.b16 %v163
    %v795 = vunpack.c.l.b16 %v164
    %v796 = vunpack.c.h.b16 %v164
    %v797 = vunpack.c.l.b16 %v165
    %v798 = vunpack.c.h.b16 %v165
    %v799 = vunpack.c.l.b16 %v166
    %v800 = vunpack.c.h.b16 %v166
    %v801 = vunpack.c.l.b16 %v167
    %v802 = vunpack.c.h.b16 %v167
    %v803 = vunpack.c.l.b16 %v168
    %v804 = vunpack.c.h.b16 %v168
    %v805 = vunpack.c.l.b16 %v169
    %v806 = vunpack.c.h.b16 %v169
    %v807 = vunpack.c.l.b16 %v170
    %v808 = vunpack.c.h.b16 %v170
    %v809 = vunpack.c.l.b16 %v171
    %v810 = vunpack.c.h.b16 %v171
    %v811 = vunpack.c.l.b16 %v172
    %v812 = vunpack.c.h.b16 %v172
    %v813 = vunpack.c.l.b16 %v173
    %v814 = vunpack.c.h.b16 %v173
    %v815 = vunpack.c.l.b16 %v174
    %v816 = vunpack.c.h.b16 %v174
    %v817 = vunpack.c.l.b16 %v175
    %v818 = vunpack.c.h.b16 %v175
    %v819 = vunpack.c.l.b16 %v176
    %v820 = vunpack.c.h.b16 %v176
    %v821 = vunpack.c.l.b16 %v177
    %v822 = vunpack.c.h.b16 %v177
    %v823 = vunpack.c.l.b16 %v178
    %v824 = vunpack.c.h.b16 %v178
    %v825 = vunpack.c.l.b16 %v179
    %v826 = vunpack.c.h.b16 %v179
    %v827 = vunpack.c.l.b16 %v180
    %v828 = vunpack.c.h.b16 %v180
    %v829 = vunpack.c.l.b16 %v181
    %v830 = vunpack.c.h.b16 %v181
    %v831 = vunpack.c.l.b16 %v182
    %v832 = vunpack.c.h.b16 %v182
    %v833 = vunpack.c.l.b16 %v183
    %v834 = vunpack.c.h.b16 %v183
    %v835 = vunpack.c.l.b16 %v184
    %v836 = vunpack.c.h.b16 %v184
    %v837 = vunpack.c.l.b16 %v185
    %v838 = vunpack.c.h.b16 %v185
    %v839 = vunpack.c.l.b16 %v186
    %v840 = vunpack.c.h.b16 %v186
    %v841 = vunpack.c.l.b16 %v187
    %v842 = vunpack.c.h.b16 %v187
    %v843 = vunpack.c.l.b16 %v188
    %v844 = vunpack.c.h.b16 %v188
    %v845 = vunpack.c.l.b16 %v189
    %v846 = vunpack.c.h.b16 %v189
    %v847 = vunpack.c.l.b16 %v190
    %v848 = vunpack.c.h.b16 %v190
    %v849 = vunpack.c.l.b16 %v191
    %v850 = vunpack.c.h.b16 %v191
    %v851 = vunpack.c.l.b16 %v192
    %v852 = vunpack.c.h.b16 %v192
    %v853 = vunpack.c.l.b16 %v193
    %v854 = vunpack.c.h.b16 %v193
    %v855 = vunpack.c.l.b16 %v194
    %v856 = vunpack.c.h.b16 %v194
    %v857 = vunpack.c.l.b16 %v195
    %v858 = vunpack.c.h.b16 %v195
    %v859 = vunpack.c.l.b16 %v196
    %v860 = vunpack.c.h.b16 %v196
    %v861 = vunpack.c.l.b16 %v197
    %v862 = vunpack.c.h.b16 %v197
    %v863 = vunpack.c.l.b16 %v198
    %v864 = vunpack.c.h.b16 %v198
    %v865 = vunpack.c.l.b16 %v199
    %v866 = vunpack.c.h.b16 %v199
    %v867 = vunpack.c.l.b16 %v200
    %v868 = vunpack.c.h.b16 %v200
    %v869 = vunpack.c.l.b16 %v201
    %v870 = vunpack.c.h.b16 %v201
    %v871 = vunpack.c.l.b16 %v202
    %v872 = vunpack.c.h.b16 %v202
    %v873 = vunpack.c.l.b16 %v203
    %v874 = vunpack.c.h.b16 %v203
    %v875 = vunpack.c.l.b16 %v204
    %v876 = vunpack.c.h.b16 %v204
    %v877 = vunpack.c.l.b16 %v205
    %v878 = vunpack.c.h.b16 %v205
    %v879 = vunpack.c.l.b16 %v206
    %v880 = vunpack.c.h.b16 %v206
    %v881 = vunpack.c.l.b16 %v207
    %v882 = vunpack.c.h.b16 %v207
    %v883 = vunpack.c.l.b16 %v208
    %v884 = vunpack.c.h.b16 %v208
    %v885 = vunpack.c.l.b16 %v209
    %v886 = vunpack.c.h.b16 %v209
    %v887 = vunpack.c.l.b16 %v210
    %v888 = vunpack.c.h.b16 %v210
    %v889 = vunpack.c.l.b16 %v211
    %v890 = vunpack.c.h.b16 %v211
    %v891 = vunpack.c.l.b16 %v212
    %v892 = vunpack.c.h.b16 %v212
    %v893 = vunpack.c.l.b16 %v213
    %v894 = vunpack.c.h.b16 %v213
    %v895 = vunpack.c.l.b16 %v214
    %v896 = vunpack.c.h.b16 %v214
    %v897 = vunpack.c.l.b16 %v215
    %v898 = vunpack.c.h.b16 %v215
    %v899 = vunpack.c.l.b16 %v216
    %v900 = vunpack.c.h.b16 %v216
    %v901 = vunpack.c.l.b16 %v217
    %v902 = vunpack.c.h.b16 %v217
    %v903 = vunpack.c.l.b16 %v218
    %v904 = vunpack.c.h.b16 %v218
    %v905 = vunpack.c.l.b16 %v219
    %v906 = vunpack.c.h.b16 %v219
    %v907 = vunpack.c.l.b16 %v220
    %v908 = vunpack.c.h.b16 %v220
    %v909 = vunpack.c.l.b16 %v221
    %v910 = vunpack.c.h.b16 %v221
    %v911 = vunpack.c.l.b16 %v222
    %v912 = vunpack.c.h.b16 %v222
    %v913 = vunpack.c.l.b16 %v223
    %v914 = vunpack.c.h.b16 %v223
    %v915 = vunpack.c.l.b16 %v224
    %v916 = vunpack.c.h.b16 %v224
    %v917 = vunpack.c.l.b16 %v225
    %v918 = vunpack.c.h.b16 %v225
    %v919 = vunpack.c.l.b16 %v226
    %v920 = vunpack.c.h.b16 %v226
    %v921 = vunpack.c.l.b16 %v227
    %v922 = vunpack.c.h.b16 %v227
    %v923 = vunpack.c.l.b16 %v228
    %v924 = vunpack.c.h.b16 %v228
    %v925 = vunpack.c.l.b16 %v229
    %v926 = vunpack.c.h.b16 %v229
    %v927 = vunpack.c.l.b16 %v230
    %v928 = vunpack.c.h.b16 %v230
    %v929 = vunpack.c.l.b16 %v231
    %v930 = vunpack.c.h.b16 %v231
    %v931 = vunpack.c.l.b16 %v232
    %v932 = vunpack.c.h.b16 %v232
    %v933 = vunpack.c.l.b16 %v233
    %v934 = vunpack.c.h.b16 %v233
    %v935 = vunpack.c.l.b16 %v234
    %v936 = vunpack.c.h.b16 %v234
    %v937 = vunpack.c.l.b16 %v235
    %v938 = vunpack.c.h.b16 %v235
    %v939 = vunpack.c.l.b16 %v236
    %v940 = vunpack.c.h.b16 %v236
    %v941 = vunpack.c.l.b16 %v237
    %v942 = vunpack.c.h.b16 %v237
    %v943 = vunpack.c.l.b16 %v238
    %v944 = vunpack.c.h.b16 %v238
    %v945 = vunpack.c.l.b16 %v239
    %v946 = vunpack.c.h.b16 %v239
    %v947 = vunpack.c.l.b16 %v240
    %v948 = vunpack.c.h.b16 %v240
    %v949 = vunpack.c.l.b16 %v241
    %v950 = vunpack.c.h.b16 %v241
    %v951 = vunpack.c.l.b16 %v242
    %v952 = vunpack.c.h.b16 %v242
    %v953 = vunpack.c.l.b16 %v243
    %v954 = vunpack.c.h.b16 %v243
    %v955 = vunpack.c.l.b16 %v244
    %v956 = vunpack.c.h.b16 %v244
    %v957 = vunpack.c.l.b16 %v245
    %v958 = vunpack.c.h.b16 %v245
    %v959 = vunpack.c.l.b16 %v246
    %v960 = vunpack.c.h.b16 %v246
    %v961 = vunpack.c.l.b16 %v247
    %v962 = vunpack.c.h.b16 %v247
    %v963 = vunpack.c.l.b16 %v248
    %v964 = vunpack.c.h.b16 %v248
    %v965 = vunpack.c.l.b16 %v249
    %v966 = vunpack.c.h.b16 %v249
    %v967 = vunpack.c.l.b16 %v250
    %v968 = vunpack.c.h.b16 %v250
    %v969 = vunpack.c.l.b16 %v251
    %v970 = vunpack.c.h.b16 %v251
    %v971 = vunpack.c.l.b16 %v252
    %v972 = vunpack.c.h.b16 %v252
    %v973 = vunpack.c.l.b16 %v253
    %v974 = vunpack.c.h.b16 %v253
    %v975 = vunpack.c.l.b16 %v254
    %v976 = vunpack.c.h.b16 %v254
    %v977 = vunpack.c.l.b16 %v255
    %v978 = vunpack.c.h.b16 %v255
    %v979 = vunpack.c.l.b16 %v256
    %v980 = vunpack.c.h.b16 %v256
    %v981 = vunpack.c.l.b16 %v257
    %v982 = vunpack.c.h.b16 %v257
    %v983 = vunpack.c.l.b16 %v258
    %v984 = vunpack.c.h.b16 %v258
    %v985 = vunpack.c.l.b16 %v259
    %v986 = vunpack.c.h.b16 %v259
    %v987 = vunpack.c.l.b16 %v260
    %v988 = vunpack.c.h.b16 %v260
    %v989 = vunpack.c.l.b16 %v261
    %v990 = vunpack.c.h.b16 %v261
    %v991 = vunpack.c.l.b16 %v262
    %v992 = vunpack.c.h.b16 %v262
    %v993 = vunpack.c.l.b16 %v263
    %v994 = vunpack.c.h.b16 %v263
    %v995 = vunpack.c.l.b16 %v264
    %v996 = vunpack.c.h.b16 %v264
    %v997 = vunpack.c.l.b16 %v265
    %v998 = vunpack.c.h.b16 %v265
    %v999 = vunpack.c.l.b16 %v266
    %v1000 = vunpack.c.h.b16 %v266
    %v1001 = vunpack.c.l.b16 %v267
    %v1002 = vunpack.c.h.b16 %v267
    %v1003 = vunpack.c.l.b16 %v268
    %v1004 = vunpack.c.h.b16 %v268
    %v1005 = vunpack.c.l.b16 %v269
    %v1006 = vunpack.c.h.b16 %v269
    %v1007 = vunpack.c.l.b16 %v270
    %v1008 = vunpack.c.h.b16 %v270
    %v1009 = vunpack.c.l.b16 %v271
    %v1010 = vunpack.c.h.b16 %v271
    %v1011 = vunpack.c.l.b16 %v272
    %v1012 = vunpack.c.h.b16 %v272
    %v1013 = vunpack.c.l.b16 %v273
    %v1014 = vunpack.c.h.b16 %v273
    %v1015 = vunpack.c.l.b16 %v274
    %v1016 = vunpack.c.h.b16 %v274
    %v1017 = vunpack.c.l.b16 %v275
    %v1018 = vunpack.c.h.b16 %v275
    %v1019 = vunpack.c.l.b16 %v276
    %v1020 = vunpack.c.h.b16 %v276
    %v1021 = vunpack.c.l.b16 %v277
    %v1022 = vunpack.c.h.b16 %v277
    %v1023 = vunpack.c.l.b16 %v278
    %v1024 = vunpack.c.h.b16 %v278
    %v1025 = vunpack.c.l.b16 %v279
    %v1026 = vunpack.c.h.b16 %v279
    %v1027 = vunpack.c.l.b16 %v280
    %v1028 = vunpack.c.h.b16 %v280
    %v1029 = vunpack.c.l.b16 %v281
    %v1030 = vunpack.c.h.b16 %v281
    %v1031 = vunpack.c.l.b16 %v282
    %v1032 = vunpack.c.h.b16 %v282
    %v1033 = vunpack.c.l.b16 %v283
    %v1034 = vunpack.c.h.b16 %v283
    %v1035 = vunpack.c.l.b16 %v284
    %v1036 = vunpack.c.h.b16 %v284
    %v1037 = vunpack.c.l.b16 %v285
    %v1038 = vunpack.c.h.b16 %v285
    %v1039 = vunpack.c.l.b16 %v286
    %v1040 = vunpack.c.h.b16 %v286
    %v1041 = vunpack.c.l.b16 %v287
    %v1042 = vunpack.c.h.b16 %v287
    %v1043 = vunpack.c.l.b16 %v288
    %v1044 = vunpack.c.h.b16 %v288
    %v1045 = vunpack.c.l.b16 %v289
    %v1046 = vunpack.c.h.b16 %v289
    %v1047 = vunpack.c.l.b16 %v290
    %v1048 = vunpack.c.h.b16 %v290
    %v1049 = vunpack.c.l.b16 %v291
    %v1050 = vunpack.c.h.b16 %v291
    %v1051 = vunpack.c.l.b16 %v292
    %v1052 = vunpack.c.h.b16 %v292
    %v1053 = vunpack.c.l.b16 %v293
    %v1054 = vunpack.c.h.b16 %v293
    %v1055 = vunpack.c.l.b16 %v294
    %v1056 = vunpack.c.h.b16 %v294
    %v1057 = vunpack.c.l.b16 %v295
    %v1058 = vunpack.c.h.b16 %v295
    %v1059 = vunpack.c.l.b16 %v296
    %v1060 = vunpack.c.h.b16 %v296
    %v1061 = vunpack.c.l.b16 %v297
    %v1062 = vunpack.c.h.b16 %v297
    %v1063 = vunpack.c.l.b16 %v298
    %v1064 = vunpack.c.h.b16 %v298
    %v1065 = vunpack.c.l.b16 %v299
    %v1066 = vunpack.c.h.b16 %v299
    %v1067 = vunpack.c.l.b16 %v300
    %v1068 = vunpack.c.h.b16 %v300
    %v1069 = vunpack.c.l.b16 %v301
    %v1070 = vunpack.c.h.b16 %v301
    %v1071 = vunpack.c.l.b16 %v302
    %v1072 = vunpack.c.h.b16 %v302
    %v1073 = vunpack.c.l.b16 %v303
    %v1074 = vunpack.c.h.b16 %v303
    %v1075 = vunpack.c.l.b16 %v304
    %v1076 = vunpack.c.h.b16 %v304
    %v1077 = vunpack.c.l.b16 %v305
    %v1078 = vunpack.c.h.b16 %v305
    %v1079 = vunpack.c.l.b16 %v306
    %v1080 = vunpack.c.h.b16 %v306
    %v1081 = vunpack.c.l.b16 %v307
    %v1082 = vunpack.c.h.b16 %v307
    %v1083 = vunpack.c.l.b16 %v308
    %v1084 = vunpack.c.h.b16 %v308
    %v1085 = vunpack.c.l.b16 %v309
    %v1086 = vunpack.c.h.b16 %v309
    %v1087 = vunpack.c.l.b16 %v310
    %v1088 = vunpack.c.h.b16 %v310
    %v1089 = vunpack.c.l.b16 %v311
    %v1090 = vunpack.c.h.b16 %v311
    %v1091 = vunpack.c.l.b16 %v312
    %v1092 = vunpack.c.h.b16 %v312
    %v1093 = vunpack.c.l.b16 %v313
    %v1094 = vunpack.c.h.b16 %v313
    %v1095 = vunpack.c.l.b16 %v314
    %v1096 = vunpack.c.h.b16 %v314
    %v1097 = vunpack.c.l.b16 %v315
    %v1098 = vunpack.c.h.b16 %v315
    %v1099 = vunpack.c.l.b16 %v316
    %v1100 = vunpack.c.h.b16 %v316
    %v1101 = vunpack.c.l.b16 %v317
    %v1102 = vunpack.c.h.b16 %v317
    %v1103 = vunpack.c.l.b16 %v318
    %v1104 = vunpack.c.h.b16 %v318
    %v1105 = vunpack.c.l.b16 %v319
    %v1106 = vunpack.c.h.b16 %v319
    %v1107 = vunpack.c.l.b16 %v320
    %v1108 = vunpack.c.h.b16 %v320
    %v1109 = vunpack.c.l.b16 %v321
    %v1110 = vunpack.c.h.b16 %v321
    %v1111 = vunpack.c.l.b16 %v322
    %v1112 = vunpack.c.h.b16 %v322
    %v1113 = vunpack.c.l.b16 %v323
    %v1114 = vunpack.c.h.b16 %v323
    %v1115 = vunpack.c.l.b16 %v324
    %v1116 = vunpack.c.h.b16 %v324
    %v1117 = vunpack.c.l.b16 %v325
    %v1118 = vunpack.c.h.b16 %v325
    %v1119 = vunpack.c.l.b16 %v326
    %v1120 = vunpack.c.h.b16 %v326
    %v1121 = vunpack.c.l.b16 %v327
    %v1122 = vunpack.c.h.b16 %v327
    %v1123 = vunpack.c.l.b16 %v328
    %v1124 = vunpack.c.h.b16 %v328
    %v1125 = vunpack.c.l.b16 %v329
    %v1126 = vunpack.c.h.b16 %v329
    %v1127 = vunpack.c.l.b16 %v330
    %v1128 = vunpack.c.h.b16 %v330
    %v1129 = vunpack.c.l.b16 %v331
    %v1130 = vunpack.c.h.b16 %v331
    %v1131 = vunpack.c.l.b16 %v332
    %v1132 = vunpack.c.h.b16 %v332
    %v1133 = vunpack.c.l.b16 %v333
    %v1134 = vunpack.c.h.b16 %v333
    %v1135 = vunpack.c.l.b16 %v334
    %v1136 = vunpack.c.h.b16 %v334
    %v1137 = vunpack.c.l.b16 %v335
    %v1138 = vunpack.c.h.b16 %v335
    %v1139 = vunpack.c.l.b16 %v336
    %v1140 = vunpack.c.h.b16 %v336
    %v1141 = vunpack.c.l.b16 %v337
    %v1142 = vunpack.c.h.b16 %v337
    %v1143 = vunpack.c.l.b16 %v338
    %v1144 = vunpack.c.h.b16 %v338
    %v1145 = vunpack.c.l.b16 %v339
    %v1146 = vunpack.c.h.b16 %v339
    %v1147 = vunpack.c.l.b16 %v340
    %v1148 = vunpack.c.h.b16 %v340
    %v1149 = vunpack.c.l.b16 %v341
    %v1150 = vunpack.c.h.b16 %v341
    %v1151 = vunpack.c.l.b16 %v342
    %v1152 = vunpack.c.h.b16 %v342
    %v1153 = vunpack.c.l.b16 %v343
    %v1154 = vunpack.c.h.b16 %v343
    %v1155 = vunpack.c.l.b16 %v344
    %v1156 = vunpack.c.h.b16 %v344
    %v1157 = vunpack.c.l.b16 %v345
    %v1158 = vunpack.c.h.b16 %v345
    %v1159 = vunpack.c.l.b16 %v346
    %v1160 = vunpack.c.h.b16 %v346
    %v1161 = vunpack.c.l.b16 %v347
    %v1162 = vunpack.c.h.b16 %v347
    %v1163 = vunpack.c.l.b16 %v348
    %v1164 = vunpack.c.h.b16 %v348
    %v1165 = vunpack.c.l.b16 %v349
    %v1166 = vunpack.c.h.b16 %v349
    %v1167 = vunpack.c.l.b16 %v350
    %v1168 = vunpack.c.h.b16 %v350
    %v1169 = vpack.c.b16 %v661, %v657
    %v1170 = vpack.c.b16 %v662, %v658
    %v1171 = vpack.c.b16 %v663, %v659
    %v1172 = vpack.c.b16 %v664, %v660
    %v1173 = vpack.c.b16 %v669, %v665
    %v1174 = vpack.c.b16 %v670, %v666
    %v1175 = vpack.c.b16 %v671, %v667
    %v1176 = vpack.c.b16 %v672, %v668
    %v1177 = vpack.c.b16 %v677, %v673
    %v1178 = vpack.c.b16 %v678, %v674
    %v1179 = vpack.c.b16 %v679, %v675
    %v1180 = vpack.c.b16 %v680, %v676
    %v1181 = vpack.c.b16 %v685, %v681
    %v1182 = vpack.c.b16 %v686, %v682
    %v1183 = vpack.c.b16 %v687, %v683
    %v1184 = vpack.c.b16 %v688, %v684
    %v1185 = vpack.c.b16 %v693, %v689
    %v1186 = vpack.c.b16 %v694, %v690
    %v1187 = vpack.c.b16 %v695, %v691
    %v1188 = vpack.c.b16 %v696, %v692
    %v1189 = vpack.c.b16 %v701, %v697
    %v1190 = vpack.c.b16 %v702, %v698
    %v1191 = vpack.c.b16 %v703, %v699
    %v1192 = vpack.c.b16 %v704, %v700
    %v1193 = vpack.c.b16 %v709, %v705
    %v1194 = vpack.c.b16 %v710, %v706
    %v1195 = vpack.c.b16 %v711, %v707
    %v1196 = vpack.c.b16 %v712, %v708
    %v1197 = vpack.c.b16 %v717, %v713
    %v1198 = vpack.c.b16 %v718, %v714
    %v1199 = vpack.c.b16 %v719, %v715
    %v1200 = vpack.c.b16 %v720, %v716
    %v1201 = vpack.c.b16 %v725, %v721
    %v1202 = vpack.c.b16 %v726, %v722
    %v1203 = vpack.c.b16 %v727, %v723
    %v1204 = vpack.c.b16 %v728, %v724
    %v1205 = vpack.c.b16 %v733, %v729
    %v1206 = vpack.c.b16 %v734, %v730
    %v1207 = vpack.c.b16 %v735, %v731
    %v1208 = vpack.c.b16 %v736, %v732
    %v1209 = vpack.c.b16 %v741, %v737
    %v1210 = vpack.c.b16 %v742, %v738
    %v1211 = vpack.c.b16 %v743, %v739
    %v1212 = vpack.c.b16 %v744, %v740
    %v1213 = vpack.c.b16 %v749, %v745
    %v1214 = vpack.c.b16 %v750, %v746
    %v1215 = vpack.c.b16 %v751, %v747
    %v1216 = vpack.c.b16 %v752, %v748
    %v1217 = vpack.c.b16 %v757, %v753
    %v1218 = vpack.c.b16 %v758, %v754
    %v1219 = vpack.c.b16 %v759, %v755
    %v1220 = vpack.c.b16 %v760, %v756
    %v1221 = vpack.c.b16 %v765, %v761
    %v1222 = vpack.c.b16 %v766, %v762
    %v1223 = vpack.c.b16 %v767, %v763
    %v1224 = vpack.c.b16 %v768, %v764
    %v1225 = vpack.c.b16 %v773, %v769
    %v1226 = vpack.c.b16 %v774, %v770
    %v1227 = vpack.c.b16 %v775, %v771
    %v1228 = vpack.c.b16 %v776, %v772
    %v1229 = vpack.c.b16 %v781, %v777
    %v1230 = vpack.c.b16 %v782, %v778
    %v1231 = vpack.c.b16 %v783, %v779
    %v1232 = vpack.c.b16 %v784, %v780
    %v1233 = vpack.c.b16 %v789, %v785
    %v1234 = vpack.c.b16 %v790, %v786
    %v1235 = vpack.c.b16 %v791, %v787
    %v1236 = vpack.c.b16 %v792, %v788
    %v1237 = vpack.c.b16 %v797, %v793
    %v1238 = vpack.c.b16 %v798, %v794
    %v1239 = vpack.c.b16 %v799, %v795
    %v1240 = vpack.c.b16 %v800, %v796
    %v1241 = vpack.c.b16 %v805, %v801
    %v1242 = vpack.c.b16 %v806, %v802
    %v1243 = vpack.c.b16 %v807, %v803
    %v1244 = vpack.c.b16 %v808, %v804
    %v1245 = vpack.c.b16 %v813, %v809
    %v1246 = vpack.c.b16 %v814, %v810
    %v1247 = vpack.c.b16 %v815, %v811
    %v1248 = vpack.c.b16 %v816, %v812
    %v1249 = vpack.c.b16 %v821, %v817
    %v1250 = vpack.c.b16 %v822, %v818
    %v1251 = vpack.c.b16 %v823, %v819
    %v1252 = vpack.c.b16 %v824, %v820
    %v1253 = vpack.c.b16 %v829, %v825
    %v1254 = vpack.c.b16 %v830, %v826
    %v1255 = vpack.c.b16 %v831, %v827
    %v1256 = vpack.c.b16 %v832, %v828
    %v1257 = vpack.c.b16 %v837, %v833
    %v1258 = vpack.c.b16 %v838, %v834
    %v1259 = vpack.c.b16 %v839, %v835
    %v1260 = vpack.c.b16 %v840, %v836
    %v1261 = vpack.c.b16 %v845, %v841
    %v1262 = vpack.c.b16 %v846, %v842
    %v1263 = vpack.c.b16 %v847, %v843
    %v1264 = vpack.c.b16 %v848, %v844
    %v1265 = vpack.c.b16 %v853, %v849
    %v1266 = vpack.c.b16 %v854, %v850
    %v1267 = vpack.c.b16 %v855, %v851
    %v1268 = vpack.c.b16 %v856, %v852
    %v1269 = vpack.c.b16 %v861, %v857
    %v1270 = vpack.c.b16 %v862, %v858
    %v1271 = vpack.c.b16 %v863, %v859
    %v1272 = vpack.c.b16 %v864, %v860
    %v1273 = vpack.c.b16 %v869, %v865
    %v1274 = vpack.c.b16 %v870, %v866
    %v1275 = vpack.c.b16 %v871, %v867
    %v1276 = vpack.c.b16 %v872, %v868
    %v1277 = vpack.c.b16 %v877, %v873
    %v1278 = vpack.c.b16 %v878, %v874
    %v1279 = vpack.c.b16 %v879, %v875
    %v1280 = vpack.c.b16 %v880, %v876
    %v1281 = vpack.c.b16 %v885, %v881
    %v1282 = vpack.c.b16 %v886, %v882
    %v1283 = vpack.c.b16 %v887, %v883
    %v1284 = vpack.c.b16 %v888, %v884
    %v1285 = vpack.c.b16 %v893, %v889
    %v1286 = vpack.c.b16 %v894, %v890
    %v1287 = vpack.c.b16 %v895, %v891
    %v1288 = vpack.c.b16 %v896, %v892
    %v1289 = vpack.c.b16 %v901, %v897
    %v1290 = vpack.c.b16 %v902, %v898
    %v1291 = vpack.c.b16 %v903, %v899
    %v1292 = vpack.c.b16 %v904, %v900
    %v1293 = vpack.c.b16 %v909, %v905
    %v1294 = vpack.c.b16 %v910, %v906
    %v1295 = vpack.c.b16 %v911, %v907
    %v1296 = vpack.c.b16 %v912, %v908
    %v1297 = vpack.c.b16 %v917, %v913
    %v1298 = vpack.c.b16 %v918, %v914
    %v1299 = vpack.c.b16 %v919, %v915
    %v1300 = vpack.c.b16 %v920, %v916
    %v1301 = vpack.c.b16 %v925, %v921
    %v1302 = vpack.c.b16 %v926, %v922
    %v1303 = vpack.c.b16 %v927, %v923
    %v1304 = vpack.c.b16 %v928, %v924
    %v1305 = vpack.c.b16 %v933, %v929
    %v1306 = vpack.c.b16 %v934, %v930
    %v1307 = vpack.c.b16 %v935, %v931
    %v1308 = vpack.c.b16 %v936, %v932
    %v1309 = vpack.c.b16 %v941, %v937
    %v1310 = vpack.c.b16 %v942, %v938
    %v1311 = vpack.c.b16 %v943, %v939
    %v1312 = vpack.c.b16 %v944, %v940
    %v1313 = vpack.c.b16 %v949, %v945
    %v1314 = vpack.c.b16 %v950, %v946
    %v1315 = vpack.c.b16 %v951, %v947
    %v1316 = vpack.c.b16 %v952, %v948
    %v1317 = vpack.c.b16 %v957, %v953
    %v1318 = vpack.c.b16 %v958, %v954
    %v1319 = vpack.c.b16 %v959, %v955
    %v1320 = vpack.c.b16 %v960, %v956
    %v1321 = vpack.c.b16 %v965, %v961
    %v1322 = vpack.c.b16 %v966, %v962
    %v1323 = vpack.c.b16 %v967, %v963
    %v1324 = vpack.c.b16 %v968, %v964
    %v1325 = vpack.c.b16 %v973, %v969
    %v1326 = vpack.c.b16 %v974, %v970
    %v1327 = vpack.c.b16 %v975, %v971
    %v1328 = vpack.c.b16 %v976, %v972
    %v1329 = vpack.c.b16 %v981, %v977
    %v1330 = vpack.c.b16 %v982, %v978
    %v1331 = vpack.c.b16 %v983, %v979
    %v1332 = vpack.c.b16 %v984, %v980
    %v1333 = vpack.c.b16 %v989, %v985
    %v1334 = vpack.c.b16 %v990, %v986
    %v1335 = vpack.c.b16 %v991, %v987
    %v1336 = vpack.c.b16 %v992, %v988
    %v1337 = vpack.c.b16 %v997, %v993
    %v1338 = vpack.c.b16 %v998, %v994
    %v1339 = vpack.c.b16 %v999, %v995
    %v1340 = vpack.c.b16 %v1000, %v996
    %v1341 = vpack.c.b16 %v1005, %v1001
    %v1342 = vpack.c.b16 %v1006, %v1002
    %v1343 = vpack.c.b16 %v1007, %v1003
    %v1344 = vpack.c.b16 %v1008, %v1004
    %v1345 = vpack.c.b16 %v1013, %v1009
    %v1346 = vpack.c.b16 %v1014, %v1010
    %v1347 = vpack.c.b16 %v1015, %v1011
    %v1348 = vpack.c.b16 %v1016, %v1012
    %v1349 = vpack.c.b16 %v1021, %v1017
    %v1350 = vpack.c.b16 %v1022, %v1018
    %v1351 = vpack.c.b16 %v1023, %v1019
    %v1352 = vpack.c.b16 %v1024, %v1020
    %v1353 = vpack.c.b16 %v1029, %v1025
    %v1354 = vpack.c.b16 %v1030, %v1026
    %v1355 = vpack.c.b16 %v1031, %v1027
    %v1356 = vpack.c.b16 %v1032, %v1028
    %v1357 = vpack.c.b16 %v1037, %v1033
    %v1358 = vpack.c.b16 %v1038, %v1034
    %v1359 = vpack.c.b16 %v1039, %v1035
    %v1360 = vpack.c.b16 %v1040, %v1036
    %v1361 = vpack.c.b16 %v1045, %v1041
    %v1362 = vpack.c.b16 %v1046, %v1042
    %v1363 = vpack.c.b16 %v1047, %v1043
    %v1364 = vpack.c.b16 %v1048, %v1044
    %v1365 = vpack.c.b16 %v1053, %v1049
    %v1366 = vpack.c.b16 %v1054, %v1050
    %v1367 = vpack.c.b16 %v1055, %v1051
    %v1368 = vpack.c.b16 %v1056, %v1052
    %v1369 = vpack.c.b16 %v1061, %v1057
    %v1370 = vpack.c.b16 %v1062, %v1058
    %v1371 = vpack.c.b16 %v1063, %v1059
    %v1372 = vpack.c.b16 %v1064, %v1060
    %v1373 = vpack.c.b16 %v1069, %v1065
    %v1374 = vpack.c.b16 %v1070, %v1066
    %v1375 = vpack.c.b16 %v1071, %v1067
    %v1376 = vpack.c.b16 %v1072, %v1068
    %v1377 = vpack.c.b16 %v1077, %v1073
    %v1378 = vpack.c.b16 %v1078, %v1074
    %v1379 = vpack.c.b16 %v1079, %v1075
    %v1380 = vpack.c.b16 %v1080, %v1076
    %v1381 = vpack.c.b16 %v1085, %v1081
    %v1382 = vpack.c.b16 %v1086, %v1082
    %v1383 = vpack.c.b16 %v1087, %v1083
    %v1384 = vpack.c.b16 %v1088, %v1084
    %v1385 = vpack.c.b16 %v1093, %v1089
    %v1386 = vpack.c.b16 %v1094, %v1090
    %v1387 = vpack.c.b16 %v1095, %v1091
    %v1388 = vpack.c.b16 %v1096, %v1092
    %v1389 = vpack.c.b16 %v1101, %v1097
    %v1390 = vpack.c.b16 %v1102, %v1098
    %v1391 = vpack.c.b16 %v1103, %v1099
    %v1392 = vpack.c.b16 %v1104, %v1100
    %v1393 = vpack.c.b16 %v1109, %v1105
    %v1394 = vpack.c.b16 %v1110, %v1106
    %v1395 = vpack.c.b16 %v1111, %v1107
    %v1396 = vpack.c.b16 %v1112, %v1108
    %v1397 = vpack.c.b16 %v1117, %v1113
    %v1398 = vpack.c.b16 %v1118, %v1114
    %v1399 = vpack.c.b16 %v1119, %v1115
    %v1400 = vpack.c.b16 %v1120, %v1116
    %v1401 = vpack.c.b16 %v1125, %v1121
    %v1402 = vpack.c.b16 %v1126, %v1122
    %v1403 = vpack.c.b16 %v1127, %v1123
    %v1404 = vpack.c.b16 %v1128, %v1124
    %v1405 = vpack.c.b16 %v1133, %v1129
    %v1406 = vpack.c.b16 %v1134, %v1130
    %v1407 = vpack.c.b16 %v1135, %v1131
    %v1408 = vpack.c.b16 %v1136, %v1132
    %v1409 = vpack.c.b16 %v1141, %v1137
    %v1410 = vpack.c.b16 %v1142, %v1138
    %v1411 = vpack.c.b16 %v1143, %v1139
    %v1412 = vpack.c.b16 %v1144, %v1140
    %v1413 = vpack.c.b16 %v1149, %v1145
    %v1414 = vpack.c.b16 %v1150, %v1146
    %v1415 = vpack.c.b16 %v1151, %v1147
    %v1416 = vpack.c.b16 %v1152, %v1148
    %v1417 = vpack.c.b16 %v1157, %v1153
    %v1418 = vpack.c.b16 %v1158, %v1154
    %v1419 = vpack.c.b16 %v1159, %v1155
    %v1420 = vpack.c.b16 %v1160, %v1156
    %v1421 = vpack.c.b16 %v1165, %v1161
    %v1422 = vpack.c.b16 %v1166, %v1162
    %v1423 = vpack.c.b16 %v1167, %v1163
    %v1424 = vpack.c.b16 %v1168, %v1164
    %1681 = vmatprep.subr.bf16.mxu0 %v1170
    %1682 = vmatpush1.bf16.msra.mxu0 %v1169
    %1683 = vmatprep.subr.bf16.mxu0 %v1174
    %1684 = vmatpush1.bf16.msra.mxu0 %v1173
    %1685 = vmatprep.subr.bf16.mxu0 %v1178
    %1686 = vmatpush1.bf16.msra.mxu0 %v1177
    %1687 = vmatprep.subr.bf16.mxu0 %v1182
    %1688 = vmatpush1.bf16.msra.mxu0 %v1181
    %1689 = vmatprep.subr.bf16.mxu0 %v1186
    %1690 = vmatpush1.bf16.msra.mxu0 %v1185
    %1691 = vmatprep.subr.bf16.mxu0 %v1190
    %1692 = vmatpush1.bf16.msra.mxu0 %v1189
    %1693 = vmatprep.subr.bf16.mxu0 %v1194
    %1694 = vmatpush1.bf16.msra.mxu0 %v1193
    %1695 = vmatprep.subr.bf16.mxu0 %v1198
    %1696 = vmatpush1.bf16.msra.mxu0 %v1197
    %1697 = vmatprep.subr.bf16.mxu0 %v1202
    %1698 = vmatpush1.bf16.msra.mxu0 %v1201
    %1699 = vmatprep.subr.bf16.mxu0 %v1206
    %1700 = vmatpush1.bf16.msra.mxu0 %v1205
    %1701 = vmatprep.subr.bf16.mxu0 %v1210
    %1702 = vmatpush1.bf16.msra.mxu0 %v1209
    %1703 = vmatprep.subr.bf16.mxu0 %v1214
    %1704 = vmatpush1.bf16.msra.mxu0 %v1213
    %1705 = vmatprep.subr.bf16.mxu0 %v1218
    %1706 = vmatpush1.bf16.msra.mxu0 %v1217
    %1707 = vmatprep.subr.bf16.mxu0 %v1222
    %1708 = vmatpush1.bf16.msra.mxu0 %v1221
    %1709 = vmatprep.subr.bf16.mxu0 %v1226
    %1710 = vmatpush1.bf16.msra.mxu0 %v1225
    %1711 = vmatprep.subr.bf16.mxu0 %v1230
    %1712 = vmatpush1.bf16.msra.mxu0 %v1229
    %1713 = vmatprep.mubr.bf16.mxu0 %v386
    %1714 = vmatmul.mubr.bf16.gmra.mrb[0].mxu0 %v385
    %v1715 = vpop.f32.mrb[0].mxu0
    %v1716 = vadd.f32 %v356, %v1715
    %v1717 = vpop.f32.mrb[0].mxu0
    %v1718 = vadd.f32 %v360, %v1717
    %v1719 = vpop.f32.mrb[0].mxu0
    %v1720 = vpop.f32.mrb[0].mxu0
    %1721 = vdwg.mxu0
    %1722 = vmatprep.subr.bf16.mxu0 %v1234
    %1723 = vmatpush1.bf16.msra.mxu0 %v1233
    %1724 = vmatprep.subr.bf16.mxu0 %v1238
    %1725 = vmatpush1.bf16.msra.mxu0 %v1237
    %1726 = vmatprep.subr.bf16.mxu0 %v1242
    %1727 = vmatpush1.bf16.msra.mxu0 %v1241
    %1728 = vmatprep.subr.bf16.mxu0 %v1246
    %1729 = vmatpush1.bf16.msra.mxu0 %v1245
    %1730 = vmatprep.subr.bf16.mxu0 %v1250
    %1731 = vmatpush1.bf16.msra.mxu0 %v1249
    %1732 = vmatprep.subr.bf16.mxu0 %v1254
    %1733 = vmatpush1.bf16.msra.mxu0 %v1253
    %1734 = vmatprep.subr.bf16.mxu0 %v1258
    %1735 = vmatpush1.bf16.msra.mxu0 %v1257
    %1736 = vmatprep.subr.bf16.mxu0 %v1262
    %1737 = vmatpush1.bf16.msra.mxu0 %v1261
    %1738 = vmatprep.subr.bf16.mxu0 %v1266
    %1739 = vmatpush1.bf16.msra.mxu0 %v1265
    %1740 = vmatprep.subr.bf16.mxu0 %v1270
    %1741 = vmatpush1.bf16.msra.mxu0 %v1269
    %1742 = vmatprep.subr.bf16.mxu0 %v1274
    %1743 = vmatpush1.bf16.msra.mxu0 %v1273
    %1744 = vmatprep.subr.bf16.mxu0 %v1278
    %1745 = vmatpush1.bf16.msra.mxu0 %v1277
    %1746 = vmatprep.subr.bf16.mxu0 %v1282
    %1747 = vmatpush1.bf16.msra.mxu0 %v1281
    %1748 = vmatprep.subr.bf16.mxu0 %v1286
    %1749 = vmatpush1.bf16.msra.mxu0 %v1285
    %1750 = vmatprep.subr.bf16.mxu0 %v1290
    %1751 = vmatpush1.bf16.msra.mxu0 %v1289
    %1752 = vmatprep.subr.bf16.mxu0 %v1294
    %1753 = vmatpush1.bf16.msra.mxu0 %v1293
    %1754 = vmatprep.mubr.bf16.mxu0 %v388
    %1755 = vmatmul.mubr.bf16.gmra.mrb[0].mxu0 %v387
    %v1756 = vpop.f32.mrb[0].mxu0
    %v1757 = vadd.f32 %v1716, %v1756
    %v1758 = vpop.f32.mrb[0].mxu0
    %v1759 = vadd.f32 %v1718, %v1758
    %v1760 = vpop.f32.mrb[0].mxu0
    %v1761 = vpop.f32.mrb[0].mxu0
    %1762 = vdwg.mxu0
    %1763 = vmatprep.subr.bf16.mxu0 %v1298
    %1764 = vmatpush1.bf16.msra.mxu0 %v1297
    %1765 = vmatprep.subr.bf16.mxu0 %v1302
    %1766 = vmatpush1.bf16.msra.mxu0 %v1301
    %1767 = vmatprep.subr.bf16.mxu0 %v1306
    %1768 = vmatpush1.bf16.msra.mxu0 %v1305
    %1769 = vmatprep.subr.bf16.mxu0 %v1310
    %1770 = vmatpush1.bf16.msra.mxu0 %v1309
    %1771 = vmatprep.subr.bf16.mxu0 %v1314
    %1772 = vmatpush1.bf16.msra.mxu0 %v1313
    %1773 = vmatprep.subr.bf16.mxu0 %v1318
    %1774 = vmatpush1.bf16.msra.mxu0 %v1317
    %1775 = vmatprep.subr.bf16.mxu0 %v1322
    %1776 = vmatpush1.bf16.msra.mxu0 %v1321
    %1777 = vmatprep.subr.bf16.mxu0 %v1326
    %1778 = vmatpush1.bf16.msra.mxu0 %v1325
    %1779 = vmatprep.subr.bf16.mxu0 %v1330
    %1780 = vmatpush1.bf16.msra.mxu0 %v1329
    %1781 = vmatprep.subr.bf16.mxu0 %v1334
    %1782 = vmatpush1.bf16.msra.mxu0 %v1333
    %1783 = vmatprep.subr.bf16.mxu0 %v1338
    %1784 = vmatpush1.bf16.msra.mxu0 %v1337
    %1785 = vmatprep.subr.bf16.mxu0 %v1342
    %1786 = vmatpush1.bf16.msra.mxu0 %v1341
    %1787 = vmatprep.subr.bf16.mxu0 %v1346
    %1788 = vmatpush1.bf16.msra.mxu0 %v1345
    %1789 = vmatprep.subr.bf16.mxu0 %v1350
    %1790 = vmatpush1.bf16.msra.mxu0 %v1349
    %1791 = vmatprep.subr.bf16.mxu0 %v1354
    %1792 = vmatpush1.bf16.msra.mxu0 %v1353
    %1793 = vmatprep.subr.bf16.mxu0 %v1358
    %1794 = vmatpush1.bf16.msra.mxu0 %v1357
    %1795 = vmatprep.mubr.bf16.mxu0 %v390
    %1796 = vmatmul.mubr.bf16.gmra.mrb[0].mxu0 %v389
    %v1797 = vpop.f32.mrb[0].mxu0
    %v1798 = vadd.f32 %v1757, %v1797
    %v1799 = vpop.f32.mrb[0].mxu0
    %v1800 = vadd.f32 %v1759, %v1799
    %v1801 = vpop.f32.mrb[0].mxu0
    %v1802 = vpop.f32.mrb[0].mxu0
    %1803 = vdwg.mxu0
    %1804 = vmatprep.subr.bf16.mxu0 %v1362
    %1805 = vmatpush1.bf16.msra.mxu0 %v1361
    %1806 = vmatprep.subr.bf16.mxu0 %v1366
    %1807 = vmatpush1.bf16.msra.mxu0 %v1365
    %1808 = vmatprep.subr.bf16.mxu0 %v1370
    %1809 = vmatpush1.bf16.msra.mxu0 %v1369
    %1810 = vmatprep.subr.bf16.mxu0 %v1374
    %1811 = vmatpush1.bf16.msra.mxu0 %v1373
    %1812 = vmatprep.subr.bf16.mxu0 %v1378
    %1813 = vmatpush1.bf16.msra.mxu0 %v1377
    %1814 = vmatprep.subr.bf16.mxu0 %v1382
    %1815 = vmatpush1.bf16.msra.mxu0 %v1381
    %1816 = vmatprep.subr.bf16.mxu0 %v1386
    %1817 = vmatpush1.bf16.msra.mxu0 %v1385
    %1818 = vmatprep.subr.bf16.mxu0 %v1390
    %1819 = vmatpush1.bf16.msra.mxu0 %v1389
    %1820 = vmatprep.subr.bf16.mxu0 %v1394
    %1821 = vmatpush1.bf16.msra.mxu0 %v1393
    %1822 = vmatprep.subr.bf16.mxu0 %v1398
    %1823 = vmatpush1.bf16.msra.mxu0 %v1397
    %1824 = vmatprep.subr.bf16.mxu0 %v1402
    %1825 = vmatpush1.bf16.msra.mxu0 %v1401
    %1826 = vmatprep.subr.bf16.mxu0 %v1406
    %1827 = vmatpush1.bf16.msra.mxu0 %v1405
    %1828 = vmatprep.subr.bf16.mxu0 %v1410
    %1829 = vmatpush1.bf16.msra.mxu0 %v1409
    %1830 = vmatprep.subr.bf16.mxu0 %v1414
    %1831 = vmatpush1.bf16.msra.mxu0 %v1413
    %1832 = vmatprep.subr.bf16.mxu0 %v1418
    %1833 = vmatpush1.bf16.msra.mxu0 %v1417
    %1834 = vmatprep.subr.bf16.mxu0 %v1422
    %1835 = vmatpush1.bf16.msra.mxu0 %v1421
    %1836 = vmatprep.mubr.bf16.mxu0 %v392
    %1837 = vmatmul.mubr.bf16.gmra.mrb[0].mxu0 %v391
    %v1838 = vpop.f32.mrb[0].mxu0
    %v1839 = vadd.f32 %v1798, %v1838
    %v1840 = vpop.f32.mrb[0].mxu0
    %v1841 = vadd.f32 %v1800, %v1840
    %v1842 = vpop.f32.mrb[0].mxu0
    %v1843 = vpop.f32.mrb[0].mxu0
    %1844 = vdwg.mxu0
    %1845 = vmatprep.subr.bf16.mxu0 %v1172
    %1846 = vmatpush1.bf16.msra.mxu0 %v1171
    %1847 = vmatprep.subr.bf16.mxu0 %v1176
    %1848 = vmatpush1.bf16.msra.mxu0 %v1175
    %1849 = vmatprep.subr.bf16.mxu0 %v1180
    %1850 = vmatpush1.bf16.msra.mxu0 %v1179
    %1851 = vmatprep.subr.bf16.mxu0 %v1184
    %1852 = vmatpush1.bf16.msra.mxu0 %v1183
    %1853 = vmatprep.subr.bf16.mxu0 %v1188
    %1854 = vmatpush1.bf16.msra.mxu0 %v1187
    %1855 = vmatprep.subr.bf16.mxu0 %v1192
    %1856 = vmatpush1.bf16.msra.mxu0 %v1191
    %1857 = vmatprep.subr.bf16.mxu0 %v1196
    %1858 = vmatpush1.bf16.msra.mxu0 %v1195
    %1859 = vmatprep.subr.bf16.mxu0 %v1200
    %1860 = vmatpush1.bf16.msra.mxu0 %v1199
    %1861 = vmatprep.subr.bf16.mxu0 %v1204
    %1862 = vmatpush1.bf16.msra.mxu0 %v1203
    %1863 = vmatprep.subr.bf16.mxu0 %v1208
    %1864 = vmatpush1.bf16.msra.mxu0 %v1207
    %1865 = vmatprep.subr.bf16.mxu0 %v1212
    %1866 = vmatpush1.bf16.msra.mxu0 %v1211
    %1867 = vmatprep.subr.bf16.mxu0 %v1216
    %1868 = vmatpush1.bf16.msra.mxu0 %v1215
    %1869 = vmatprep.subr.bf16.mxu0 %v1220
    %1870 = vmatpush1.bf16.msra.mxu0 %v1219
    %1871 = vmatprep.subr.bf16.mxu0 %v1224
    %1872 = vmatpush1.bf16.msra.mxu0 %v1223
    %1873 = vmatprep.subr.bf16.mxu0 %v1228
    %1874 = vmatpush1.bf16.msra.mxu0 %v1227
    %1875 = vmatprep.subr.bf16.mxu0 %v1232
    %1876 = vmatpush1.bf16.msra.mxu0 %v1231
    %1877 = vmatprep.mubr.bf16.mxu0 %v386
    %1878 = vmatmul.mubr.bf16.gmra.mrb[0].mxu0 %v385
    %v1879 = vpop.f32.mrb[0].mxu0
    %v1880 = vadd.f32 %v364, %v1879
    %v1881 = vpop.f32.mrb[0].mxu0
    %v1882 = vadd.f32 %v368, %v1881
    %v1883 = vpop.f32.mrb[0].mxu0
    %v1884 = vpop.f32.mrb[0].mxu0
    %1885 = vdwg.mxu0
    %1886 = vmatprep.subr.bf16.mxu0 %v1236
    %1887 = vmatpush1.bf16.msra.mxu0 %v1235
    %1888 = vmatprep.subr.bf16.mxu0 %v1240
    %1889 = vmatpush1.bf16.msra.mxu0 %v1239
    %1890 = vmatprep.subr.bf16.mxu0 %v1244
    %1891 = vmatpush1.bf16.msra.mxu0 %v1243
    %1892 = vmatprep.subr.bf16.mxu0 %v1248
    %1893 = vmatpush1.bf16.msra.mxu0 %v1247
    %1894 = vmatprep.subr.bf16.mxu0 %v1252
    %1895 = vmatpush1.bf16.msra.mxu0 %v1251
    %1896 = vmatprep.subr.bf16.mxu0 %v1256
    %1897 = vmatpush1.bf16.msra.mxu0 %v1255
    %1898 = vmatprep.subr.bf16.mxu0 %v1260
    %1899 = vmatpush1.bf16.msra.mxu0 %v1259
    %1900 = vmatprep.subr.bf16.mxu0 %v1264
    %1901 = vmatpush1.bf16.msra.mxu0 %v1263
    %1902 = vmatprep.subr.bf16.mxu0 %v1268
    %1903 = vmatpush1.bf16.msra.mxu0 %v1267
    %1904 = vmatprep.subr.bf16.mxu0 %v1272
    %1905 = vmatpush1.bf16.msra.mxu0 %v1271
    %1906 = vmatprep.subr.bf16.mxu0 %v1276
    %1907 = vmatpush1.bf16.msra.mxu0 %v1275
    %1908 = vmatprep.subr.bf16.mxu0 %v1280
    %1909 = vmatpush1.bf16.msra.mxu0 %v1279
    %1910 = vmatprep.subr.bf16.mxu0 %v1284
    %1911 = vmatpush1.bf16.msra.mxu0 %v1283
    %1912 = vmatprep.subr.bf16.mxu0 %v1288
    %1913 = vmatpush1.bf16.msra.mxu0 %v1287
    %1914 = vmatprep.subr.bf16.mxu0 %v1292
    %1915 = vmatpush1.bf16.msra.mxu0 %v1291
    %1916 = vmatprep.subr.bf16.mxu0 %v1296
    %1917 = vmatpush1.bf16.msra.mxu0 %v1295
    %1918 = vmatprep.mubr.bf16.mxu0 %v388
    %1919 = vmatmul.mubr.bf16.gmra.mrb[0].mxu0 %v387
    %v1920 = vpop.f32.mrb[0].mxu0
    %v1921 = vadd.f32 %v1880, %v1920
    %v1922 = vpop.f32.mrb[0].mxu0
    %v1923 = vadd.f32 %v1882, %v1922
    %v1924 = vpop.f32.mrb[0].mxu0
    %v1925 = vpop.f32.mrb[0].mxu0
    %1926 = vdwg.mxu0
    %1927 = vmatprep.subr.bf16.mxu0 %v1300
    %1928 = vmatpush1.bf16.msra.mxu0 %v1299
    %1929 = vmatprep.subr.bf16.mxu0 %v1304
    %1930 = vmatpush1.bf16.msra.mxu0 %v1303
    %1931 = vmatprep.subr.bf16.mxu0 %v1308
    %1932 = vmatpush1.bf16.msra.mxu0 %v1307
    %1933 = vmatprep.subr.bf16.mxu0 %v1312
    %1934 = vmatpush1.bf16.msra.mxu0 %v1311
    %1935 = vmatprep.subr.bf16.mxu0 %v1316
    %1936 = vmatpush1.bf16.msra.mxu0 %v1315
    %1937 = vmatprep.subr.bf16.mxu0 %v1320
    %1938 = vmatpush1.bf16.msra.mxu0 %v1319
    %1939 = vmatprep.subr.bf16.mxu0 %v1324
    %1940 = vmatpush1.bf16.msra.mxu0 %v1323
    %1941 = vmatprep.subr.bf16.mxu0 %v1328
    %1942 = vmatpush1.bf16.msra.mxu0 %v1327
    %1943 = vmatprep.subr.bf16.mxu0 %v1332
    %1944 = vmatpush1.bf16.msra.mxu0 %v1331
    %1945 = vmatprep.subr.bf16.mxu0 %v1336
    %1946 = vmatpush1.bf16.msra.mxu0 %v1335
    %1947 = vmatprep.subr.bf16.mxu0 %v1340
    %1948 = vmatpush1.bf16.msra.mxu0 %v1339
    %1949 = vmatprep.subr.bf16.mxu0 %v1344
    %1950 = vmatpush1.bf16.msra.mxu0 %v1343
    %1951 = vmatprep.subr.bf16.mxu0 %v1348
    %1952 = vmatpush1.bf16.msra.mxu0 %v1347
    %1953 = vmatprep.subr.bf16.mxu0 %v1352
    %1954 = vmatpush1.bf16.msra.mxu0 %v1351
    %1955 = vmatprep.subr.bf16.mxu0 %v1356
    %1956 = vmatpush1.bf16.msra.mxu0 %v1355
    %1957 = vmatprep.subr.bf16.mxu0 %v1360
    %1958 = vmatpush1.bf16.msra.mxu0 %v1359
    %1959 = vmatprep.mubr.bf16.mxu0 %v390
    %1960 = vmatmul.mubr.bf16.gmra.mrb[0].mxu0 %v389
    %v1961 = vpop.f32.mrb[0].mxu0
    %v1962 = vadd.f32 %v1921, %v1961
    %v1963 = vpop.f32.mrb[0].mxu0
    %v1964 = vadd.f32 %v1923, %v1963
    %v1965 = vpop.f32.mrb[0].mxu0
    %v1966 = vpop.f32.mrb[0].mxu0
    %1967 = vdwg.mxu0
    %1968 = vmatprep.subr.bf16.mxu0 %v1364
    %1969 = vmatpush1.bf16.msra.mxu0 %v1363
    %1970 = vmatprep.subr.bf16.mxu0 %v1368
    %1971 = vmatpush1.bf16.msra.mxu0 %v1367
    %1972 = vmatprep.subr.bf16.mxu0 %v1372
    %1973 = vmatpush1.bf16.msra.mxu0 %v1371
    %1974 = vmatprep.subr.bf16.mxu0 %v1376
    %1975 = vmatpush1.bf16.msra.mxu0 %v1375
    %1976 = vmatprep.subr.bf16.mxu0 %v1380
    %1977 = vmatpush1.bf16.msra.mxu0 %v1379
    %1978 = vmatprep.subr.bf16.mxu0 %v1384
    %1979 = vmatpush1.bf16.msra.mxu0 %v1383
    %1980 = vmatprep.subr.bf16.mxu0 %v1388
    %1981 = vmatpush1.bf16.msra.mxu0 %v1387
    %1982 = vmatprep.subr.bf16.mxu0 %v1392
    %1983 = vmatpush1.bf16.msra.mxu0 %v1391
    %1984 = vmatprep.subr.bf16.mxu0 %v1396
    %1985 = vmatpush1.bf16.msra.mxu0 %v1395
    %1986 = vmatprep.subr.bf16.mxu0 %v1400
    %1987 = vmatpush1.bf16.msra.mxu0 %v1399
    %1988 = vmatprep.subr.bf16.mxu0 %v1404
    %1989 = vmatpush1.bf16.msra.mxu0 %v1403
    %1990 = vmatprep.subr.bf16.mxu0 %v1408
    %1991 = vmatpush1.bf16.msra.mxu0 %v1407
    %1992 = vmatprep.subr.bf16.mxu0 %v1412
    %1993 = vmatpush1.bf16.msra.mxu0 %v1411
    %1994 = vmatprep.subr.bf16.mxu0 %v1416
    %1995 = vmatpush1.bf16.msra.mxu0 %v1415
    %1996 = vmatprep.subr.bf16.mxu0 %v1420
    %1997 = vmatpush1.bf16.msra.mxu0 %v1419
    %1998 = vmatprep.subr.bf16.mxu0 %v1424
    %1999 = vmatpush1.bf16.msra.mxu0 %v1423
    %2000 = vmatprep.mubr.bf16.mxu0 %v392
    %2001 = vmatmul.mubr.bf16.gmra.mrb[0].mxu0 %v391
    %v2002 = vpop.f32.mrb[0].mxu0
    %v2003 = vadd.f32 %v1962, %v2002
    %v2004 = vpop.f32.mrb[0].mxu0
    %v2005 = vadd.f32 %v1964, %v2004
    %v2006 = vpop.f32.mrb[0].mxu0
    %v2007 = vpop.f32.mrb[0].mxu0
    %2008 = vdwg.mxu0
    %v2009 = vmax.f32 %v1839, 0.0
    %v2010 = vmax.f32 %v1841, 0.0
    %v2011 = vmax.f32 %v2003, 0.0
    %v2012 = vmax.f32 %v2005, 0.0
    %v2013 = vpack.c.bf16 %v2009, %v2009
    %v2014 = vpack.c.bf16 %v2010, %v2010
    %v2015 = vpack.c.bf16 %v2011, %v2011
    %v2016 = vpack.c.bf16 %v2012, %v2012
    %v2017 = vld [vmem:[#allocation4] sm:$0xff]
    %v2018 = vld [vmem:[#allocation4 + $0x8] sm:$0xff]
    %v2019 = vld [vmem:[#allocation4 + $0x10] sm:$0xff]
    %v2020 = vld [vmem:[#allocation4 + $0x18] sm:$0xff]
    %v2021 = vld [vmem:[#allocation4 + $0x20] sm:$0xff]
    %v2022 = vld [vmem:[#allocation4 + $0x28] sm:$0xff]
    %v2023 = vld [vmem:[#allocation4 + $0x30] sm:$0xff]
    %v2024 = vld [vmem:[#allocation4 + $0x38] sm:$0xff]
    %v2025 = vld [vmem:[#allocation4 + $0x40] sm:$0xff]
    %v2026 = vld [vmem:[#allocation4 + $0x48] sm:$0xff]
    %v2027 = vld [vmem:[#allocation4 + $0x50] sm:$0xff]
    %v2028 = vld [vmem:[#allocation4 + $0x58] sm:$0xff]
    %v2029 = vld [vmem:[#allocation4 + $0x60] sm:$0xff]
    %v2030 = vld [vmem:[#allocation4 + $0x68] sm:$0xff]
    %v2031 = vld [vmem:[#allocation4 + $0x70] sm:$0xff]
    %v2032 = vld [vmem:[#allocation4 + $0x78] sm:$0xff]
    %v2033 = vld [vmem:[#allocation4 + $0x80] sm:$0xff]
    %v2034 = vld [vmem:[#allocation4 + $0x88] sm:$0xff]
    %v2035 = vld [vmem:[#allocation4 + $0x90] sm:$0xff]
    %v2036 = vld [vmem:[#allocation4 + $0x98] sm:$0xff]
    %v2037 = vld [vmem:[#allocation4 + $0xa0] sm:$0xff]
    %v2038 = vld [vmem:[#allocation4 + $0xa8] sm:$0xff]
    %v2039 = vld [vmem:[#allocation4 + $0xb0] sm:$0xff]
    %v2040 = vld [vmem:[#allocation4 + $0xb8] sm:$0xff]
    %v2041 = vld [vmem:[#allocation4 + $0xc0] sm:$0xff]
    %v2042 = vld [vmem:[#allocation4 + $0xc8] sm:$0xff]
    %v2043 = vld [vmem:[#allocation4 + $0xd0] sm:$0xff]
    %v2044 = vld [vmem:[#allocation4 + $0xd8] sm:$0xff]
    %v2045 = vld [vmem:[#allocation4 + $0xe0] sm:$0xff]
    %v2046 = vld [vmem:[#allocation4 + $0xe8] sm:$0xff]
    %v2047 = vld [vmem:[#allocation4 + $0xf0] sm:$0xff]
    %v2048 = vld [vmem:[#allocation4 + $0xf8] sm:$0xff]
    %v2049 = vld [vmem:[#allocation4 + $0x100] sm:$0xff]
    %v2050 = vld [vmem:[#allocation4 + $0x108] sm:$0xff]
    %v2051 = vld [vmem:[#allocation4 + $0x110] sm:$0xff]
    %v2052 = vld [vmem:[#allocation4 + $0x118] sm:$0xff]
    %v2053 = vld [vmem:[#allocation4 + $0x120] sm:$0xff]
    %v2054 = vld [vmem:[#allocation4 + $0x128] sm:$0xff]
    %v2055 = vld [vmem:[#allocation4 + $0x130] sm:$0xff]
    %v2056 = vld [vmem:[#allocation4 + $0x138] sm:$0xff]
    %v2057 = vld [vmem:[#allocation4 + $0x140] sm:$0xff]
    %v2058 = vld [vmem:[#allocation4 + $0x148] sm:$0xff]
    %v2059 = vld [vmem:[#allocation4 + $0x150] sm:$0xff]
    %v2060 = vld [vmem:[#allocation4 + $0x158] sm:$0xff]
    %v2061 = vld [vmem:[#allocation4 + $0x160] sm:$0xff]
    %v2062 = vld [vmem:[#allocation4 + $0x168] sm:$0xff]
    %v2063 = vld [vmem:[#allocation4 + $0x170] sm:$0xff]
    %v2064 = vld [vmem:[#allocation4 + $0x178] sm:$0xff]
    %v2065 = vld [vmem:[#allocation4 + $0x180] sm:$0xff]
    %v2066 = vld [vmem:[#allocation4 + $0x188] sm:$0xff]
    %v2067 = vld [vmem:[#allocation4 + $0x190] sm:$0xff]
    %v2068 = vld [vmem:[#allocation4 + $0x198] sm:$0xff]
    %v2069 = vld [vmem:[#allocation4 + $0x1a0] sm:$0xff]
    %v2070 = vld [vmem:[#allocation4 + $0x1a8] sm:$0xff]
    %v2071 = vld [vmem:[#allocation4 + $0x1b0] sm:$0xff]
    %v2072 = vld [vmem:[#allocation4 + $0x1b8] sm:$0xff]
    %v2073 = vld [vmem:[#allocation4 + $0x1c0] sm:$0xff]
    %v2074 = vld [vmem:[#allocation4 + $0x1c8] sm:$0xff]
    %v2075 = vld [vmem:[#allocation4 + $0x1d0] sm:$0xff]
    %v2076 = vld [vmem:[#allocation4 + $0x1d8] sm:$0xff]
    %v2077 = vld [vmem:[#allocation4 + $0x1e0] sm:$0xff]
    %v2078 = vld [vmem:[#allocation4 + $0x1e8] sm:$0xff]
    %v2079 = vld [vmem:[#allocation4 + $0x1f0] sm:$0xff]
    %v2080 = vld [vmem:[#allocation4 + $0x1f8] sm:$0xff]
    %v2081 = vld [vmem:[#allocation4 + $0x200] sm:$0xff]
    %v2082 = vld [vmem:[#allocation4 + $0x208] sm:$0xff]
    %v2083 = vld [vmem:[#allocation4 + $0x210] sm:$0xff]
    %v2084 = vld [vmem:[#allocation4 + $0x218] sm:$0xff]
    %v2085 = vld [vmem:[#allocation4 + $0x220] sm:$0xff]
    %v2086 = vld [vmem:[#allocation4 + $0x228] sm:$0xff]
    %v2087 = vld [vmem:[#allocation4 + $0x230] sm:$0xff]
    %v2088 = vld [vmem:[#allocation4 + $0x238] sm:$0xff]
    %v2089 = vld [vmem:[#allocation4 + $0x240] sm:$0xff]
    %v2090 = vld [vmem:[#allocation4 + $0x248] sm:$0xff]
    %v2091 = vld [vmem:[#allocation4 + $0x250] sm:$0xff]
    %v2092 = vld [vmem:[#allocation4 + $0x258] sm:$0xff]
    %v2093 = vld [vmem:[#allocation4 + $0x260] sm:$0xff]
    %v2094 = vld [vmem:[#allocation4 + $0x268] sm:$0xff]
    %v2095 = vld [vmem:[#allocation4 + $0x270] sm:$0xff]
    %v2096 = vld [vmem:[#allocation4 + $0x278] sm:$0xff]
    %v2097 = vld [vmem:[#allocation4 + $0x280] sm:$0xff]
    %v2098 = vld [vmem:[#allocation4 + $0x288] sm:$0xff]
    %v2099 = vld [vmem:[#allocation4 + $0x290] sm:$0xff]
    %v2100 = vld [vmem:[#allocation4 + $0x298] sm:$0xff]
    %v2101 = vld [vmem:[#allocation4 + $0x2a0] sm:$0xff]
    %v2102 = vld [vmem:[#allocation4 + $0x2a8] sm:$0xff]
    %v2103 = vld [vmem:[#allocation4 + $0x2b0] sm:$0xff]
    %v2104 = vld [vmem:[#allocation4 + $0x2b8] sm:$0xff]
    %v2105 = vld [vmem:[#allocation4 + $0x2c0] sm:$0xff]
    %v2106 = vld [vmem:[#allocation4 + $0x2c8] sm:$0xff]
    %v2107 = vld [vmem:[#allocation4 + $0x2d0] sm:$0xff]
    %v2108 = vld [vmem:[#allocation4 + $0x2d8] sm:$0xff]
    %v2109 = vld [vmem:[#allocation4 + $0x2e0] sm:$0xff]
    %v2110 = vld [vmem:[#allocation4 + $0x2e8] sm:$0xff]
    %v2111 = vld [vmem:[#allocation4 + $0x2f0] sm:$0xff]
    %v2112 = vld [vmem:[#allocation4 + $0x2f8] sm:$0xff]
    %v2113 = vld [vmem:[#allocation4 + $0x300] sm:$0xff]
    %v2114 = vld [vmem:[#allocation4 + $0x308] sm:$0xff]
    %v2115 = vld [vmem:[#allocation4 + $0x310] sm:$0xff]
    %v2116 = vld [vmem:[#allocation4 + $0x318] sm:$0xff]
    %v2117 = vld [vmem:[#allocation4 + $0x320] sm:$0xff]
    %v2118 = vld [vmem:[#allocation4 + $0x328] sm:$0xff]
    %v2119 = vld [vmem:[#allocation4 + $0x330] sm:$0xff]
    %v2120 = vld [vmem:[#allocation4 + $0x338] sm:$0xff]
    %v2121 = vld [vmem:[#allocation4 + $0x340] sm:$0xff]
    %v2122 = vld [vmem:[#allocation4 + $0x348] sm:$0xff]
    %v2123 = vld [vmem:[#allocation4 + $0x350] sm:$0xff]
    %v2124 = vld [vmem:[#allocation4 + $0x358] sm:$0xff]
    %v2125 = vld [vmem:[#allocation4 + $0x360] sm:$0xff]
    %v2126 = vld [vmem:[#allocation4 + $0x368] sm:$0xff]
    %v2127 = vld [vmem:[#allocation4 + $0x370] sm:$0xff]
    %v2128 = vld [vmem:[#allocation4 + $0x378] sm:$0xff]
    %v2129 = vld [vmem:[#allocation4 + $0x380] sm:$0xff]
    %v2130 = vld [vmem:[#allocation4 + $0x388] sm:$0xff]
    %v2131 = vld [vmem:[#allocation4 + $0x390] sm:$0xff]
    %v2132 = vld [vmem:[#allocation4 + $0x398] sm:$0xff]
    %v2133 = vld [vmem:[#allocation4 + $0x3a0] sm:$0xff]
    %v2134 = vld [vmem:[#allocation4 + $0x3a8] sm:$0xff]
    %v2135 = vld [vmem:[#allocation4 + $0x3b0] sm:$0xff]
    %v2136 = vld [vmem:[#allocation4 + $0x3b8] sm:$0xff]
    %v2137 = vld [vmem:[#allocation4 + $0x3c0] sm:$0xff]
    %v2138 = vld [vmem:[#allocation4 + $0x3c8] sm:$0xff]
    %v2139 = vld [vmem:[#allocation4 + $0x3d0] sm:$0xff]
    %v2140 = vld [vmem:[#allocation4 + $0x3d8] sm:$0xff]
    %v2141 = vld [vmem:[#allocation4 + $0x3e0] sm:$0xff]
    %v2142 = vld [vmem:[#allocation4 + $0x3e8] sm:$0xff]
    %v2143 = vld [vmem:[#allocation4 + $0x3f0] sm:$0xff]
    %v2144 = vld [vmem:[#allocation4 + $0x3f8] sm:$0xff]
    %v2145 = vld [vmem:[%s4] sm:$0xf]
    %v2147 = vlaneseq
    %v2148 = vshrl.u32 %v2147, 7
    %v2149 = vsub.s32 0, %v2148
    %v2150 = vrot.slane %v2145, %v2149
    %v2151 = vlaneseq
    %v2152 = vshrl.u32 %v2151, 7
    %v2153 = vsub.s32 1, %v2152
    %v2154 = vrot.slane %v2145, %v2153
    %v2155 = vlaneseq
    %v2156 = vshrl.u32 %v2155, 7
    %v2157 = vsub.s32 2, %v2156
    %v2158 = vrot.slane %v2145, %v2157
    %v2159 = vlaneseq
    %v2160 = vshrl.u32 %v2159, 7
    %v2161 = vsub.s32 3, %v2160
    %v2162 = vrot.slane %v2145, %v2161
    %v2295 = vunpack.c.l.b16 %v2017
    %v2296 = vunpack.c.h.b16 %v2017
    %v2297 = vunpack.c.l.b16 %v2018
    %v2298 = vunpack.c.h.b16 %v2018
    %v2299 = vunpack.c.l.b16 %v2019
    %v2300 = vunpack.c.h.b16 %v2019
    %v2301 = vunpack.c.l.b16 %v2020
    %v2302 = vunpack.c.h.b16 %v2020
    %v2303 = vunpack.c.l.b16 %v2021
    %v2304 = vunpack.c.h.b16 %v2021
    %v2305 = vunpack.c.l.b16 %v2022
    %v2306 = vunpack.c.h.b16 %v2022
    %v2307 = vunpack.c.l.b16 %v2023
    %v2308 = vunpack.c.h.b16 %v2023
    %v2309 = vunpack.c.l.b16 %v2024
    %v2310 = vunpack.c.h.b16 %v2024
    %v2311 = vunpack.c.l.b16 %v2025
    %v2312 = vunpack.c.h.b16 %v2025
    %v2313 = vunpack.c.l.b16 %v2026
    %v2314 = vunpack.c.h.b16 %v2026
    %v2315 = vunpack.c.l.b16 %v2027
    %v2316 = vunpack.c.h.b16 %v2027
    %v2317 = vunpack.c.l.b16 %v2028
    %v2318 = vunpack.c.h.b16 %v2028
    %v2319 = vunpack.c.l.b16 %v2029
    %v2320 = vunpack.c.h.b16 %v2029
    %v2321 = vunpack.c.l.b16 %v2030
    %v2322 = vunpack.c.h.b16 %v2030
    %v2323 = vunpack.c.l.b16 %v2031
    %v2324 = vunpack.c.h.b16 %v2031
    %v2325 = vunpack.c.l.b16 %v2032
    %v2326 = vunpack.c.h.b16 %v2032
    %v2327 = vunpack.c.l.b16 %v2033
    %v2328 = vunpack.c.h.b16 %v2033
    %v2329 = vunpack.c.l.b16 %v2034
    %v2330 = vunpack.c.h.b16 %v2034
    %v2331 = vunpack.c.l.b16 %v2035
    %v2332 = vunpack.c.h.b16 %v2035
    %v2333 = vunpack.c.l.b16 %v2036
    %v2334 = vunpack.c.h.b16 %v2036
    %v2335 = vunpack.c.l.b16 %v2037
    %v2336 = vunpack.c.h.b16 %v2037
    %v2337 = vunpack.c.l.b16 %v2038
    %v2338 = vunpack.c.h.b16 %v2038
    %v2339 = vunpack.c.l.b16 %v2039
    %v2340 = vunpack.c.h.b16 %v2039
    %v2341 = vunpack.c.l.b16 %v2040
    %v2342 = vunpack.c.h.b16 %v2040
    %v2343 = vunpack.c.l.b16 %v2041
    %v2344 = vunpack.c.h.b16 %v2041
    %v2345 = vunpack.c.l.b16 %v2042
    %v2346 = vunpack.c.h.b16 %v2042
    %v2347 = vunpack.c.l.b16 %v2043
    %v2348 = vunpack.c.h.b16 %v2043
    %v2349 = vunpack.c.l.b16 %v2044
    %v2350 = vunpack.c.h.b16 %v2044
    %v2351 = vunpack.c.l.b16 %v2045
    %v2352 = vunpack.c.h.b16 %v2045
    %v2353 = vunpack.c.l.b16 %v2046
    %v2354 = vunpack.c.h.b16 %v2046
    %v2355 = vunpack.c.l.b16 %v2047
    %v2356 = vunpack.c.h.b16 %v2047
    %v2357 = vunpack.c.l.b16 %v2048
    %v2358 = vunpack.c.h.b16 %v2048
    %v2359 = vunpack.c.l.b16 %v2049
    %v2360 = vunpack.c.h.b16 %v2049
    %v2361 = vunpack.c.l.b16 %v2050
    %v2362 = vunpack.c.h.b16 %v2050
    %v2363 = vunpack.c.l.b16 %v2051
    %v2364 = vunpack.c.h.b16 %v2051
    %v2365 = vunpack.c.l.b16 %v2052
    %v2366 = vunpack.c.h.b16 %v2052
    %v2367 = vunpack.c.l.b16 %v2053
    %v2368 = vunpack.c.h.b16 %v2053
    %v2369 = vunpack.c.l.b16 %v2054
    %v2370 = vunpack.c.h.b16 %v2054
    %v2371 = vunpack.c.l.b16 %v2055
    %v2372 = vunpack.c.h.b16 %v2055
    %v2373 = vunpack.c.l.b16 %v2056
    %v2374 = vunpack.c.h.b16 %v2056
    %v2375 = vunpack.c.l.b16 %v2057
    %v2376 = vunpack.c.h.b16 %v2057
    %v2377 = vunpack.c.l.b16 %v2058
    %v2378 = vunpack.c.h.b16 %v2058
    %v2379 = vunpack.c.l.b16 %v2059
    %v2380 = vunpack.c.h.b16 %v2059
    %v2381 = vunpack.c.l.b16 %v2060
    %v2382 = vunpack.c.h.b16 %v2060
    %v2383 = vunpack.c.l.b16 %v2061
    %v2384 = vunpack.c.h.b16 %v2061
    %v2385 = vunpack.c.l.b16 %v2062
    %v2386 = vunpack.c.h.b16 %v2062
    %v2387 = vunpack.c.l.b16 %v2063
    %v2388 = vunpack.c.h.b16 %v2063
    %v2389 = vunpack.c.l.b16 %v2064
    %v2390 = vunpack.c.h.b16 %v2064
    %v2391 = vunpack.c.l.b16 %v2065
    %v2392 = vunpack.c.h.b16 %v2065
    %v2393 = vunpack.c.l.b16 %v2066
    %v2394 = vunpack.c.h.b16 %v2066
    %v2395 = vunpack.c.l.b16 %v2067
    %v2396 = vunpack.c.h.b16 %v2067
    %v2397 = vunpack.c.l.b16 %v2068
    %v2398 = vunpack.c.h.b16 %v2068
    %v2399 = vunpack.c.l.b16 %v2069
    %v2400 = vunpack.c.h.b16 %v2069
    %v2401 = vunpack.c.l.b16 %v2070
    %v2402 = vunpack.c.h.b16 %v2070
    %v2403 = vunpack.c.l.b16 %v2071
    %v2404 = vunpack.c.h.b16 %v2071
    %v2405 = vunpack.c.l.b16 %v2072
    %v2406 = vunpack.c.h.b16 %v2072
    %v2407 = vunpack.c.l.b16 %v2073
    %v2408 = vunpack.c.h.b16 %v2073
    %v2409 = vunpack.c.l.b16 %v2074
    %v2410 = vunpack.c.h.b16 %v2074
    %v2411 = vunpack.c.l.b16 %v2075
    %v2412 = vunpack.c.h.b16 %v2075
    %v2413 = vunpack.c.l.b16 %v2076
    %v2414 = vunpack.c.h.b16 %v2076
    %v2415 = vunpack.c.l.b16 %v2077
    %v2416 = vunpack.c.h.b16 %v2077
    %v2417 = vunpack.c.l.b16 %v2078
    %v2418 = vunpack.c.h.b16 %v2078
    %v2419 = vunpack.c.l.b16 %v2079
    %v2420 = vunpack.c.h.b16 %v2079
    %v2421 = vunpack.c.l.b16 %v2080
    %v2422 = vunpack.c.h.b16 %v2080
    %v2423 = vunpack.c.l.b16 %v2081
    %v2424 = vunpack.c.h.b16 %v2081
    %v2425 = vunpack.c.l.b16 %v2082
    %v2426 = vunpack.c.h.b16 %v2082
    %v2427 = vunpack.c.l.b16 %v2083
    %v2428 = vunpack.c.h.b16 %v2083
    %v2429 = vunpack.c.l.b16 %v2084
    %v2430 = vunpack.c.h.b16 %v2084
    %v2431 = vunpack.c.l.b16 %v2085
    %v2432 = vunpack.c.h.b16 %v2085
    %v2433 = vunpack.c.l.b16 %v2086
    %v2434 = vunpack.c.h.b16 %v2086
    %v2435 = vunpack.c.l.b16 %v2087
    %v2436 = vunpack.c.h.b16 %v2087
    %v2437 = vunpack.c.l.b16 %v2088
    %v2438 = vunpack.c.h.b16 %v2088
    %v2439 = vunpack.c.l.b16 %v2089
    %v2440 = vunpack.c.h.b16 %v2089
    %v2441 = vunpack.c.l.b16 %v2090
    %v2442 = vunpack.c.h.b16 %v2090
    %v2443 = vunpack.c.l.b16 %v2091
    %v2444 = vunpack.c.h.b16 %v2091
    %v2445 = vunpack.c.l.b16 %v2092
    %v2446 = vunpack.c.h.b16 %v2092
    %v2447 = vunpack.c.l.b16 %v2093
    %v2448 = vunpack.c.h.b16 %v2093
    %v2449 = vunpack.c.l.b16 %v2094
    %v2450 = vunpack.c.h.b16 %v2094
    %v2451 = vunpack.c.l.b16 %v2095
    %v2452 = vunpack.c.h.b16 %v2095
    %v2453 = vunpack.c.l.b16 %v2096
    %v2454 = vunpack.c.h.b16 %v2096
    %v2455 = vunpack.c.l.b16 %v2097
    %v2456 = vunpack.c.h.b16 %v2097
    %v2457 = vunpack.c.l.b16 %v2098
    %v2458 = vunpack.c.h.b16 %v2098
    %v2459 = vunpack.c.l.b16 %v2099
    %v2460 = vunpack.c.h.b16 %v2099
    %v2461 = vunpack.c.l.b16 %v2100
    %v2462 = vunpack.c.h.b16 %v2100
    %v2463 = vunpack.c.l.b16 %v2101
    %v2464 = vunpack.c.h.b16 %v2101
    %v2465 = vunpack.c.l.b16 %v2102
    %v2466 = vunpack.c.h.b16 %v2102
    %v2467 = vunpack.c.l.b16 %v2103
    %v2468 = vunpack.c.h.b16 %v2103
    %v2469 = vunpack.c.l.b16 %v2104
    %v2470 = vunpack.c.h.b16 %v2104
    %v2471 = vunpack.c.l.b16 %v2105
    %v2472 = vunpack.c.h.b16 %v2105
    %v2473 = vunpack.c.l.b16 %v2106
    %v2474 = vunpack.c.h.b16 %v2106
    %v2475 = vunpack.c.l.b16 %v2107
    %v2476 = vunpack.c.h.b16 %v2107
    %v2477 = vunpack.c.l.b16 %v2108
    %v2478 = vunpack.c.h.b16 %v2108
    %v2479 = vunpack.c.l.b16 %v2109
    %v2480 = vunpack.c.h.b16 %v2109
    %v2481 = vunpack.c.l.b16 %v2110
    %v2482 = vunpack.c.h.b16 %v2110
    %v2483 = vunpack.c.l.b16 %v2111
    %v2484 = vunpack.c.h.b16 %v2111
    %v2485 = vunpack.c.l.b16 %v2112
    %v2486 = vunpack.c.h.b16 %v2112
    %v2487 = vunpack.c.l.b16 %v2113
    %v2488 = vunpack.c.h.b16 %v2113
    %v2489 = vunpack.c.l.b16 %v2114
    %v2490 = vunpack.c.h.b16 %v2114
    %v2491 = vunpack.c.l.b16 %v2115
    %v2492 = vunpack.c.h.b16 %v2115
    %v2493 = vunpack.c.l.b16 %v2116
    %v2494 = vunpack.c.h.b16 %v2116
    %v2495 = vunpack.c.l.b16 %v2117
    %v2496 = vunpack.c.h.b16 %v2117
    %v2497 = vunpack.c.l.b16 %v2118
    %v2498 = vunpack.c.h.b16 %v2118
    %v2499 = vunpack.c.l.b16 %v2119
    %v2500 = vunpack.c.h.b16 %v2119
    %v2501 = vunpack.c.l.b16 %v2120
    %v2502 = vunpack.c.h.b16 %v2120
    %v2503 = vunpack.c.l.b16 %v2121
    %v2504 = vunpack.c.h.b16 %v2121
    %v2505 = vunpack.c.l.b16 %v2122
    %v2506 = vunpack.c.h.b16 %v2122
    %v2507 = vunpack.c.l.b16 %v2123
    %v2508 = vunpack.c.h.b16 %v2123
    %v2509 = vunpack.c.l.b16 %v2124
    %v2510 = vunpack.c.h.b16 %v2124
    %v2511 = vunpack.c.l.b16 %v2125
    %v2512 = vunpack.c.h.b16 %v2125
    %v2513 = vunpack.c.l.b16 %v2126
    %v2514 = vunpack.c.h.b16 %v2126
    %v2515 = vunpack.c.l.b16 %v2127
    %v2516 = vunpack.c.h.b16 %v2127
    %v2517 = vunpack.c.l.b16 %v2128
    %v2518 = vunpack.c.h.b16 %v2128
    %v2519 = vunpack.c.l.b16 %v2129
    %v2520 = vunpack.c.h.b16 %v2129
    %v2521 = vunpack.c.l.b16 %v2130
    %v2522 = vunpack.c.h.b16 %v2130
    %v2523 = vunpack.c.l.b16 %v2131
    %v2524 = vunpack.c.h.b16 %v2131
    %v2525 = vunpack.c.l.b16 %v2132
    %v2526 = vunpack.c.h.b16 %v2132
    %v2527 = vunpack.c.l.b16 %v2133
    %v2528 = vunpack.c.h.b16 %v2133
    %v2529 = vunpack.c.l.b16 %v2134
    %v2530 = vunpack.c.h.b16 %v2134
    %v2531 = vunpack.c.l.b16 %v2135
    %v2532 = vunpack.c.h.b16 %v2135
    %v2533 = vunpack.c.l.b16 %v2136
    %v2534 = vunpack.c.h.b16 %v2136
    %v2535 = vunpack.c.l.b16 %v2137
    %v2536 = vunpack.c.h.b16 %v2137
    %v2537 = vunpack.c.l.b16 %v2138
    %v2538 = vunpack.c.h.b16 %v2138
    %v2539 = vunpack.c.l.b16 %v2139
    %v2540 = vunpack.c.h.b16 %v2139
    %v2541 = vunpack.c.l.b16 %v2140
    %v2542 = vunpack.c.h.b16 %v2140
    %v2543 = vunpack.c.l.b16 %v2141
    %v2544 = vunpack.c.h.b16 %v2141
    %v2545 = vunpack.c.l.b16 %v2142
    %v2546 = vunpack.c.h.b16 %v2142
    %v2547 = vunpack.c.l.b16 %v2143
    %v2548 = vunpack.c.h.b16 %v2143
    %v2549 = vunpack.c.l.b16 %v2144
    %v2550 = vunpack.c.h.b16 %v2144
    %v2551 = vpack.c.b16 %v2299, %v2295
    %v2552 = vpack.c.b16 %v2300, %v2296
    %v2553 = vpack.c.b16 %v2301, %v2297
    %v2554 = vpack.c.b16 %v2302, %v2298
    %v2555 = vpack.c.b16 %v2307, %v2303
    %v2556 = vpack.c.b16 %v2308, %v2304
    %v2557 = vpack.c.b16 %v2309, %v2305
    %v2558 = vpack.c.b16 %v2310, %v2306
    %v2559 = vpack.c.b16 %v2315, %v2311
    %v2560 = vpack.c.b16 %v2316, %v2312
    %v2561 = vpack.c.b16 %v2317, %v2313
    %v2562 = vpack.c.b16 %v2318, %v2314
    %v2563 = vpack.c.b16 %v2323, %v2319
    %v2564 = vpack.c.b16 %v2324, %v2320
    %v2565 = vpack.c.b16 %v2325, %v2321
    %v2566 = vpack.c.b16 %v2326, %v2322
    %v2567 = vpack.c.b16 %v2331, %v2327
    %v2568 = vpack.c.b16 %v2332, %v2328
    %v2569 = vpack.c.b16 %v2333, %v2329
    %v2570 = vpack.c.b16 %v2334, %v2330
    %v2571 = vpack.c.b16 %v2339, %v2335
    %v2572 = vpack.c.b16 %v2340, %v2336
    %v2573 = vpack.c.b16 %v2341, %v2337
    %v2574 = vpack.c.b16 %v2342, %v2338
    %v2575 = vpack.c.b16 %v2347, %v2343
    %v2576 = vpack.c.b16 %v2348, %v2344
    %v2577 = vpack.c.b16 %v2349, %v2345
    %v2578 = vpack.c.b16 %v2350, %v2346
    %v2579 = vpack.c.b16 %v2355, %v2351
    %v2580 = vpack.c.b16 %v2356, %v2352
    %v2581 = vpack.c.b16 %v2357, %v2353
    %v2582 = vpack.c.b16 %v2358, %v2354
    %v2583 = vpack.c.b16 %v2363, %v2359
    %v2584 = vpack.c.b16 %v2364, %v2360
    %v2585 = vpack.c.b16 %v2365, %v2361
    %v2586 = vpack.c.b16 %v2366, %v2362
    %v2587 = vpack.c.b16 %v2371, %v2367
    %v2588 = vpack.c.b16 %v2372, %v2368
    %v2589 = vpack.c.b16 %v2373, %v2369
    %v2590 = vpack.c.b16 %v2374, %v2370
    %v2591 = vpack.c.b16 %v2379, %v2375
    %v2592 = vpack.c.b16 %v2380, %v2376
    %v2593 = vpack.c.b16 %v2381, %v2377
    %v2594 = vpack.c.b16 %v2382, %v2378
    %v2595 = vpack.c.b16 %v2387, %v2383
    %v2596 = vpack.c.b16 %v2388, %v2384
    %v2597 = vpack.c.b16 %v2389, %v2385
    %v2598 = vpack.c.b16 %v2390, %v2386
    %v2599 = vpack.c.b16 %v2395, %v2391
    %v2600 = vpack.c.b16 %v2396, %v2392
    %v2601 = vpack.c.b16 %v2397, %v2393
    %v2602 = vpack.c.b16 %v2398, %v2394
    %v2603 = vpack.c.b16 %v2403, %v2399
    %v2604 = vpack.c.b16 %v2404, %v2400
    %v2605 = vpack.c.b16 %v2405, %v2401
    %v2606 = vpack.c.b16 %v2406, %v2402
    %v2607 = vpack.c.b16 %v2411, %v2407
    %v2608 = vpack.c.b16 %v2412, %v2408
    %v2609 = vpack.c.b16 %v2413, %v2409
    %v2610 = vpack.c.b16 %v2414, %v2410
    %v2611 = vpack.c.b16 %v2419, %v2415
    %v2612 = vpack.c.b16 %v2420, %v2416
    %v2613 = vpack.c.b16 %v2421, %v2417
    %v2614 = vpack.c.b16 %v2422, %v2418
    %v2615 = vpack.c.b16 %v2427, %v2423
    %v2616 = vpack.c.b16 %v2428, %v2424
    %v2617 = vpack.c.b16 %v2429, %v2425
    %v2618 = vpack.c.b16 %v2430, %v2426
    %v2619 = vpack.c.b16 %v2435, %v2431
    %v2620 = vpack.c.b16 %v2436, %v2432
    %v2621 = vpack.c.b16 %v2437, %v2433
    %v2622 = vpack.c.b16 %v2438, %v2434
    %v2623 = vpack.c.b16 %v2443, %v2439
    %v2624 = vpack.c.b16 %v2444, %v2440
    %v2625 = vpack.c.b16 %v2445, %v2441
    %v2626 = vpack.c.b16 %v2446, %v2442
    %v2627 = vpack.c.b16 %v2451, %v2447
    %v2628 = vpack.c.b16 %v2452, %v2448
    %v2629 = vpack.c.b16 %v2453, %v2449
    %v2630 = vpack.c.b16 %v2454, %v2450
    %v2631 = vpack.c.b16 %v2459, %v2455
    %v2632 = vpack.c.b16 %v2460, %v2456
    %v2633 = vpack.c.b16 %v2461, %v2457
    %v2634 = vpack.c.b16 %v2462, %v2458
    %v2635 = vpack.c.b16 %v2467, %v2463
    %v2636 = vpack.c.b16 %v2468, %v2464
    %v2637 = vpack.c.b16 %v2469, %v2465
    %v2638 = vpack.c.b16 %v2470, %v2466
    %v2639 = vpack.c.b16 %v2475, %v2471
    %v2640 = vpack.c.b16 %v2476, %v2472
    %v2641 = vpack.c.b16 %v2477, %v2473
    %v2642 = vpack.c.b16 %v2478, %v2474
    %v2643 = vpack.c.b16 %v2483, %v2479
    %v2644 = vpack.c.b16 %v2484, %v2480
    %v2645 = vpack.c.b16 %v2485, %v2481
    %v2646 = vpack.c.b16 %v2486, %v2482
    %v2647 = vpack.c.b16 %v2491, %v2487
    %v2648 = vpack.c.b16 %v2492, %v2488
    %v2649 = vpack.c.b16 %v2493, %v2489
    %v2650 = vpack.c.b16 %v2494, %v2490
    %v2651 = vpack.c.b16 %v2499, %v2495
    %v2652 = vpack.c.b16 %v2500, %v2496
    %v2653 = vpack.c.b16 %v2501, %v2497
    %v2654 = vpack.c.b16 %v2502, %v2498
    %v2655 = vpack.c.b16 %v2507, %v2503
    %v2656 = vpack.c.b16 %v2508, %v2504
    %v2657 = vpack.c.b16 %v2509, %v2505
    %v2658 = vpack.c.b16 %v2510, %v2506
    %v2659 = vpack.c.b16 %v2515, %v2511
    %v2660 = vpack.c.b16 %v2516, %v2512
    %v2661 = vpack.c.b16 %v2517, %v2513
    %v2662 = vpack.c.b16 %v2518, %v2514
    %v2663 = vpack.c.b16 %v2523, %v2519
    %v2664 = vpack.c.b16 %v2524, %v2520
    %v2665 = vpack.c.b16 %v2525, %v2521
    %v2666 = vpack.c.b16 %v2526, %v2522
    %v2667 = vpack.c.b16 %v2531, %v2527
    %v2668 = vpack.c.b16 %v2532, %v2528
    %v2669 = vpack.c.b16 %v2533, %v2529
    %v2670 = vpack.c.b16 %v2534, %v2530
    %v2671 = vpack.c.b16 %v2539, %v2535
    %v2672 = vpack.c.b16 %v2540, %v2536
    %v2673 = vpack.c.b16 %v2541, %v2537
    %v2674 = vpack.c.b16 %v2542, %v2538
    %v2675 = vpack.c.b16 %v2547, %v2543
    %v2676 = vpack.c.b16 %v2548, %v2544
    %v2677 = vpack.c.b16 %v2549, %v2545
    %v2678 = vpack.c.b16 %v2550, %v2546
    %2807 = vmatprep.subr.bf16.mxu0 %v2552
    %2808 = vmatpush1.bf16.msra.mxu0 %v2551
    %2809 = vmatprep.subr.bf16.mxu0 %v2556
    %2810 = vmatpush1.bf16.msra.mxu0 %v2555
    %2811 = vmatprep.subr.bf16.mxu0 %v2560
    %2812 = vmatpush1.bf16.msra.mxu0 %v2559
    %2813 = vmatprep.subr.bf16.mxu0 %v2564
    %2814 = vmatpush1.bf16.msra.mxu0 %v2563
    %2815 = vmatprep.subr.bf16.mxu0 %v2568
    %2816 = vmatpush1.bf16.msra.mxu0 %v2567
    %2817 = vmatprep.subr.bf16.mxu0 %v2572
    %2818 = vmatpush1.bf16.msra.mxu0 %v2571
    %2819 = vmatprep.subr.bf16.mxu0 %v2576
    %2820 = vmatpush1.bf16.msra.mxu0 %v2575
    %2821 = vmatprep.subr.bf16.mxu0 %v2580
    %2822 = vmatpush1.bf16.msra.mxu0 %v2579
    %2823 = vmatprep.subr.bf16.mxu0 %v2584
    %2824 = vmatpush1.bf16.msra.mxu0 %v2583
    %2825 = vmatprep.subr.bf16.mxu0 %v2588
    %2826 = vmatpush1.bf16.msra.mxu0 %v2587
    %2827 = vmatprep.subr.bf16.mxu0 %v2592
    %2828 = vmatpush1.bf16.msra.mxu0 %v2591
    %2829 = vmatprep.subr.bf16.mxu0 %v2596
    %2830 = vmatpush1.bf16.msra.mxu0 %v2595
    %2831 = vmatprep.subr.bf16.mxu0 %v2600
    %2832 = vmatpush1.bf16.msra.mxu0 %v2599
    %2833 = vmatprep.subr.bf16.mxu0 %v2604
    %2834 = vmatpush1.bf16.msra.mxu0 %v2603
    %2835 = vmatprep.subr.bf16.mxu0 %v2608
    %2836 = vmatpush1.bf16.msra.mxu0 %v2607
    %2837 = vmatprep.subr.bf16.mxu0 %v2612
    %2838 = vmatpush1.bf16.msra.mxu0 %v2611
    %2839 = vmatprep.mubr.bf16.mxu0 %v2014
    %2840 = vmatmul.mubr.bf16.gmra.mrb[0].mxu0 %v2013
    %v2841 = vpop.f32.mrb[0].mxu0
    %v2842 = vadd.f32 %v2150, %v2841
    %v2843 = vpop.f32.mrb[0].mxu0
    %v2844 = vadd.f32 %v2154, %v2843
    %v2845 = vpop.f32.mrb[0].mxu0
    %v2846 = vpop.f32.mrb[0].mxu0
    %2847 = vdwg.mxu0
    %2848 = vmatprep.subr.bf16.mxu0 %v2616
    %2849 = vmatpush1.bf16.msra.mxu0 %v2615
    %2850 = vmatprep.subr.bf16.mxu0 %v2620
    %2851 = vmatpush1.bf16.msra.mxu0 %v2619
    %2852 = vmatprep.subr.bf16.mxu0 %v2624
    %2853 = vmatpush1.bf16.msra.mxu0 %v2623
    %2854 = vmatprep.subr.bf16.mxu0 %v2628
    %2855 = vmatpush1.bf16.msra.mxu0 %v2627
    %2856 = vmatprep.subr.bf16.mxu0 %v2632
    %2857 = vmatpush1.bf16.msra.mxu0 %v2631
    %2858 = vmatprep.subr.bf16.mxu0 %v2636
    %2859 = vmatpush1.bf16.msra.mxu0 %v2635
    %2860 = vmatprep.subr.bf16.mxu0 %v2640
    %2861 = vmatpush1.bf16.msra.mxu0 %v2639
    %2862 = vmatprep.subr.bf16.mxu0 %v2644
    %2863 = vmatpush1.bf16.msra.mxu0 %v2643
    %2864 = vmatprep.subr.bf16.mxu0 %v2648
    %2865 = vmatpush1.bf16.msra.mxu0 %v2647
    %2866 = vmatprep.subr.bf16.mxu0 %v2652
    %2867 = vmatpush1.bf16.msra.mxu0 %v2651
    %2868 = vmatprep.subr.bf16.mxu0 %v2656
    %2869 = vmatpush1.bf16.msra.mxu0 %v2655
    %2870 = vmatprep.subr.bf16.mxu0 %v2660
    %2871 = vmatpush1.bf16.msra.mxu0 %v2659
    %2872 = vmatprep.subr.bf16.mxu0 %v2664
    %2873 = vmatpush1.bf16.msra.mxu0 %v2663
    %2874 = vmatprep.subr.bf16.mxu0 %v2668
    %2875 = vmatpush1.bf16.msra.mxu0 %v2667
    %2876 = vmatprep.subr.bf16.mxu0 %v2672
    %2877 = vmatpush1.bf16.msra.mxu0 %v2671
    %2878 = vmatprep.subr.bf16.mxu0 %v2676
    %2879 = vmatpush1.bf16.msra.mxu0 %v2675
    %2880 = vmatprep.mubr.bf16.mxu0 %v2016
    %2881 = vmatmul.mubr.bf16.gmra.mrb[0].mxu0 %v2015
    %v2882 = vpop.f32.mrb[0].mxu0
    %v2883 = vadd.f32 %v2842, %v2882
    %v2884 = vpop.f32.mrb[0].mxu0
    %v2885 = vadd.f32 %v2844, %v2884
    %v2886 = vpop.f32.mrb[0].mxu0
    %v2887 = vpop.f32.mrb[0].mxu0
    %2888 = vdwg.mxu0
    %2889 = vmatprep.subr.bf16.mxu0 %v2554
    %2890 = vmatpush1.bf16.msra.mxu0 %v2553
    %2891 = vmatprep.subr.bf16.mxu0 %v2558
    %2892 = vmatpush1.bf16.msra.mxu0 %v2557
    %2893 = vmatprep.subr.bf16.mxu0 %v2562
    %2894 = vmatpush1.bf16.msra.mxu0 %v2561
    %2895 = vmatprep.subr.bf16.mxu0 %v2566
    %2896 = vmatpush1.bf16.msra.mxu0 %v2565
    %2897 = vmatprep.subr.bf16.mxu0 %v2570
    %2898 = vmatpush1.bf16.msra.mxu0 %v2569
    %2899 = vmatprep.subr.bf16.mxu0 %v2574
    %2900 = vmatpush1.bf16.msra.mxu0 %v2573
    %2901 = vmatprep.subr.bf16.mxu0 %v2578
    %2902 = vmatpush1.bf16.msra.mxu0 %v2577
    %2903 = vmatprep.subr.bf16.mxu0 %v2582
    %2904 = vmatpush1.bf16.msra.mxu0 %v2581
    %2905 = vmatprep.subr.bf16.mxu0 %v2586
    %2906 = vmatpush1.bf16.msra.mxu0 %v2585
    %2907 = vmatprep.subr.bf16.mxu0 %v2590
    %2908 = vmatpush1.bf16.msra.mxu0 %v2589
    %2909 = vmatprep.subr.bf16.mxu0 %v2594
    %2910 = vmatpush1.bf16.msra.mxu0 %v2593
    %2911 = vmatprep.subr.bf16.mxu0 %v2598
    %2912 = vmatpush1.bf16.msra.mxu0 %v2597
    %2913 = vmatprep.subr.bf16.mxu0 %v2602
    %2914 = vmatpush1.bf16.msra.mxu0 %v2601
    %2915 = vmatprep.subr.bf16.mxu0 %v2606
    %2916 = vmatpush1.bf16.msra.mxu0 %v2605
    %2917 = vmatprep.subr.bf16.mxu0 %v2610
    %2918 = vmatpush1.bf16.msra.mxu0 %v2609
    %2919 = vmatprep.subr.bf16.mxu0 %v2614
    %2920 = vmatpush1.bf16.msra.mxu0 %v2613
    %2921 = vmatprep.mubr.bf16.mxu0 %v2014
    %2922 = vmatmul.mubr.bf16.gmra.mrb[0].mxu0 %v2013
    %v2923 = vpop.f32.mrb[0].mxu0
    %v2924 = vadd.f32 %v2158, %v2923
    %v2925 = vpop.f32.mrb[0].mxu0
    %v2926 = vadd.f32 %v2162, %v2925
    %v2927 = vpop.f32.mrb[0].mxu0
    %v2928 = vpop.f32.mrb[0].mxu0
    %2929 = vdwg.mxu0
    %2930 = vmatprep.subr.bf16.mxu0 %v2618
    %2931 = vmatpush1.bf16.msra.mxu0 %v2617
    %2932 = vmatprep.subr.bf16.mxu0 %v2622
    %2933 = vmatpush1.bf16.msra.mxu0 %v2621
    %2934 = vmatprep.subr.bf16.mxu0 %v2626
    %2935 = vmatpush1.bf16.msra.mxu0 %v2625
    %2936 = vmatprep.subr.bf16.mxu0 %v2630
    %2937 = vmatpush1.bf16.msra.mxu0 %v2629
    %2938 = vmatprep.subr.bf16.mxu0 %v2634
    %2939 = vmatpush1.bf16.msra.mxu0 %v2633
    %2940 = vmatprep.subr.bf16.mxu0 %v2638
    %2941 = vmatpush1.bf16.msra.mxu0 %v2637
    %2942 = vmatprep.subr.bf16.mxu0 %v2642
    %2943 = vmatpush1.bf16.msra.mxu0 %v2641
    %2944 = vmatprep.subr.bf16.mxu0 %v2646
    %2945 = vmatpush1.bf16.msra.mxu0 %v2645
    %2946 = vmatprep.subr.bf16.mxu0 %v2650
    %2947 = vmatpush1.bf16.msra.mxu0 %v2649
    %2948 = vmatprep.subr.bf16.mxu0 %v2654
    %2949 = vmatpush1.bf16.msra.mxu0 %v2653
    %2950 = vmatprep.subr.bf16.mxu0 %v2658
    %2951 = vmatpush1.bf16.msra.mxu0 %v2657
    %2952 = vmatprep.subr.bf16.mxu0 %v2662
    %2953 = vmatpush1.bf16.msra.mxu0 %v2661
    %2954 = vmatprep.subr.bf16.mxu0 %v2666
    %2955 = vmatpush1.bf16.msra.mxu0 %v2665
    %2956 = vmatprep.subr.bf16.mxu0 %v2670
    %2957 = vmatpush1.bf16.msra.mxu0 %v2669
    %2958 = vmatprep.subr.bf16.mxu0 %v2674
    %2959 = vmatpush1.bf16.msra.mxu0 %v2673
    %2960 = vmatprep.subr.bf16.mxu0 %v2678
    %2961 = vmatpush1.bf16.msra.mxu0 %v2677
    %2962 = vmatprep.mubr.bf16.mxu0 %v2016
    %2963 = vmatmul.mubr.bf16.gmra.mrb[0].mxu0 %v2015
    %v2964 = vpop.f32.mrb[0].mxu0
    %v2965 = vadd.f32 %v2924, %v2964
    %v2966 = vpop.f32.mrb[0].mxu0
    %v2967 = vadd.f32 %v2926, %v2966
    %v2968 = vpop.f32.mrb[0].mxu0
    %v2969 = vpop.f32.mrb[0].mxu0
    %2970 = vdwg.mxu0
    %v2971 = vmax.f32 %v2883, 0.0
    %v2972 = vmax.f32 %v2885, 0.0
    %v2973 = vmax.f32 %v2965, 0.0
    %v2974 = vmax.f32 %v2967, 0.0
    %v2975 = vpack.c.bf16 %v2971, %v2971
    %v2976 = vpack.c.bf16 %v2972, %v2972
    %v2977 = vpack.c.bf16 %v2973, %v2973
    %v2978 = vpack.c.bf16 %v2974, %v2974
    %v2979 = vld [vmem:[#allocation6] sm:$0xff]
    %v2980 = vld [vmem:[#allocation6 + $0x8] sm:$0xff]
    %v2981 = vld [vmem:[#allocation6 + $0x10] sm:$0xff]
    %v2982 = vld [vmem:[#allocation6 + $0x18] sm:$0xff]
    %v2983 = vld [vmem:[#allocation6 + $0x20] sm:$0xff]
    %v2984 = vld [vmem:[#allocation6 + $0x28] sm:$0xff]
    %v2985 = vld [vmem:[#allocation6 + $0x30] sm:$0xff]
    %v2986 = vld [vmem:[#allocation6 + $0x38] sm:$0xff]
    %v2987 = vld [vmem:[#allocation6 + $0x40] sm:$0xff]
    %v2988 = vld [vmem:[#allocation6 + $0x48] sm:$0xff]
    %v2989 = vld [vmem:[#allocation6 + $0x50] sm:$0xff]
    %v2990 = vld [vmem:[#allocation6 + $0x58] sm:$0xff]
    %v2991 = vld [vmem:[#allocation6 + $0x60] sm:$0xff]
    %v2992 = vld [vmem:[#allocation6 + $0x68] sm:$0xff]
    %v2993 = vld [vmem:[#allocation6 + $0x70] sm:$0xff]
    %v2994 = vld [vmem:[#allocation6 + $0x78] sm:$0xff]
    %v2995 = vld [vmem:[#allocation6 + $0x80] sm:$0xff]
    %v2996 = vld [vmem:[#allocation6 + $0x88] sm:$0xff]
    %v2997 = vld [vmem:[#allocation6 + $0x90] sm:$0xff]
    %v2998 = vld [vmem:[#allocation6 + $0x98] sm:$0xff]
    %v2999 = vld [vmem:[#allocation6 + $0xa0] sm:$0xff]
    %v3000 = vld [vmem:[#allocation6 + $0xa8] sm:$0xff]
    %v3001 = vld [vmem:[#allocation6 + $0xb0] sm:$0xff]
    %v3002 = vld [vmem:[#allocation6 + $0xb8] sm:$0xff]
    %v3003 = vld [vmem:[#allocation6 + $0xc0] sm:$0xff]
    %v3004 = vld [vmem:[#allocation6 + $0xc8] sm:$0xff]
    %v3005 = vld [vmem:[#allocation6 + $0xd0] sm:$0xff]
    %v3006 = vld [vmem:[#allocation6 + $0xd8] sm:$0xff]
    %v3007 = vld [vmem:[#allocation6 + $0xe0] sm:$0xff]
    %v3008 = vld [vmem:[#allocation6 + $0xe8] sm:$0xff]
    %v3009 = vld [vmem:[#allocation6 + $0xf0] sm:$0xff]
    %v3010 = vld [vmem:[#allocation6 + $0xf8] sm:$0xff]
    %v3011 = vld [vmem:[#allocation6 + $0x100] sm:$0xff]
    %v3012 = vld [vmem:[#allocation6 + $0x108] sm:$0xff]
    %v3013 = vld [vmem:[#allocation6 + $0x110] sm:$0xff]
    %v3014 = vld [vmem:[#allocation6 + $0x118] sm:$0xff]
    %v3015 = vld [vmem:[#allocation6 + $0x120] sm:$0xff]
    %v3016 = vld [vmem:[#allocation6 + $0x128] sm:$0xff]
    %v3017 = vld [vmem:[#allocation6 + $0x130] sm:$0xff]
    %v3018 = vld [vmem:[#allocation6 + $0x138] sm:$0xff]
    %v3019 = vld [vmem:[#allocation6 + $0x140] sm:$0xff]
    %v3020 = vld [vmem:[#allocation6 + $0x148] sm:$0xff]
    %v3021 = vld [vmem:[#allocation6 + $0x150] sm:$0xff]
    %v3022 = vld [vmem:[#allocation6 + $0x158] sm:$0xff]
    %v3023 = vld [vmem:[#allocation6 + $0x160] sm:$0xff]
    %v3024 = vld [vmem:[#allocation6 + $0x168] sm:$0xff]
    %v3025 = vld [vmem:[#allocation6 + $0x170] sm:$0xff]
    %v3026 = vld [vmem:[#allocation6 + $0x178] sm:$0xff]
    %v3027 = vld [vmem:[#allocation6 + $0x180] sm:$0xff]
    %v3028 = vld [vmem:[#allocation6 + $0x188] sm:$0xff]
    %v3029 = vld [vmem:[#allocation6 + $0x190] sm:$0xff]
    %v3030 = vld [vmem:[#allocation6 + $0x198] sm:$0xff]
    %v3031 = vld [vmem:[#allocation6 + $0x1a0] sm:$0xff]
    %v3032 = vld [vmem:[#allocation6 + $0x1a8] sm:$0xff]
    %v3033 = vld [vmem:[#allocation6 + $0x1b0] sm:$0xff]
    %v3034 = vld [vmem:[#allocation6 + $0x1b8] sm:$0xff]
    %v3035 = vld [vmem:[#allocation6 + $0x1c0] sm:$0xff]
    %v3036 = vld [vmem:[#allocation6 + $0x1c8] sm:$0xff]
    %v3037 = vld [vmem:[#allocation6 + $0x1d0] sm:$0xff]
    %v3038 = vld [vmem:[#allocation6 + $0x1d8] sm:$0xff]
    %v3039 = vld [vmem:[#allocation6 + $0x1e0] sm:$0xff]
    %v3040 = vld [vmem:[#allocation6 + $0x1e8] sm:$0xff]
    %v3041 = vld [vmem:[#allocation6 + $0x1f0] sm:$0xff]
    %v3042 = vld [vmem:[#allocation6 + $0x1f8] sm:$0xff]
    %v3043 = vld [vmem:[#allocation6 + $0x200] sm:$0xff]
    %v3044 = vld [vmem:[#allocation6 + $0x208] sm:$0xff]
    %v3045 = vld [vmem:[#allocation6 + $0x210] sm:$0xff]
    %v3046 = vld [vmem:[#allocation6 + $0x218] sm:$0xff]
    %v3047 = vld [vmem:[#allocation6 + $0x220] sm:$0xff]
    %v3048 = vld [vmem:[#allocation6 + $0x228] sm:$0xff]
    %v3049 = vld [vmem:[#allocation6 + $0x230] sm:$0xff]
    %v3050 = vld [vmem:[#allocation6 + $0x238] sm:$0xff]
    %v3051 = vld [vmem:[#allocation6 + $0x240] sm:$0xff]
    %v3052 = vld [vmem:[#allocation6 + $0x248] sm:$0xff]
    %v3053 = vld [vmem:[#allocation6 + $0x250] sm:$0xff]
    %v3054 = vld [vmem:[#allocation6 + $0x258] sm:$0xff]
    %v3055 = vld [vmem:[#allocation6 + $0x260] sm:$0xff]
    %v3056 = vld [vmem:[#allocation6 + $0x268] sm:$0xff]
    %v3057 = vld [vmem:[#allocation6 + $0x270] sm:$0xff]
    %v3058 = vld [vmem:[#allocation6 + $0x278] sm:$0xff]
    %v3059 = vld [vmem:[#allocation6 + $0x280] sm:$0xff]
    %v3060 = vld [vmem:[#allocation6 + $0x288] sm:$0xff]
    %v3061 = vld [vmem:[#allocation6 + $0x290] sm:$0xff]
    %v3062 = vld [vmem:[#allocation6 + $0x298] sm:$0xff]
    %v3063 = vld [vmem:[#allocation6 + $0x2a0] sm:$0xff]
    %v3064 = vld [vmem:[#allocation6 + $0x2a8] sm:$0xff]
    %v3065 = vld [vmem:[#allocation6 + $0x2b0] sm:$0xff]
    %v3066 = vld [vmem:[#allocation6 + $0x2b8] sm:$0xff]
    %v3067 = vld [vmem:[#allocation6 + $0x2c0] sm:$0xff]
    %v3068 = vld [vmem:[#allocation6 + $0x2c8] sm:$0xff]
    %v3069 = vld [vmem:[#allocation6 + $0x2d0] sm:$0xff]
    %v3070 = vld [vmem:[#allocation6 + $0x2d8] sm:$0xff]
    %v3071 = vld [vmem:[#allocation6 + $0x2e0] sm:$0xff]
    %v3072 = vld [vmem:[#allocation6 + $0x2e8] sm:$0xff]
    %v3073 = vld [vmem:[#allocation6 + $0x2f0] sm:$0xff]
    %v3074 = vld [vmem:[#allocation6 + $0x2f8] sm:$0xff]
    %v3075 = vld [vmem:[#allocation6 + $0x300] sm:$0xff]
    %v3076 = vld [vmem:[#allocation6 + $0x308] sm:$0xff]
    %v3077 = vld [vmem:[#allocation6 + $0x310] sm:$0xff]
    %v3078 = vld [vmem:[#allocation6 + $0x318] sm:$0xff]
    %v3079 = vld [vmem:[#allocation6 + $0x320] sm:$0xff]
    %v3080 = vld [vmem:[#allocation6 + $0x328] sm:$0xff]
    %v3081 = vld [vmem:[#allocation6 + $0x330] sm:$0xff]
    %v3082 = vld [vmem:[#allocation6 + $0x338] sm:$0xff]
    %v3083 = vld [vmem:[#allocation6 + $0x340] sm:$0xff]
    %v3084 = vld [vmem:[#allocation6 + $0x348] sm:$0xff]
    %v3085 = vld [vmem:[#allocation6 + $0x350] sm:$0xff]
    %v3086 = vld [vmem:[#allocation6 + $0x358] sm:$0xff]
    %v3087 = vld [vmem:[#allocation6 + $0x360] sm:$0xff]
    %v3088 = vld [vmem:[#allocation6 + $0x368] sm:$0xff]
    %v3089 = vld [vmem:[#allocation6 + $0x370] sm:$0xff]
    %v3090 = vld [vmem:[#allocation6 + $0x378] sm:$0xff]
    %v3091 = vld [vmem:[#allocation6 + $0x380] sm:$0xff]
    %v3092 = vld [vmem:[#allocation6 + $0x388] sm:$0xff]
    %v3093 = vld [vmem:[#allocation6 + $0x390] sm:$0xff]
    %v3094 = vld [vmem:[#allocation6 + $0x398] sm:$0xff]
    %v3095 = vld [vmem:[#allocation6 + $0x3a0] sm:$0xff]
    %v3096 = vld [vmem:[#allocation6 + $0x3a8] sm:$0xff]
    %v3097 = vld [vmem:[#allocation6 + $0x3b0] sm:$0xff]
    %v3098 = vld [vmem:[#allocation6 + $0x3b8] sm:$0xff]
    %v3099 = vld [vmem:[#allocation6 + $0x3c0] sm:$0xff]
    %v3100 = vld [vmem:[#allocation6 + $0x3c8] sm:$0xff]
    %v3101 = vld [vmem:[#allocation6 + $0x3d0] sm:$0xff]
    %v3102 = vld [vmem:[#allocation6 + $0x3d8] sm:$0xff]
    %v3103 = vld [vmem:[#allocation6 + $0x3e0] sm:$0xff]
    %v3104 = vld [vmem:[#allocation6 + $0x3e8] sm:$0xff]
    %v3105 = vld [vmem:[#allocation6 + $0x3f0] sm:$0xff]
    %v3106 = vld [vmem:[#allocation6 + $0x3f8] sm:$0xff]
    %v3107 = vld [vmem:[#allocation7] sm:$0xf]
    %v3109 = vlaneseq
    %v3110 = vshrl.u32 %v3109, 7
    %v3111 = vsub.s32 0, %v3110
    %v3112 = vrot.slane %v3107, %v3111
    %v3113 = vlaneseq
    %v3114 = vshrl.u32 %v3113, 7
    %v3115 = vsub.s32 1, %v3114
    %v3116 = vrot.slane %v3107, %v3115
    %v3117 = vlaneseq
    %v3118 = vshrl.u32 %v3117, 7
    %v3119 = vsub.s32 2, %v3118
    %v3120 = vrot.slane %v3107, %v3119
    %v3121 = vlaneseq
    %v3122 = vshrl.u32 %v3121, 7
    %v3123 = vsub.s32 3, %v3122
    %v3124 = vrot.slane %v3107, %v3123
    %v3257 = vunpack.c.l.b16 %v2979
    %v3258 = vunpack.c.h.b16 %v2979
    %v3259 = vunpack.c.l.b16 %v2980
    %v3260 = vunpack.c.h.b16 %v2980
    %v3261 = vunpack.c.l.b16 %v2981
    %v3262 = vunpack.c.h.b16 %v2981
    %v3263 = vunpack.c.l.b16 %v2982
    %v3264 = vunpack.c.h.b16 %v2982
    %v3265 = vunpack.c.l.b16 %v2983
    %v3266 = vunpack.c.h.b16 %v2983
    %v3267 = vunpack.c.l.b16 %v2984
    %v3268 = vunpack.c.h.b16 %v2984
    %v3269 = vunpack.c.l.b16 %v2985
    %v3270 = vunpack.c.h.b16 %v2985
    %v3271 = vunpack.c.l.b16 %v2986
    %v3272 = vunpack.c.h.b16 %v2986
    %v3273 = vunpack.c.l.b16 %v2987
    %v3274 = vunpack.c.h.b16 %v2987
    %v3275 = vunpack.c.l.b16 %v2988
    %v3276 = vunpack.c.h.b16 %v2988
    %v3277 = vunpack.c.l.b16 %v2989
    %v3278 = vunpack.c.h.b16 %v2989
    %v3279 = vunpack.c.l.b16 %v2990
    %v3280 = vunpack.c.h.b16 %v2990
    %v3281 = vunpack.c.l.b16 %v2991
    %v3282 = vunpack.c.h.b16 %v2991
    %v3283 = vunpack.c.l.b16 %v2992
    %v3284 = vunpack.c.h.b16 %v2992
    %v3285 = vunpack.c.l.b16 %v2993
    %v3286 = vunpack.c.h.b16 %v2993
    %v3287 = vunpack.c.l.b16 %v2994
    %v3288 = vunpack.c.h.b16 %v2994
    %v3289 = vunpack.c.l.b16 %v2995
    %v3290 = vunpack.c.h.b16 %v2995
    %v3291 = vunpack.c.l.b16 %v2996
    %v3292 = vunpack.c.h.b16 %v2996
    %v3293 = vunpack.c.l.b16 %v2997
    %v3294 = vunpack.c.h.b16 %v2997
    %v3295 = vunpack.c.l.b16 %v2998
    %v3296 = vunpack.c.h.b16 %v2998
    %v3297 = vunpack.c.l.b16 %v2999
    %v3298 = vunpack.c.h.b16 %v2999
    %v3299 = vunpack.c.l.b16 %v3000
    %v3300 = vunpack.c.h.b16 %v3000
    %v3301 = vunpack.c.l.b16 %v3001
    %v3302 = vunpack.c.h.b16 %v3001
    %v3303 = vunpack.c.l.b16 %v3002
    %v3304 = vunpack.c.h.b16 %v3002
    %v3305 = vunpack.c.l.b16 %v3003
    %v3306 = vunpack.c.h.b16 %v3003
    %v3307 = vunpack.c.l.b16 %v3004
    %v3308 = vunpack.c.h.b16 %v3004
    %v3309 = vunpack.c.l.b16 %v3005
    %v3310 = vunpack.c.h.b16 %v3005
    %v3311 = vunpack.c.l.b16 %v3006
    %v3312 = vunpack.c.h.b16 %v3006
    %v3313 = vunpack.c.l.b16 %v3007
    %v3314 = vunpack.c.h.b16 %v3007
    %v3315 = vunpack.c.l.b16 %v3008
    %v3316 = vunpack.c.h.b16 %v3008
    %v3317 = vunpack.c.l.b16 %v3009
    %v3318 = vunpack.c.h.b16 %v3009
    %v3319 = vunpack.c.l.b16 %v3010
    %v3320 = vunpack.c.h.b16 %v3010
    %v3321 = vunpack.c.l.b16 %v3011
    %v3322 = vunpack.c.h.b16 %v3011
    %v3323 = vunpack.c.l.b16 %v3012
    %v3324 = vunpack.c.h.b16 %v3012
    %v3325 = vunpack.c.l.b16 %v3013
    %v3326 = vunpack.c.h.b16 %v3013
    %v3327 = vunpack.c.l.b16 %v3014
    %v3328 = vunpack.c.h.b16 %v3014
    %v3329 = vunpack.c.l.b16 %v3015
    %v3330 = vunpack.c.h.b16 %v3015
    %v3331 = vunpack.c.l.b16 %v3016
    %v3332 = vunpack.c.h.b16 %v3016
    %v3333 = vunpack.c.l.b16 %v3017
    %v3334 = vunpack.c.h.b16 %v3017
    %v3335 = vunpack.c.l.b16 %v3018
    %v3336 = vunpack.c.h.b16 %v3018
    %v3337 = vunpack.c.l.b16 %v3019
    %v3338 = vunpack.c.h.b16 %v3019
    %v3339 = vunpack.c.l.b16 %v3020
    %v3340 = vunpack.c.h.b16 %v3020
    %v3341 = vunpack.c.l.b16 %v3021
    %v3342 = vunpack.c.h.b16 %v3021
    %v3343 = vunpack.c.l.b16 %v3022
    %v3344 = vunpack.c.h.b16 %v3022
    %v3345 = vunpack.c.l.b16 %v3023
    %v3346 = vunpack.c.h.b16 %v3023
    %v3347 = vunpack.c.l.b16 %v3024
    %v3348 = vunpack.c.h.b16 %v3024
    %v3349 = vunpack.c.l.b16 %v3025
    %v3350 = vunpack.c.h.b16 %v3025
    %v3351 = vunpack.c.l.b16 %v3026
    %v3352 = vunpack.c.h.b16 %v3026
    %v3353 = vunpack.c.l.b16 %v3027
    %v3354 = vunpack.c.h.b16 %v3027
    %v3355 = vunpack.c.l.b16 %v3028
    %v3356 = vunpack.c.h.b16 %v3028
    %v3357 = vunpack.c.l.b16 %v3029
    %v3358 = vunpack.c.h.b16 %v3029
    %v3359 = vunpack.c.l.b16 %v3030
    %v3360 = vunpack.c.h.b16 %v3030
    %v3361 = vunpack.c.l.b16 %v3031
    %v3362 = vunpack.c.h.b16 %v3031
    %v3363 = vunpack.c.l.b16 %v3032
    %v3364 = vunpack.c.h.b16 %v3032
    %v3365 = vunpack.c.l.b16 %v3033
    %v3366 = vunpack.c.h.b16 %v3033
    %v3367 = vunpack.c.l.b16 %v3034
    %v3368 = vunpack.c.h.b16 %v3034
    %v3369 = vunpack.c.l.b16 %v3035
    %v3370 = vunpack.c.h.b16 %v3035
    %v3371 = vunpack.c.l.b16 %v3036
    %v3372 = vunpack.c.h.b16 %v3036
    %v3373 = vunpack.c.l.b16 %v3037
    %v3374 = vunpack.c.h.b16 %v3037
    %v3375 = vunpack.c.l.b16 %v3038
    %v3376 = vunpack.c.h.b16 %v3038
    %v3377 = vunpack.c.l.b16 %v3039
    %v3378 = vunpack.c.h.b16 %v3039
    %v3379 = vunpack.c.l.b16 %v3040
    %v3380 = vunpack.c.h.b16 %v3040
    %v3381 = vunpack.c.l.b16 %v3041
    %v3382 = vunpack.c.h.b16 %v3041
    %v3383 = vunpack.c.l.b16 %v3042
    %v3384 = vunpack.c.h.b16 %v3042
    %v3385 = vunpack.c.l.b16 %v3043
    %v3386 = vunpack.c.h.b16 %v3043
    %v3387 = vunpack.c.l.b16 %v3044
    %v3388 = vunpack.c.h.b16 %v3044
    %v3389 = vunpack.c.l.b16 %v3045
    %v3390 = vunpack.c.h.b16 %v3045
    %v3391 = vunpack.c.l.b16 %v3046
    %v3392 = vunpack.c.h.b16 %v3046
    %v3393 = vunpack.c.l.b16 %v3047
    %v3394 = vunpack.c.h.b16 %v3047
    %v3395 = vunpack.c.l.b16 %v3048
    %v3396 = vunpack.c.h.b16 %v3048
    %v3397 = vunpack.c.l.b16 %v3049
    %v3398 = vunpack.c.h.b16 %v3049
    %v3399 = vunpack.c.l.b16 %v3050
    %v3400 = vunpack.c.h.b16 %v3050
    %v3401 = vunpack.c.l.b16 %v3051
    %v3402 = vunpack.c.h.b16 %v3051
    %v3403 = vunpack.c.l.b16 %v3052
    %v3404 = vunpack.c.h.b16 %v3052
    %v3405 = vunpack.c.l.b16 %v3053
    %v3406 = vunpack.c.h.b16 %v3053
    %v3407 = vunpack.c.l.b16 %v3054
    %v3408 = vunpack.c.h.b16 %v3054
    %v3409 = vunpack.c.l.b16 %v3055
    %v3410 = vunpack.c.h.b16 %v3055
    %v3411 = vunpack.c.l.b16 %v3056
    %v3412 = vunpack.c.h.b16 %v3056
    %v3413 = vunpack.c.l.b16 %v3057
    %v3414 = vunpack.c.h.b16 %v3057
    %v3415 = vunpack.c.l.b16 %v3058
    %v3416 = vunpack.c.h.b16 %v3058
    %v3417 = vunpack.c.l.b16 %v3059
    %v3418 = vunpack.c.h.b16 %v3059
    %v3419 = vunpack.c.l.b16 %v3060
    %v3420 = vunpack.c.h.b16 %v3060
    %v3421 = vunpack.c.l.b16 %v3061
    %v3422 = vunpack.c.h.b16 %v3061
    %v3423 = vunpack.c.l.b16 %v3062
    %v3424 = vunpack.c.h.b16 %v3062
    %v3425 = vunpack.c.l.b16 %v3063
    %v3426 = vunpack.c.h.b16 %v3063
    %v3427 = vunpack.c.l.b16 %v3064
    %v3428 = vunpack.c.h.b16 %v3064
    %v3429 = vunpack.c.l.b16 %v3065
    %v3430 = vunpack.c.h.b16 %v3065
    %v3431 = vunpack.c.l.b16 %v3066
    %v3432 = vunpack.c.h.b16 %v3066
    %v3433 = vunpack.c.l.b16 %v3067
    %v3434 = vunpack.c.h.b16 %v3067
    %v3435 = vunpack.c.l.b16 %v3068
    %v3436 = vunpack.c.h.b16 %v3068
    %v3437 = vunpack.c.l.b16 %v3069
    %v3438 = vunpack.c.h.b16 %v3069
    %v3439 = vunpack.c.l.b16 %v3070
    %v3440 = vunpack.c.h.b16 %v3070
    %v3441 = vunpack.c.l.b16 %v3071
    %v3442 = vunpack.c.h.b16 %v3071
    %v3443 = vunpack.c.l.b16 %v3072
    %v3444 = vunpack.c.h.b16 %v3072
    %v3445 = vunpack.c.l.b16 %v3073
    %v3446 = vunpack.c.h.b16 %v3073
    %v3447 = vunpack.c.l.b16 %v3074
    %v3448 = vunpack.c.h.b16 %v3074
    %v3449 = vunpack.c.l.b16 %v3075
    %v3450 = vunpack.c.h.b16 %v3075
    %v3451 = vunpack.c.l.b16 %v3076
    %v3452 = vunpack.c.h.b16 %v3076
    %v3453 = vunpack.c.l.b16 %v3077
    %v3454 = vunpack.c.h.b16 %v3077
    %v3455 = vunpack.c.l.b16 %v3078
    %v3456 = vunpack.c.h.b16 %v3078
    %v3457 = vunpack.c.l.b16 %v3079
    %v3458 = vunpack.c.h.b16 %v3079
    %v3459 = vunpack.c.l.b16 %v3080
    %v3460 = vunpack.c.h.b16 %v3080
    %v3461 = vunpack.c.l.b16 %v3081
    %v3462 = vunpack.c.h.b16 %v3081
    %v3463 = vunpack.c.l.b16 %v3082
    %v3464 = vunpack.c.h.b16 %v3082
    %v3465 = vunpack.c.l.b16 %v3083
    %v3466 = vunpack.c.h.b16 %v3083
    %v3467 = vunpack.c.l.b16 %v3084
    %v3468 = vunpack.c.h.b16 %v3084
    %v3469 = vunpack.c.l.b16 %v3085
    %v3470 = vunpack.c.h.b16 %v3085
    %v3471 = vunpack.c.l.b16 %v3086
    %v3472 = vunpack.c.h.b16 %v3086
    %v3473 = vunpack.c.l.b16 %v3087
    %v3474 = vunpack.c.h.b16 %v3087
    %v3475 = vunpack.c.l.b16 %v3088
    %v3476 = vunpack.c.h.b16 %v3088
    %v3477 = vunpack.c.l.b16 %v3089
    %v3478 = vunpack.c.h.b16 %v3089
    %v3479 = vunpack.c.l.b16 %v3090
    %v3480 = vunpack.c.h.b16 %v3090
    %v3481 = vunpack.c.l.b16 %v3091
    %v3482 = vunpack.c.h.b16 %v3091
    %v3483 = vunpack.c.l.b16 %v3092
    %v3484 = vunpack.c.h.b16 %v3092
    %v3485 = vunpack.c.l.b16 %v3093
    %v3486 = vunpack.c.h.b16 %v3093
    %v3487 = vunpack.c.l.b16 %v3094
    %v3488 = vunpack.c.h.b16 %v3094
    %v3489 = vunpack.c.l.b16 %v3095
    %v3490 = vunpack.c.h.b16 %v3095
    %v3491 = vunpack.c.l.b16 %v3096
    %v3492 = vunpack.c.h.b16 %v3096
    %v3493 = vunpack.c.l.b16 %v3097
    %v3494 = vunpack.c.h.b16 %v3097
    %v3495 = vunpack.c.l.b16 %v3098
    %v3496 = vunpack.c.h.b16 %v3098
    %v3497 = vunpack.c.l.b16 %v3099
    %v3498 = vunpack.c.h.b16 %v3099
    %v3499 = vunpack.c.l.b16 %v3100
    %v3500 = vunpack.c.h.b16 %v3100
    %v3501 = vunpack.c.l.b16 %v3101
    %v3502 = vunpack.c.h.b16 %v3101
    %v3503 = vunpack.c.l.b16 %v3102
    %v3504 = vunpack.c.h.b16 %v3102
    %v3505 = vunpack.c.l.b16 %v3103
    %v3506 = vunpack.c.h.b16 %v3103
    %v3507 = vunpack.c.l.b16 %v3104
    %v3508 = vunpack.c.h.b16 %v3104
    %v3509 = vunpack.c.l.b16 %v3105
    %v3510 = vunpack.c.h.b16 %v3105
    %v3511 = vunpack.c.l.b16 %v3106
    %v3512 = vunpack.c.h.b16 %v3106
    %v3513 = vpack.c.b16 %v3261, %v3257
    %v3514 = vpack.c.b16 %v3262, %v3258
    %v3515 = vpack.c.b16 %v3263, %v3259
    %v3516 = vpack.c.b16 %v3264, %v3260
    %v3517 = vpack.c.b16 %v3269, %v3265
    %v3518 = vpack.c.b16 %v3270, %v3266
    %v3519 = vpack.c.b16 %v3271, %v3267
    %v3520 = vpack.c.b16 %v3272, %v3268
    %v3521 = vpack.c.b16 %v3277, %v3273
    %v3522 = vpack.c.b16 %v3278, %v3274
    %v3523 = vpack.c.b16 %v3279, %v3275
    %v3524 = vpack.c.b16 %v3280, %v3276
    %v3525 = vpack.c.b16 %v3285, %v3281
    %v3526 = vpack.c.b16 %v3286, %v3282
    %v3527 = vpack.c.b16 %v3287, %v3283
    %v3528 = vpack.c.b16 %v3288, %v3284
    %v3529 = vpack.c.b16 %v3293, %v3289
    %v3530 = vpack.c.b16 %v3294, %v3290
    %v3531 = vpack.c.b16 %v3295, %v3291
    %v3532 = vpack.c.b16 %v3296, %v3292
    %v3533 = vpack.c.b16 %v3301, %v3297
    %v3534 = vpack.c.b16 %v3302, %v3298
    %v3535 = vpack.c.b16 %v3303, %v3299
    %v3536 = vpack.c.b16 %v3304, %v3300
    %v3537 = vpack.c.b16 %v3309, %v3305
    %v3538 = vpack.c.b16 %v3310, %v3306
    %v3539 = vpack.c.b16 %v3311, %v3307
    %v3540 = vpack.c.b16 %v3312, %v3308
    %v3541 = vpack.c.b16 %v3317, %v3313
    %v3542 = vpack.c.b16 %v3318, %v3314
    %v3543 = vpack.c.b16 %v3319, %v3315
    %v3544 = vpack.c.b16 %v3320, %v3316
    %v3545 = vpack.c.b16 %v3325, %v3321
    %v3546 = vpack.c.b16 %v3326, %v3322
    %v3547 = vpack.c.b16 %v3327, %v3323
    %v3548 = vpack.c.b16 %v3328, %v3324
    %v3549 = vpack.c.b16 %v3333, %v3329
    %v3550 = vpack.c.b16 %v3334, %v3330
    %v3551 = vpack.c.b16 %v3335, %v3331
    %v3552 = vpack.c.b16 %v3336, %v3332
    %v3553 = vpack.c.b16 %v3341, %v3337
    %v3554 = vpack.c.b16 %v3342, %v3338
    %v3555 = vpack.c.b16 %v3343, %v3339
    %v3556 = vpack.c.b16 %v3344, %v3340
    %v3557 = vpack.c.b16 %v3349, %v3345
    %v3558 = vpack.c.b16 %v3350, %v3346
    %v3559 = vpack.c.b16 %v3351, %v3347
    %v3560 = vpack.c.b16 %v3352, %v3348
    %v3561 = vpack.c.b16 %v3357, %v3353
    %v3562 = vpack.c.b16 %v3358, %v3354
    %v3563 = vpack.c.b16 %v3359, %v3355
    %v3564 = vpack.c.b16 %v3360, %v3356
    %v3565 = vpack.c.b16 %v3365, %v3361
    %v3566 = vpack.c.b16 %v3366, %v3362
    %v3567 = vpack.c.b16 %v3367, %v3363
    %v3568 = vpack.c.b16 %v3368, %v3364
    %v3569 = vpack.c.b16 %v3373, %v3369
    %v3570 = vpack.c.b16 %v3374, %v3370
    %v3571 = vpack.c.b16 %v3375, %v3371
    %v3572 = vpack.c.b16 %v3376, %v3372
    %v3573 = vpack.c.b16 %v3381, %v3377
    %v3574 = vpack.c.b16 %v3382, %v3378
    %v3575 = vpack.c.b16 %v3383, %v3379
    %v3576 = vpack.c.b16 %v3384, %v3380
    %v3577 = vpack.c.b16 %v3389, %v3385
    %v3578 = vpack.c.b16 %v3390, %v3386
    %v3579 = vpack.c.b16 %v3391, %v3387
    %v3580 = vpack.c.b16 %v3392, %v3388
    %v3581 = vpack.c.b16 %v3397, %v3393
    %v3582 = vpack.c.b16 %v3398, %v3394
    %v3583 = vpack.c.b16 %v3399, %v3395
    %v3584 = vpack.c.b16 %v3400, %v3396
    %v3585 = vpack.c.b16 %v3405, %v3401
    %v3586 = vpack.c.b16 %v3406, %v3402
    %v3587 = vpack.c.b16 %v3407, %v3403
    %v3588 = vpack.c.b16 %v3408, %v3404
    %v3589 = vpack.c.b16 %v3413, %v3409
    %v3590 = vpack.c.b16 %v3414, %v3410
    %v3591 = vpack.c.b16 %v3415, %v3411
    %v3592 = vpack.c.b16 %v3416, %v3412
    %v3593 = vpack.c.b16 %v3421, %v3417
    %v3594 = vpack.c.b16 %v3422, %v3418
    %v3595 = vpack.c.b16 %v3423, %v3419
    %v3596 = vpack.c.b16 %v3424, %v3420
    %v3597 = vpack.c.b16 %v3429, %v3425
    %v3598 = vpack.c.b16 %v3430, %v3426
    %v3599 = vpack.c.b16 %v3431, %v3427
    %v3600 = vpack.c.b16 %v3432, %v3428
    %v3601 = vpack.c.b16 %v3437, %v3433
    %v3602 = vpack.c.b16 %v3438, %v3434
    %v3603 = vpack.c.b16 %v3439, %v3435
    %v3604 = vpack.c.b16 %v3440, %v3436
    %v3605 = vpack.c.b16 %v3445, %v3441
    %v3606 = vpack.c.b16 %v3446, %v3442
    %v3607 = vpack.c.b16 %v3447, %v3443
    %v3608 = vpack.c.b16 %v3448, %v3444
    %v3609 = vpack.c.b16 %v3453, %v3449
    %v3610 = vpack.c.b16 %v3454, %v3450
    %v3611 = vpack.c.b16 %v3455, %v3451
    %v3612 = vpack.c.b16 %v3456, %v3452
    %v3613 = vpack.c.b16 %v3461, %v3457
    %v3614 = vpack.c.b16 %v3462, %v3458
    %v3615 = vpack.c.b16 %v3463, %v3459
    %v3616 = vpack.c.b16 %v3464, %v3460
    %v3617 = vpack.c.b16 %v3469, %v3465
    %v3618 = vpack.c.b16 %v3470, %v3466
    %v3619 = vpack.c.b16 %v3471, %v3467
    %v3620 = vpack.c.b16 %v3472, %v3468
    %v3621 = vpack.c.b16 %v3477, %v3473
    %v3622 = vpack.c.b16 %v3478, %v3474
    %v3623 = vpack.c.b16 %v3479, %v3475
    %v3624 = vpack.c.b16 %v3480, %v3476
    %v3625 = vpack.c.b16 %v3485, %v3481
    %v3626 = vpack.c.b16 %v3486, %v3482
    %v3627 = vpack.c.b16 %v3487, %v3483
    %v3628 = vpack.c.b16 %v3488, %v3484
    %v3629 = vpack.c.b16 %v3493, %v3489
    %v3630 = vpack.c.b16 %v3494, %v3490
    %v3631 = vpack.c.b16 %v3495, %v3491
    %v3632 = vpack.c.b16 %v3496, %v3492
    %v3633 = vpack.c.b16 %v3501, %v3497
    %v3634 = vpack.c.b16 %v3502, %v3498
    %v3635 = vpack.c.b16 %v3503, %v3499
    %v3636 = vpack.c.b16 %v3504, %v3500
    %v3637 = vpack.c.b16 %v3509, %v3505
    %v3638 = vpack.c.b16 %v3510, %v3506
    %v3639 = vpack.c.b16 %v3511, %v3507
    %v3640 = vpack.c.b16 %v3512, %v3508
    %3769 = vmatprep.subr.bf16.mxu0 %v3514
    %3770 = vmatpush1.bf16.msra.mxu0 %v3513
    %3771 = vmatprep.subr.bf16.mxu0 %v3518
    %3772 = vmatpush1.bf16.msra.mxu0 %v3517
    %3773 = vmatprep.subr.bf16.mxu0 %v3522
    %3774 = vmatpush1.bf16.msra.mxu0 %v3521
    %3775 = vmatprep.subr.bf16.mxu0 %v3526
    %3776 = vmatpush1.bf16.msra.mxu0 %v3525
    %3777 = vmatprep.subr.bf16.mxu0 %v3530
    %3778 = vmatpush1.bf16.msra.mxu0 %v3529
    %3779 = vmatprep.subr.bf16.mxu0 %v3534
    %3780 = vmatpush1.bf16.msra.mxu0 %v3533
    %3781 = vmatprep.subr.bf16.mxu0 %v3538
    %3782 = vmatpush1.bf16.msra.mxu0 %v3537
    %3783 = vmatprep.subr.bf16.mxu0 %v3542
    %3784 = vmatpush1.bf16.msra.mxu0 %v3541
    %3785 = vmatprep.subr.bf16.mxu0 %v3546
    %3786 = vmatpush1.bf16.msra.mxu0 %v3545
    %3787 = vmatprep.subr.bf16.mxu0 %v3550
    %3788 = vmatpush1.bf16.msra.mxu0 %v3549
    %3789 = vmatprep.subr.bf16.mxu0 %v3554
    %3790 = vmatpush1.bf16.msra.mxu0 %v3553
    %3791 = vmatprep.subr.bf16.mxu0 %v3558
    %3792 = vmatpush1.bf16.msra.mxu0 %v3557
    %3793 = vmatprep.subr.bf16.mxu0 %v3562
    %3794 = vmatpush1.bf16.msra.mxu0 %v3561
    %3795 = vmatprep.subr.bf16.mxu0 %v3566
    %3796 = vmatpush1.bf16.msra.mxu0 %v3565
    %3797 = vmatprep.subr.bf16.mxu0 %v3570
    %3798 = vmatpush1.bf16.msra.mxu0 %v3569
    %3799 = vmatprep.subr.bf16.mxu0 %v3574
    %3800 = vmatpush1.bf16.msra.mxu0 %v3573
    %3801 = vmatprep.mubr.bf16.mxu0 %v2976
    %3802 = vmatmul.mubr.bf16.gmra.mrb[0].mxu0 %v2975
    %v3803 = vpop.f32.mrb[0].mxu0
    %v3804 = vadd.f32 %v3112, %v3803
    %v3805 = vpop.f32.mrb[0].mxu0
    %v3806 = vadd.f32 %v3116, %v3805
    %v3807 = vpop.f32.mrb[0].mxu0
    %v3808 = vpop.f32.mrb[0].mxu0
    %3809 = vdwg.mxu0
    %3810 = vmatprep.subr.bf16.mxu0 %v3578
    %3811 = vmatpush1.bf16.msra.mxu0 %v3577
    %3812 = vmatprep.subr.bf16.mxu0 %v3582
    %3813 = vmatpush1.bf16.msra.mxu0 %v3581
    %3814 = vmatprep.subr.bf16.mxu0 %v3586
    %3815 = vmatpush1.bf16.msra.mxu0 %v3585
    %3816 = vmatprep.subr.bf16.mxu0 %v3590
    %3817 = vmatpush1.bf16.msra.mxu0 %v3589
    %3818 = vmatprep.subr.bf16.mxu0 %v3594
    %3819 = vmatpush1.bf16.msra.mxu0 %v3593
    %3820 = vmatprep.subr.bf16.mxu0 %v3598
    %3821 = vmatpush1.bf16.msra.mxu0 %v3597
    %3822 = vmatprep.subr.bf16.mxu0 %v3602
    %3823 = vmatpush1.bf16.msra.mxu0 %v3601
    %3824 = vmatprep.subr.bf16.mxu0 %v3606
    %3825 = vmatpush1.bf16.msra.mxu0 %v3605
    %3826 = vmatprep.subr.bf16.mxu0 %v3610
    %3827 = vmatpush1.bf16.msra.mxu0 %v3609
    %3828 = vmatprep.subr.bf16.mxu0 %v3614
    %3829 = vmatpush1.bf16.msra.mxu0 %v3613
    %3830 = vmatprep.subr.bf16.mxu0 %v3618
    %3831 = vmatpush1.bf16.msra.mxu0 %v3617
    %3832 = vmatprep.subr.bf16.mxu0 %v3622
    %3833 = vmatpush1.bf16.msra.mxu0 %v3621
    %3834 = vmatprep.subr.bf16.mxu0 %v3626
    %3835 = vmatpush1.bf16.msra.mxu0 %v3625
    %3836 = vmatprep.subr.bf16.mxu0 %v3630
    %3837 = vmatpush1.bf16.msra.mxu0 %v3629
    %3838 = vmatprep.subr.bf16.mxu0 %v3634
    %3839 = vmatpush1.bf16.msra.mxu0 %v3633
    %3840 = vmatprep.subr.bf16.mxu0 %v3638
    %3841 = vmatpush1.bf16.msra.mxu0 %v3637
    %3842 = vmatprep.mubr.bf16.mxu0 %v2978
    %3843 = vmatmul.mubr.bf16.gmra.mrb[0].mxu0 %v2977
    %v3844 = vpop.f32.mrb[0].mxu0
    %v3845 = vadd.f32 %v3804, %v3844
    %v3846 = vpop.f32.mrb[0].mxu0
    %v3847 = vadd.f32 %v3806, %v3846
    %v3848 = vpop.f32.mrb[0].mxu0
    %v3849 = vpop.f32.mrb[0].mxu0
    %3850 = vdwg.mxu0
    %3851 = vmatprep.subr.bf16.mxu0 %v3516
    %3852 = vmatpush1.bf16.msra.mxu0 %v3515
    %3853 = vmatprep.subr.bf16.mxu0 %v3520
    %3854 = vmatpush1.bf16.msra.mxu0 %v3519
    %3855 = vmatprep.subr.bf16.mxu0 %v3524
    %3856 = vmatpush1.bf16.msra.mxu0 %v3523
    %3857 = vmatprep.subr.bf16.mxu0 %v3528
    %3858 = vmatpush1.bf16.msra.mxu0 %v3527
    %3859 = vmatprep.subr.bf16.mxu0 %v3532
    %3860 = vmatpush1.bf16.msra.mxu0 %v3531
    %3861 = vmatprep.subr.bf16.mxu0 %v3536
    %3862 = vmatpush1.bf16.msra.mxu0 %v3535
    %3863 = vmatprep.subr.bf16.mxu0 %v3540
    %3864 = vmatpush1.bf16.msra.mxu0 %v3539
    %3865 = vmatprep.subr.bf16.mxu0 %v3544
    %3866 = vmatpush1.bf16.msra.mxu0 %v3543
    %3867 = vmatprep.subr.bf16.mxu0 %v3548
    %3868 = vmatpush1.bf16.msra.mxu0 %v3547
    %3869 = vmatprep.subr.bf16.mxu0 %v3552
    %3870 = vmatpush1.bf16.msra.mxu0 %v3551
    %3871 = vmatprep.subr.bf16.mxu0 %v3556
    %3872 = vmatpush1.bf16.msra.mxu0 %v3555
    %3873 = vmatprep.subr.bf16.mxu0 %v3560
    %3874 = vmatpush1.bf16.msra.mxu0 %v3559
    %3875 = vmatprep.subr.bf16.mxu0 %v3564
    %3876 = vmatpush1.bf16.msra.mxu0 %v3563
    %3877 = vmatprep.subr.bf16.mxu0 %v3568
    %3878 = vmatpush1.bf16.msra.mxu0 %v3567
    %3879 = vmatprep.subr.bf16.mxu0 %v3572
    %3880 = vmatpush1.bf16.msra.mxu0 %v3571
    %3881 = vmatprep.subr.bf16.mxu0 %v3576
    %3882 = vmatpush1.bf16.msra.mxu0 %v3575
    %3883 = vmatprep.mubr.bf16.mxu0 %v2976
    %3884 = vmatmul.mubr.bf16.gmra.mrb[0].mxu0 %v2975
    %v3885 = vpop.f32.mrb[0].mxu0
    %v3886 = vadd.f32 %v3120, %v3885
    %v3887 = vpop.f32.mrb[0].mxu0
    %v3888 = vadd.f32 %v3124, %v3887
    %v3889 = vpop.f32.mrb[0].mxu0
    %v3890 = vpop.f32.mrb[0].mxu0
    %3891 = vdwg.mxu0
    %3892 = vmatprep.subr.bf16.mxu0 %v3580
    %3893 = vmatpush1.bf16.msra.mxu0 %v3579
    %3894 = vmatprep.subr.bf16.mxu0 %v3584
    %3895 = vmatpush1.bf16.msra.mxu0 %v3583
    %3896 = vmatprep.subr.bf16.mxu0 %v3588
    %3897 = vmatpush1.bf16.msra.mxu0 %v3587
    %3898 = vmatprep.subr.bf16.mxu0 %v3592
    %3899 = vmatpush1.bf16.msra.mxu0 %v3591
    %3900 = vmatprep.subr.bf16.mxu0 %v3596
    %3901 = vmatpush1.bf16.msra.mxu0 %v3595
    %3902 = vmatprep.subr.bf16.mxu0 %v3600
    %3903 = vmatpush1.bf16.msra.mxu0 %v3599
    %3904 = vmatprep.subr.bf16.mxu0 %v3604
    %3905 = vmatpush1.bf16.msra.mxu0 %v3603
    %3906 = vmatprep.subr.bf16.mxu0 %v3608
    %3907 = vmatpush1.bf16.msra.mxu0 %v3607
    %3908 = vmatprep.subr.bf16.mxu0 %v3612
    %3909 = vmatpush1.bf16.msra.mxu0 %v3611
    %3910 = vmatprep.subr.bf16.mxu0 %v3616
    %3911 = vmatpush1.bf16.msra.mxu0 %v3615
    %3912 = vmatprep.subr.bf16.mxu0 %v3620
    %3913 = vmatpush1.bf16.msra.mxu0 %v3619
    %3914 = vmatprep.subr.bf16.mxu0 %v3624
    %3915 = vmatpush1.bf16.msra.mxu0 %v3623
    %3916 = vmatprep.subr.bf16.mxu0 %v3628
    %3917 = vmatpush1.bf16.msra.mxu0 %v3627
    %3918 = vmatprep.subr.bf16.mxu0 %v3632
    %3919 = vmatpush1.bf16.msra.mxu0 %v3631
    %3920 = vmatprep.subr.bf16.mxu0 %v3636
    %3921 = vmatpush1.bf16.msra.mxu0 %v3635
    %3922 = vmatprep.subr.bf16.mxu0 %v3640
    %3923 = vmatpush1.bf16.msra.mxu0 %v3639
    %3924 = vmatprep.mubr.bf16.mxu0 %v2978
    %3925 = vmatmul.mubr.bf16.gmra.mrb[0].mxu0 %v2977
    %v3926 = vpop.f32.mrb[0].mxu0
    %v3927 = vadd.f32 %v3886, %v3926
    %v3928 = vpop.f32.mrb[0].mxu0
    %v3929 = vadd.f32 %v3888, %v3928
    %v3930 = vpop.f32.mrb[0].mxu0
    %v3931 = vpop.f32.mrb[0].mxu0
    %3932 = vdwg.mxu0
    %v3933 = vmax.f32 %v3845, 0.0
    %v3934 = vmax.f32 %v3847, 0.0
    %v3935 = vmax.f32 %v3927, 0.0
    %v3936 = vmax.f32 %v3929, 0.0
    %v3937 = vpack.c.bf16 %v3933, %v3933
    %v3938 = vpack.c.bf16 %v3934, %v3934
    %v3939 = vpack.c.bf16 %v3935, %v3935
    %v3940 = vpack.c.bf16 %v3936, %v3936
    %v3941 = vld [vmem:[%s7] sm:$0xf]
    %v3942 = vld [vmem:[%s7 + $0x4] sm:$0xf]
    %v3943 = vld [vmem:[%s7 + $0x8] sm:$0xf]
    %v3944 = vld [vmem:[%s7 + $0xc] sm:$0xf]
    %v3945 = vld [vmem:[%s7 + $0x10] sm:$0xf]
    %v3946 = vld [vmem:[%s7 + $0x14] sm:$0xf]
    %v3947 = vld [vmem:[%s7 + $0x18] sm:$0xf]
    %v3948 = vld [vmem:[%s7 + $0x1c] sm:$0xf]
    %v3949 = vld [vmem:[%s7 + $0x20] sm:$0xf]
    %v3950 = vld [vmem:[%s7 + $0x24] sm:$0xf]
    %v3951 = vld [vmem:[%s7 + $0x28] sm:$0xf]
    %v3952 = vld [vmem:[%s7 + $0x2c] sm:$0xf]
    %v3953 = vld [vmem:[%s7 + $0x30] sm:$0xf]
    %v3954 = vld [vmem:[%s7 + $0x34] sm:$0xf]
    %v3955 = vld [vmem:[%s7 + $0x38] sm:$0xf]
    %v3956 = vld [vmem:[%s7 + $0x3c] sm:$0xf]
    %v3957 = vld [vmem:[%s7 + $0x40] sm:$0xf]
    %v3958 = vld [vmem:[%s7 + $0x44] sm:$0xf]
    %v3959 = vld [vmem:[%s7 + $0x48] sm:$0xf]
    %v3960 = vld [vmem:[%s7 + $0x4c] sm:$0xf]
    %v3961 = vld [vmem:[%s7 + $0x50] sm:$0xf]
    %v3962 = vld [vmem:[%s7 + $0x54] sm:$0xf]
    %v3963 = vld [vmem:[%s7 + $0x58] sm:$0xf]
    %v3964 = vld [vmem:[%s7 + $0x5c] sm:$0xf]
    %v3965 = vld [vmem:[%s7 + $0x60] sm:$0xf]
    %v3966 = vld [vmem:[%s7 + $0x64] sm:$0xf]
    %v3967 = vld [vmem:[%s7 + $0x68] sm:$0xf]
    %v3968 = vld [vmem:[%s7 + $0x6c] sm:$0xf]
    %v3969 = vld [vmem:[%s7 + $0x70] sm:$0xf]
    %v3970 = vld [vmem:[%s7 + $0x74] sm:$0xf]
    %v3971 = vld [vmem:[%s7 + $0x78] sm:$0xf]
    %v3972 = vld [vmem:[%s7 + $0x7c] sm:$0xf]
    %v3973 = vld [vmem:[%s7 + $0x80] sm:$0xf]
    %v3974 = vld [vmem:[%s7 + $0x84] sm:$0xf]
    %v3975 = vld [vmem:[%s7 + $0x88] sm:$0xf]
    %v3976 = vld [vmem:[%s7 + $0x8c] sm:$0xf]
    %v3977 = vld [vmem:[%s7 + $0x90] sm:$0xf]
    %v3978 = vld [vmem:[%s7 + $0x94] sm:$0xf]
    %v3979 = vld [vmem:[%s7 + $0x98] sm:$0xf]
    %v3980 = vld [vmem:[%s7 + $0x9c] sm:$0xf]
    %v3981 = vld [vmem:[%s7 + $0xa0] sm:$0xf]
    %v3982 = vld [vmem:[%s7 + $0xa4] sm:$0xf]
    %v3983 = vld [vmem:[%s7 + $0xa8] sm:$0xf]
    %v3984 = vld [vmem:[%s7 + $0xac] sm:$0xf]
    %v3985 = vld [vmem:[%s7 + $0xb0] sm:$0xf]
    %v3986 = vld [vmem:[%s7 + $0xb4] sm:$0xf]
    %v3987 = vld [vmem:[%s7 + $0xb8] sm:$0xf]
    %v3988 = vld [vmem:[%s7 + $0xbc] sm:$0xf]
    %v3989 = vld [vmem:[%s7 + $0xc0] sm:$0xf]
    %v3990 = vld [vmem:[%s7 + $0xc4] sm:$0xf]
    %v3991 = vld [vmem:[%s7 + $0xc8] sm:$0xf]
    %v3992 = vld [vmem:[%s7 + $0xcc] sm:$0xf]
    %v3993 = vld [vmem:[%s7 + $0xd0] sm:$0xf]
    %v3994 = vld [vmem:[%s7 + $0xd4] sm:$0xf]
    %v3995 = vld [vmem:[%s7 + $0xd8] sm:$0xf]
    %v3996 = vld [vmem:[%s7 + $0xdc] sm:$0xf]
    %v3997 = vld [vmem:[%s7 + $0xe0] sm:$0xf]
    %v3998 = vld [vmem:[%s7 + $0xe4] sm:$0xf]
    %v3999 = vld [vmem:[%s7 + $0xe8] sm:$0xf]
    %v4000 = vld [vmem:[%s7 + $0xec] sm:$0xf]
    %v4001 = vld [vmem:[%s7 + $0xf0] sm:$0xf]
    %v4002 = vld [vmem:[%s7 + $0xf4] sm:$0xf]
    %v4003 = vld [vmem:[%s7 + $0xf8] sm:$0xf]
    %v4004 = vld [vmem:[%s7 + $0xfc] sm:$0xf]
    %v4005 = vld [vmem:[%s8] sm:$0x1]
    %v4007 = vlaneseq
    %v4008 = vshrl.u32 %v4007, 7
    %v4009 = vsub.s32 0, %v4008
    %v4010 = vrot.slane %v4005, %v4009
    %v4076 = vunpack.c.l.b16 %v3941
    %v4077 = vunpack.c.l.b16 %v3942
    %v4078 = vunpack.c.l.b16 %v3943
    %v4079 = vunpack.c.l.b16 %v3944
    %v4080 = vunpack.c.l.b16 %v3945
    %v4081 = vunpack.c.l.b16 %v3946
    %v4082 = vunpack.c.l.b16 %v3947
    %v4083 = vunpack.c.l.b16 %v3948
    %v4084 = vunpack.c.l.b16 %v3949
    %v4085 = vunpack.c.l.b16 %v3950
    %v4086 = vunpack.c.l.b16 %v3951
    %v4087 = vunpack.c.l.b16 %v3952
    %v4088 = vunpack.c.l.b16 %v3953
    %v4089 = vunpack.c.l.b16 %v3954
    %v4090 = vunpack.c.l.b16 %v3955
    %v4091 = vunpack.c.l.b16 %v3956
    %v4092 = vunpack.c.l.b16 %v3957
    %v4093 = vunpack.c.l.b16 %v3958
    %v4094 = vunpack.c.l.b16 %v3959
    %v4095 = vunpack.c.l.b16 %v3960
    %v4096 = vunpack.c.l.b16 %v3961
    %v4097 = vunpack.c.l.b16 %v3962
    %v4098 = vunpack.c.l.b16 %v3963
    %v4099 = vunpack.c.l.b16 %v3964
    %v4100 = vunpack.c.l.b16 %v3965
    %v4101 = vunpack.c.l.b16 %v3966
    %v4102 = vunpack.c.l.b16 %v3967
    %v4103 = vunpack.c.l.b16 %v3968
    %v4104 = vunpack.c.l.b16 %v3969
    %v4105 = vunpack.c.l.b16 %v3970
    %v4106 = vunpack.c.l.b16 %v3971
    %v4107 = vunpack.c.l.b16 %v3972
    %v4108 = vunpack.c.l.b16 %v3973
    %v4109 = vunpack.c.l.b16 %v3974
    %v4110 = vunpack.c.l.b16 %v3975
    %v4111 = vunpack.c.l.b16 %v3976
    %v4112 = vunpack.c.l.b16 %v3977
    %v4113 = vunpack.c.l.b16 %v3978
    %v4114 = vunpack.c.l.b16 %v3979
    %v4115 = vunpack.c.l.b16 %v3980
    %v4116 = vunpack.c.l.b16 %v3981
    %v4117 = vunpack.c.l.b16 %v3982
    %v4118 = vunpack.c.l.b16 %v3983
    %v4119 = vunpack.c.l.b16 %v3984
    %v4120 = vunpack.c.l.b16 %v3985
    %v4121 = vunpack.c.l.b16 %v3986
    %v4122 = vunpack.c.l.b16 %v3987
    %v4123 = vunpack.c.l.b16 %v3988
    %v4124 = vunpack.c.l.b16 %v3989
    %v4125 = vunpack.c.l.b16 %v3990
    %v4126 = vunpack.c.l.b16 %v3991
    %v4127 = vunpack.c.l.b16 %v3992
    %v4128 = vunpack.c.l.b16 %v3993
    %v4129 = vunpack.c.l.b16 %v3994
    %v4130 = vunpack.c.l.b16 %v3995
    %v4131 = vunpack.c.l.b16 %v3996
    %v4132 = vunpack.c.l.b16 %v3997
    %v4133 = vunpack.c.l.b16 %v3998
    %v4134 = vunpack.c.l.b16 %v3999
    %v4135 = vunpack.c.l.b16 %v4000
    %v4136 = vunpack.c.l.b16 %v4001
    %v4137 = vunpack.c.l.b16 %v4002
    %v4138 = vunpack.c.l.b16 %v4003
    %v4139 = vunpack.c.l.b16 %v4004
    %v4140 = vpack.c.b16 %v4077, %v4076
    %v4141 = vpack.c.b16 %v4079, %v4078
    %v4142 = vpack.c.b16 %v4081, %v4080
    %v4143 = vpack.c.b16 %v4083, %v4082
    %v4144 = vpack.c.b16 %v4085, %v4084
    %v4145 = vpack.c.b16 %v4087, %v4086
    %v4146 = vpack.c.b16 %v4089, %v4088
    %v4147 = vpack.c.b16 %v4091, %v4090
    %v4148 = vpack.c.b16 %v4093, %v4092
    %v4149 = vpack.c.b16 %v4095, %v4094
    %v4150 = vpack.c.b16 %v4097, %v4096
    %v4151 = vpack.c.b16 %v4099, %v4098
    %v4152 = vpack.c.b16 %v4101, %v4100
    %v4153 = vpack.c.b16 %v4103, %v4102
    %v4154 = vpack.c.b16 %v4105, %v4104
    %v4155 = vpack.c.b16 %v4107, %v4106
    %v4156 = vpack.c.b16 %v4109, %v4108
    %v4157 = vpack.c.b16 %v4111, %v4110
    %v4158 = vpack.c.b16 %v4113, %v4112
    %v4159 = vpack.c.b16 %v4115, %v4114
    %v4160 = vpack.c.b16 %v4117, %v4116
    %v4161 = vpack.c.b16 %v4119, %v4118
    %v4162 = vpack.c.b16 %v4121, %v4120
    %v4163 = vpack.c.b16 %v4123, %v4122
    %v4164 = vpack.c.b16 %v4125, %v4124
    %v4165 = vpack.c.b16 %v4127, %v4126
    %v4166 = vpack.c.b16 %v4129, %v4128
    %v4167 = vpack.c.b16 %v4131, %v4130
    %v4168 = vpack.c.b16 %v4133, %v4132
    %v4169 = vpack.c.b16 %v4135, %v4134
    %v4170 = vpack.c.b16 %v4137, %v4136
    %v4171 = vpack.c.b16 %v4139, %v4138
    %4204 = vmatprep.subr.bf16.mxu0 0
    %4205 = vmatpush1.bf16.msra.mxu0 %v4140
    %4206 = vmatprep.subr.bf16.mxu0 0
    %4207 = vmatpush1.bf16.msra.mxu0 %v4141
    %4208 = vmatprep.subr.bf16.mxu0 0
    %4209 = vmatpush1.bf16.msra.mxu0 %v4142
    %4210 = vmatprep.subr.bf16.mxu0 0
    %4211 = vmatpush1.bf16.msra.mxu0 %v4143
    %4212 = vmatprep.subr.bf16.mxu0 0
    %4213 = vmatpush1.bf16.msra.mxu0 %v4144
    %4214 = vmatprep.subr.bf16.mxu0 0
    %4215 = vmatpush1.bf16.msra.mxu0 %v4145
    %4216 = vmatprep.subr.bf16.mxu0 0
    %4217 = vmatpush1.bf16.msra.mxu0 %v4146
    %4218 = vmatprep.subr.bf16.mxu0 0
    %4219 = vmatpush1.bf16.msra.mxu0 %v4147
    %4220 = vmatprep.subr.bf16.mxu0 0
    %4221 = vmatpush1.bf16.msra.mxu0 %v4148
    %4222 = vmatprep.subr.bf16.mxu0 0
    %4223 = vmatpush1.bf16.msra.mxu0 %v4149
    %4224 = vmatprep.subr.bf16.mxu0 0
    %4225 = vmatpush1.bf16.msra.mxu0 %v4150
    %4226 = vmatprep.subr.bf16.mxu0 0
    %4227 = vmatpush1.bf16.msra.mxu0 %v4151
    %4228 = vmatprep.subr.bf16.mxu0 0
    %4229 = vmatpush1.bf16.msra.mxu0 %v4152
    %4230 = vmatprep.subr.bf16.mxu0 0
    %4231 = vmatpush1.bf16.msra.mxu0 %v4153
    %4232 = vmatprep.subr.bf16.mxu0 0
    %4233 = vmatpush1.bf16.msra.mxu0 %v4154
    %4234 = vmatprep.subr.bf16.mxu0 0
    %4235 = vmatpush1.bf16.msra.mxu0 %v4155
    %4236 = vmatprep.mubr.bf16.mxu0 %v3938
    %4237 = vmatmul.mubr.bf16.gmra.mrb[0].mxu0 %v3937
    %v4238 = vpop.f32.mrb[0].mxu0
    %v4239 = vadd.f32 %v4010, %v4238
    %v4240 = vpop.f32.mrb[0].mxu0
    %v4241 = vpop.f32.mrb[0].mxu0
    %v4242 = vpop.f32.mrb[0].mxu0
    %4243 = vdwg.mxu0
    %4244 = vmatprep.subr.bf16.mxu0 0
    %4245 = vmatpush1.bf16.msra.mxu0 %v4156
    %4246 = vmatprep.subr.bf16.mxu0 0
    %4247 = vmatpush1.bf16.msra.mxu0 %v4157
    %4248 = vmatprep.subr.bf16.mxu0 0
    %4249 = vmatpush1.bf16.msra.mxu0 %v4158
    %4250 = vmatprep.subr.bf16.mxu0 0
    %4251 = vmatpush1.bf16.msra.mxu0 %v4159
    %4252 = vmatprep.subr.bf16.mxu0 0
    %4253 = vmatpush1.bf16.msra.mxu0 %v4160
    %4254 = vmatprep.subr.bf16.mxu0 0
    %4255 = vmatpush1.bf16.msra.mxu0 %v4161
    %4256 = vmatprep.subr.bf16.mxu0 0
    %4257 = vmatpush1.bf16.msra.mxu0 %v4162
    %4258 = vmatprep.subr.bf16.mxu0 0
    %4259 = vmatpush1.bf16.msra.mxu0 %v4163
    %4260 = vmatprep.subr.bf16.mxu0 0
    %4261 = vmatpush1.bf16.msra.mxu0 %v4164
    %4262 = vmatprep.subr.bf16.mxu0 0
    %4263 = vmatpush1.bf16.msra.mxu0 %v4165
    %4264 = vmatprep.subr.bf16.mxu0 0
    %4265 = vmatpush1.bf16.msra.mxu0 %v4166
    %4266 = vmatprep.subr.bf16.mxu0 0
    %4267 = vmatpush1.bf16.msra.mxu0 %v4167
    %4268 = vmatprep.subr.bf16.mxu0 0
    %4269 = vmatpush1.bf16.msra.mxu0 %v4168
    %4270 = vmatprep.subr.bf16.mxu0 0
    %4271 = vmatpush1.bf16.msra.mxu0 %v4169
    %4272 = vmatprep.subr.bf16.mxu0 0
    %4273 = vmatpush1.bf16.msra.mxu0 %v4170
    %4274 = vmatprep.subr.bf16.mxu0 0
    %4275 = vmatpush1.bf16.msra.mxu0 %v4171
    %4276 = vmatprep.mubr.bf16.mxu0 %v3940
    %4277 = vmatmul.mubr.bf16.gmra.mrb[0].mxu0 %v3939
    %v4278 = vpop.f32.mrb[0].mxu0
    %v4279 = vadd.f32 %v4239, %v4278
    %v4280 = vpop.f32.mrb[0].mxu0
    %v4281 = vpop.f32.mrb[0].mxu0
    %v4282 = vpop.f32.mrb[0].mxu0
    %4283 = vdwg.mxu0
    %4284 = vmax.xlane.f32.xlu0 %v4279
    %v4285 = vpop.xlane.xlu0 %4284
    %v4286 = vsub.f32 %v4279, %v4285
    %v4287 = vmul.f32 %v4286, 1.442695
    %v4288 = vpow.pop %v4287
    %4289 = vadd.xlane.f32.xlu0 %v4288
    %v4290 = vpop.xlane.xlu0 %4289
    %v4291 = vrcp.pop %v4290
    %v4292 = vmul.f32 %v4288, %v4291
    %4293 = vst [vmem:[%s11] sm:$0xff] %v4292
    %v4294 = vpack.c.bf16 %v4292, %v4292
    %v4295 = vld [vmem:[%s9] sm:$0xf]
    %v4296 = vld [vmem:[%s9 + $0x4] sm:$0xf]
    %v4297 = vld [vmem:[%s9 + $0x8] sm:$0xf]
    %v4298 = vld [vmem:[%s9 + $0xc] sm:$0xf]
    %v4299 = vld [vmem:[%s9 + $0x10] sm:$0xf]
    %v4300 = vld [vmem:[%s9 + $0x14] sm:$0xf]
    %v4301 = vld [vmem:[%s9 + $0x18] sm:$0xf]
    %v4302 = vld [vmem:[%s9 + $0x1c] sm:$0xf]
    %v4303 = vld [vmem:[%s9 + $0x20] sm:$0xf]
    %v4304 = vld [vmem:[%s9 + $0x24] sm:$0xf]
    %v4305 = vld [vmem:[%s9 + $0x28] sm:$0xf]
    %v4306 = vld [vmem:[%s9 + $0x2c] sm:$0xf]
    %v4307 = vld [vmem:[%s9 + $0x30] sm:$0xf]
    %v4308 = vld [vmem:[%s9 + $0x34] sm:$0xf]
    %v4309 = vld [vmem:[%s9 + $0x38] sm:$0xf]
    %v4310 = vld [vmem:[%s9 + $0x3c] sm:$0xf]
    %v4327 = vunpack.c.l.b16 %v4295
    %v4328 = vunpack.c.l.b16 %v4296
    %v4329 = vunpack.c.l.b16 %v4297
    %v4330 = vunpack.c.l.b16 %v4298
    %v4331 = vunpack.c.l.b16 %v4299
    %v4332 = vunpack.c.l.b16 %v4300
    %v4333 = vunpack.c.l.b16 %v4301
    %v4334 = vunpack.c.l.b16 %v4302
    %v4335 = vunpack.c.l.b16 %v4303
    %v4336 = vunpack.c.l.b16 %v4304
    %v4337 = vunpack.c.l.b16 %v4305
    %v4338 = vunpack.c.l.b16 %v4306
    %v4339 = vunpack.c.l.b16 %v4307
    %v4340 = vunpack.c.l.b16 %v4308
    %v4341 = vunpack.c.l.b16 %v4309
    %v4342 = vunpack.c.l.b16 %v4310
    %v4343 = vpack.c.b16 %v4328, %v4327
    %v4344 = vpack.c.b16 %v4330, %v4329
    %v4345 = vpack.c.b16 %v4332, %v4331
    %v4346 = vpack.c.b16 %v4334, %v4333
    %v4347 = vpack.c.b16 %v4336, %v4335
    %v4348 = vpack.c.b16 %v4338, %v4337
    %v4349 = vpack.c.b16 %v4340, %v4339
    %v4350 = vpack.c.b16 %v4342, %v4341
    %4359 = vmatprep.subr.bf16.mxu0 0
    %4360 = vmatpush1.bf16.msra.mxu0 %v4343
    %4361 = vmatprep.subr.bf16.mxu0 0
    %4362 = vmatpush1.bf16.msra.mxu0 %v4344
    %4363 = vmatprep.subr.bf16.mxu0 0
    %4364 = vmatpush1.bf16.msra.mxu0 %v4345
    %4365 = vmatprep.subr.bf16.mxu0 0
    %4366 = vmatpush1.bf16.msra.mxu0 %v4346
    %4367 = vmatprep.subr.bf16.mxu0 0
    %4368 = vmatpush1.bf16.msra.mxu0 %v4347
    %4369 = vmatprep.subr.bf16.mxu0 0
    %4370 = vmatpush1.bf16.msra.mxu0 %v4348
    %4371 = vmatprep.subr.bf16.mxu0 0
    %4372 = vmatpush1.bf16.msra.mxu0 %v4349
    %4373 = vmatprep.subr.bf16.mxu0 0
    %4374 = vmatpush1.bf16.msra.mxu0 %v4350
    %4375 = vmatprep.subr.bf16.mxu0 0
    %4376 = vmatpush1.bf16.msra.mxu0 0
    %4377 = vmatprep.subr.bf16.mxu0 0
    %4378 = vmatpush1.bf16.msra.mxu0 0
    %4379 = vmatprep.subr.bf16.mxu0 0
    %4380 = vmatpush1.bf16.msra.mxu0 0
    %4381 = vmatprep.subr.bf16.mxu0 0
    %4382 = vmatpush1.bf16.msra.mxu0 0
    %4383 = vmatprep.subr.bf16.mxu0 0
    %4384 = vmatpush1.bf16.msra.mxu0 0
    %4385 = vmatprep.subr.bf16.mxu0 0
    %4386 = vmatpush1.bf16.msra.mxu0 0
    %4387 = vmatprep.subr.bf16.mxu0 0
    %4388 = vmatpush1.bf16.msra.mxu0 0
    %4389 = vmatprep.subr.bf16.mxu0 0
    %4390 = vmatpush1.bf16.msra.mxu0 0
    %4391 = vmatprep.mubr.bf16.mxu0 0
    %4392 = vmatmul.mubr.bf16.gmra.mrb[0].mxu0 %v4294
    %v4393 = vpop.f32.mrb[0].mxu0
    %v4394 = vadd.f32 0.0, %v4393
    %v4395 = vpop.f32.mrb[0].mxu0
    %v4396 = vpop.f32.mrb[0].mxu0
    %v4397 = vpop.f32.mrb[0].mxu0
    %4398 = vdwg.mxu0
    %4399 = vst [vmem:[%s10] sm:$0xff] %v4394
    // Predicated region
    $region58: #{fcnet_forward.1} parent=1 // pred_check
      _
    $region59: #{fcnet_forward.1} parent=1 // pred_check_branch
      %4401 = sbr.rel (0) target = $region61
    $region60: #{fcnet_forward.1} parent=1 // pred_region
      _
    $region61: #{fcnet_forward.1} parent=1 // pred_fallthru
      _
    // Predicated region
    $region62: #{fcnet_forward.1} parent=1 // pred_check
      _
    $region63: #{fcnet_forward.1} parent=1 // pred_check_branch
      %4403 = sbr.rel (0) target = $region65
    $region64: #{fcnet_forward.1} parent=1 // pred_region
      _
    $region65: #{fcnet_forward.1} parent=1 // pred_fallthru
      _
    // Predicated region
    $region66: #{fcnet_forward.1} parent=1 // pred_check
      _
    $region67: #{fcnet_forward.1} parent=1 // pred_check_branch
      %4405 = sbr.rel (0) target = $region69
    $region68: #{fcnet_forward.1} parent=1 // pred_region
      _
    $region69: #{fcnet_forward.1} parent=1 // pred_fallthru
      _
    // Predicated region
    $region70: #{fcnet_forward.1} parent=1 // pred_check
      _
    $region71: #{fcnet_forward.1} parent=1 // pred_check_branch
      %4407 = sbr.rel (0) target = $region73
    $region72: #{fcnet_forward.1} parent=1 // pred_region
      _
    $region73: #{fcnet_forward.1} parent=1 // pred_fallthru
      _
    %4408 = vsyncpa [#allocation3], 1
    %4409 = vsyncpa [#allocation5], 1
    %4410 = vsyncpa [#allocation8], 1

</llo_original>
